<compile_context>
chip_gen: v5e
topology: v5e:2x2
jax: 0.10.0
libtpu: 0.0.40
codegen_flags: <defaults>
</compile_context>

<pallas_src>
import jax
import jax.numpy as jnp
from jax.experimental import pallas as pl
from jax.experimental.pallas import tpu as pltpu


_BN_EPS = 1e-5
_NEG_SLOPE = 0.2
_TILE_M_MAX = 512   # largest M tile; footprint stays well inside scoped VMEM


def _round_up(x, m):
    return ((x + m - 1) // m) * m


def _vmem_limit(tile_bytes):
    # Double-buffered pipeline footprint + margin, clamped to a range that is
    # safe on v5e/v6e (128 MiB VMEM) and v7x (64 MiB physical / 32 MiB scoped).
    return int(min(max(2 * tile_bytes + (2 << 20), 8 << 20), 32 << 20))


# ----------------------------------------------------------------------------
# Pallas kernels
# ----------------------------------------------------------------------------
def _make_conv_bn_lrelu_kernel(m_real):
    """Fused Conv(4x4) + BatchNorm2d (batch stats) + LeakyReLU(0.2).

    grid = (phase, grid_m).  Phase 0 accumulates per-channel sum / sum-of-
    squares of the conv output into VMEM scratch; phase 1 recomputes the conv
    tile, folds BN into a scale/shift (computed once at i == 0) and writes the
    activated bf16 output tile.
    """
    inv_m = 1.0 / float(m_real)

    def kernel(p_ref, w_ref, g_ref, b_ref, o_ref,
               sum_ref, ssq_ref, sc_ref, sh_ref):
        phase = pl.program_id(0)
        i = pl.program_id(1)

        # Conv tile as an MXU matmul (bf16 operands, f32 accumulate).
        acc = jnp.dot(p_ref[...], w_ref[...],
                      preferred_element_type=jnp.float32)

        @pl.when((phase == 0) & (i == 0))
        def _():
            sum_ref[...] = jnp.zeros_like(sum_ref)
            ssq_ref[...] = jnp.zeros_like(ssq_ref)

        @pl.when(phase == 0)
        def _():
            # Padded (zero) rows contribute nothing to either statistic.
            sum_ref[...] += jnp.sum(acc, axis=0, keepdims=True)
            ssq_ref[...] += jnp.sum(acc * acc, axis=0, keepdims=True)

        @pl.when((phase == 1) & (i == 0))
        def _():
            # Folded training-mode BatchNorm (biased batch variance).
            # TODO(synk): E[x^2]-E[x]^2 in f32 can cancel for large means; a
            # centered second pass would track PyTorch stats more faithfully.
            mean = sum_ref[...] * inv_m
            var = jnp.maximum(ssq_ref[...] * inv_m - mean * mean, 0.0)
            scale = g_ref[...] * jax.lax.rsqrt(var + _BN_EPS)
            sc_ref[...] = scale
            sh_ref[...] = b_ref[...] - mean * scale

        @pl.when(phase == 1)
        def _():
            y = acc * sc_ref[...] + sh_ref[...]
            o_ref[...] = jnp.where(y > 0, y, _NEG_SLOPE * y).astype(o_ref.dtype)

    return kernel


def _conv_sigmoid_kernel(p_ref, w_ref, o_ref):
    # Final 4x4 valid conv (matmul) + sigmoid.
    acc = jnp.dot(p_ref[...], w_ref[...], preferred_element_type=jnp.float32)
    o_ref[...] = jax.nn.sigmoid(acc).astype(o_ref.dtype)


# ----------------------------------------------------------------------------
# Glue: im2col patch extraction (NHWC, bf16) + pallas_call wrappers
# ----------------------------------------------------------------------------
def _im2col(x, k, stride, padding):
    # x: (N, H, W, C) -> (N*Ho*Wo, k*k*C), patch element order = [dh, dw, c]
    # TODO(synk): patches are still materialized in HBM by XLA (~4x input
    # duplication for a 4x4/s2 conv); in-kernel im2col via 16 shifted matmuls
    # would remove this traffic entirely.
    n, h, w, c = x.shape
    if padding:
        x = jnp.pad(x, ((0, 0), (padding, padding), (padding, padding), (0, 0)))
    ho = (h + 2 * padding - k) // stride + 1
    wo = (w + 2 * padding - k) // stride + 1
    cols = []
    for dh in range(k):
        for dw in range(k):
            cols.append(x[:, dh:dh + stride * ho:stride,
                          dw:dw + stride * wo:stride, :])
    patches = jnp.stack(cols, axis=3)                      # (N, Ho, Wo, k*k, C)
    return patches.reshape(n * ho * wo, k * k * c), ho, wo


def _prep_patches_and_weights(x, w, stride, padding):
    n = x.shape[0]
    kh, kw, cin, cout = w.shape
    patches, ho, wo = _im2col(x.astype(jnp.bfloat16), kh, stride, padding)
    m, k = patches.shape
    kp = _round_up(k, 128)
    coutp = _round_up(cout, 128)
    tile_m = min(_TILE_M_MAX, _round_up(m, 8))
    m_pad = _round_up(m, tile_m)
    patches = jnp.pad(patches, ((0, m_pad - m), (0, kp - k))).astype(jnp.bfloat16)
    wmat = w.reshape(kh * kw * cin, cout)
    wmat = jnp.pad(wmat, ((0, kp - k), (0, coutp - cout))).astype(jnp.bfloat16)
    return patches, wmat, dict(n=n, ho=ho, wo=wo, m=m, m_pad=m_pad,
                               kp=kp, cout=cout, coutp=coutp, tile_m=tile_m)


def conv_bn_lrelu(x, w, gamma, beta, *, stride, padding):
    """Conv(4x4, no bias) + BatchNorm2d (training batch stats) + LeakyReLU(0.2)."""
    patches, wmat, d = _prep_patches_and_weights(x, w, stride, padding)
    m, m_pad, kp, cout, coutp, tile_m = (d["m"], d["m_pad"], d["kp"],
                                         d["cout"], d["coutp"], d["tile_m"])
    grid_m = m_pad // tile_m

    g = jnp.pad(gamma.astype(jnp.float32), (0, coutp - cout)).reshape(1, coutp)
    b = jnp.pad(beta.astype(jnp.float32), (0, coutp - cout)).reshape(1, coutp)

    tile_bytes = (tile_m * kp * 2 + kp * coutp * 2 + tile_m * coutp * 2
                  + 4 * 8 * coutp * 4)

    out = pl.pallas_call(
        _make_conv_bn_lrelu_kernel(m),
        out_shape=jax.ShapeDtypeStruct((m_pad, coutp), jnp.bfloat16),
        grid=(2, grid_m),                          # (phase, M tiles)
        in_specs=[pl.BlockSpec((tile_m, kp), lambda p, i: (i, 0)),
                  pl.BlockSpec((kp, coutp), lambda p, i: (0, 0)),
                  pl.BlockSpec((1, coutp), lambda p, i: (0, 0)),
                  pl.BlockSpec((1, coutp), lambda p, i: (0, 0))],
        # Phase 0 never writes the output; park its buffer on block 0 so no
        # garbage writeback happens before phase 1 produces the real values.
        out_specs=pl.BlockSpec((tile_m, coutp), lambda p, i: (p * i, 0)),
        scratch_shapes=[pltpu.VMEM((1, coutp), jnp.float32) for _ in range(4)],
        compiler_params=pltpu.CompilerParams(
            # Phase 1 depends on the phase-0 statistics -> both axes serial.
            # TODO(synk): for v7x megacore, emit per-tile partial stats and
            # reduce in a short epilogue so the M axis can be "parallel".
            dimension_semantics=("arbitrary", "arbitrary"),
            vmem_limit_bytes=_vmem_limit(tile_bytes)),
    )(patches, wmat, g, b)

    # TODO(synk): running_mean / running_var buffer updates (training-time
    # side effect) are not emitted; forward output is unaffected.
    return out[:m, :cout].reshape(d["n"], d["ho"], d["wo"], cout)


def conv_sigmoid_valid(x, w):
    """Final Conv(4x4 valid, stride 1, no bias) + Sigmoid, one fused kernel."""
    n, h, wid, cin = x.shape
    kh, kw, _, cout = w.shape
    assert (h, wid) == (kh, kw), "final conv expects kernel == spatial extent"
    k = kh * kw * cin
    kp = _round_up(k, 128)
    coutp = _round_up(cout, 128)
    m = n
    tile_m = min(_TILE_M_MAX, _round_up(m, 8))
    m_pad = _round_up(m, tile_m)
    grid_m = m_pad // tile_m

    # "im2col" is just a reshape: the 4x4 kernel covers the whole input map,
    # and (h, w, c) row order already matches the (kh, kw, cin) weight order.
    patches = jnp.pad(x.reshape(n, k).astype(jnp.bfloat16),
                      ((0, m_pad - m), (0, kp - k)))
    wmat = jnp.pad(w.reshape(k, cout),
                   ((0, kp - k), (0, coutp - cout))).astype(jnp.bfloat16)

    tile_bytes = tile_m * kp * 2 + kp * coutp * 2 + tile_m * coutp * 4
    out = pl.pallas_call(
        _conv_sigmoid_kernel,
        out_shape=jax.ShapeDtypeStruct((m_pad, coutp), jnp.float32),
        grid=(grid_m,),
        in_specs=[pl.BlockSpec((tile_m, kp), lambda i: (i, 0)),
                  pl.BlockSpec((kp, coutp), lambda i: (0, 0))],
        out_specs=pl.BlockSpec((tile_m, coutp), lambda i: (i, 0)),
        compiler_params=pltpu.CompilerParams(
            dimension_semantics=("arbitrary",),
            vmem_limit_bytes=_vmem_limit(tile_bytes)),
    )(patches, wmat)
    # TODO(synk): layers 2/3 and this tiny layer could be folded into one
    # pallas_call with VMEM-resident intermediates to cut launches further.
    return out[:m, :cout].reshape(n, 1, 1, cout)


# ----------------------------------------------------------------------------
# Full DCGAN discriminator
# ----------------------------------------------------------------------------
def init_params(key, in_features, out_features):
    chans = [in_features, out_features, out_features * 2,
             out_features * 4, out_features * 8]
    params = {}
    for i in range(4):
        key, sub = jax.random.split(key)
        params[f"w{i}"] = 0.02 * jax.random.normal(
            sub, (4, 4, chans[i], chans[i + 1]), dtype=jnp.float32)
        params[f"gamma{i}"] = jnp.ones((chans[i + 1],), jnp.float32)
        params[f"beta{i}"] = jnp.zeros((chans[i + 1],), jnp.float32)
    key, sub = jax.random.split(key)
    params["w4"] = 0.02 * jax.random.normal(
        sub, (4, 4, chans[4], 1), dtype=jnp.float32)
    return params


def dcgan_discriminator(x_nchw, params):
    # x_nchw: (N, Cin, 64, 64): 64 -> 32 -> 16 -> 8 -> 4 -> 1 (final 4x4 valid)
    x = jnp.transpose(x_nchw, (0, 2, 3, 1)).astype(jnp.bfloat16)   # -> NHWC
    for i in range(4):
        x = conv_bn_lrelu(x, params[f"w{i}"], params[f"gamma{i}"],
                          params[f"beta{i}"], stride=2, padding=1)
    x = conv_sigmoid_valid(x, params["w4"])
    return jnp.transpose(x, (0, 3, 1, 2)).astype(jnp.float32)      # -> (N,1,1,1)


if __name__ == "__main__":
    key = jax.random.PRNGKey(0)
    k_params, k_x = jax.random.split(key)

    in_features, out_features = 3, 8
    batch, spatial = 2, 64   # architecture requires 64x64 inputs

    params = init_params(k_params, in_features, out_features)
    x = jax.random.normal(k_x, (batch, in_features, spatial, spatial),
                          dtype=jnp.float32)

    out = jax.jit(dcgan_discriminator)(x, params)
    out = jax.block_until_ready(out)

    assert out.shape == (batch, 1, 1, 1), out.shape
    assert bool(jnp.all((out >= 0.0) & (out <= 1.0)))
    print("KERNEL_OK")
</pallas_src>

<mosaic_0001>
module attributes {stable_mosaic.version = 11 : i64} {
  func.func @kernel(%arg0: i32, %arg1: i32, %arg2: memref<512x128xbf16, #tpu.memory_space<vmem>>, %arg3: memref<128x128xbf16, #tpu.memory_space<vmem>>, %arg4: memref<1x128xf32, #tpu.memory_space<vmem>>, %arg5: memref<1x128xf32, #tpu.memory_space<vmem>>, %arg6: memref<512x128xbf16, #tpu.memory_space<vmem>>, %arg7: memref<1x128xf32, #tpu.memory_space<vmem>>, %arg8: memref<1x128xf32, #tpu.memory_space<vmem>>, %arg9: memref<1x128xf32, #tpu.memory_space<vmem>>, %arg10: memref<1x128xf32, #tpu.memory_space<vmem>>) attributes {dimension_semantics = [#tpu.dimension_semantics<arbitrary>, #tpu.dimension_semantics<arbitrary>], iteration_bounds = array<i64: 2, 4>, scalar_prefetch = 0 : i64, scratch_operands = 4 : i64, tpu.core_type = #tpu.core_type<tc>, window_params = [{transform_indices = @transform_0, window_bounds = array<i64: 512, 128>}, {pipeline_mode = #tpu.pipeline_mode<synchronous>, transform_indices = @transform_1, window_bounds = array<i64: 128, 128>}, {pipeline_mode = #tpu.pipeline_mode<synchronous>, transform_indices = @transform_2, window_bounds = array<i64: 1, 128>}, {pipeline_mode = #tpu.pipeline_mode<synchronous>, transform_indices = @transform_3, window_bounds = array<i64: 1, 128>}, {transform_indices = @transform_4, window_bounds = array<i64: 512, 128>}]} {
    %c0 = arith.constant 0 : index
    %c0_0 = arith.constant 0 : index
    %0 = vector.load %arg2[%c0, %c0_0] : memref<512x128xbf16, #tpu.memory_space<vmem>>, vector<512x128xbf16>
    %c0_1 = arith.constant 0 : index
    %c0_2 = arith.constant 0 : index
    %1 = vector.load %arg3[%c0_1, %c0_2] : memref<128x128xbf16, #tpu.memory_space<vmem>>, vector<128x128xbf16>
    %cst = arith.constant dense<0.000000e+00> : vector<512x128xf32>
    %2 = tpu.matmul %0, %1, %cst {dimension_numbers = #tpu.dot_dimension_numbers<[1], [0], [0], [1], [0, 0, 1, 1], [], []>} : vector<512x128xbf16>, vector<128x128xbf16>, vector<512x128xf32> -> vector<512x128xf32>
    %c0_i32 = arith.constant 0 : i32
    %3 = arith.cmpi eq, %arg0, %c0_i32 : i32
    %c0_i32_3 = arith.constant 0 : i32
    %4 = arith.cmpi eq, %arg1, %c0_i32_3 : i32
    %5 = arith.andi %3, %4 : i1
    %6 = arith.extui %5 : i1 to i32
    %c0_i32_4 = arith.constant 0 : i32
    %7 = arith.cmpi ne, %6, %c0_i32_4 : i32
    scf.if %7 {
      %cst_11 = arith.constant 0.000000e+00 : f32
      %19 = vector.broadcast %cst_11 : f32 to vector<1x128xf32>
      %c0_12 = arith.constant 0 : index
      %c0_13 = arith.constant 0 : index
      %20 = vector.load %arg7[%c0_12, %c0_13] : memref<1x128xf32, #tpu.memory_space<vmem>>, vector<1x128xf32>
      tpu.vector_store %arg7[%c0_12, %c0_13], %19 {strides = array<i32>} : memref<1x128xf32, #tpu.memory_space<vmem>>, vector<1x128xf32>,
      %cst_14 = arith.constant 0.000000e+00 : f32
      %21 = vector.broadcast %cst_14 : f32 to vector<1x128xf32>
      %c0_15 = arith.constant 0 : index
      %c0_16 = arith.constant 0 : index
      %22 = vector.load %arg8[%c0_15, %c0_16] : memref<1x128xf32, #tpu.memory_space<vmem>>, vector<1x128xf32>
      tpu.vector_store %arg8[%c0_15, %c0_16], %21 {strides = array<i32>} : memref<1x128xf32, #tpu.memory_space<vmem>>, vector<1x128xf32>,
    } else {
    }
    %c0_i32_5 = arith.constant 0 : i32
    %8 = arith.cmpi eq, %arg0, %c0_i32_5 : i32
    %9 = arith.extui %8 : i1 to i32
    %c0_i32_6 = arith.constant 0 : i32
    %10 = arith.cmpi ne, %9, %c0_i32_6 : i32
    scf.if %10 {
      %c0_11 = arith.constant 0 : index
      %c0_12 = arith.constant 0 : index
      %19 = vector.load %arg7[%c0_11, %c0_12] : memref<1x128xf32, #tpu.memory_space<vmem>>, vector<1x128xf32>
      %cst_13 = arith.constant dense<0.000000e+00> : vector<128xf32>
      %20 = vector.multi_reduction <add>, %2, %cst_13 [0] : vector<512x128xf32> to vector<128xf32>
      %21 = vector.shape_cast %20 : vector<128xf32> to vector<1x128xf32>
      %22 = arith.addf %19, %21 : vector<1x128xf32>
      %c0_14 = arith.constant 0 : index
      %c0_15 = arith.constant 0 : index
      %23 = vector.load %arg7[%c0_14, %c0_15] : memref<1x128xf32, #tpu.memory_space<vmem>>, vector<1x128xf32>
      tpu.vector_store %arg7[%c0_14, %c0_15], %22 {strides = array<i32>} : memref<1x128xf32, #tpu.memory_space<vmem>>, vector<1x128xf32>,
      %c0_16 = arith.constant 0 : index
      %c0_17 = arith.constant 0 : index
      %24 = vector.load %arg8[%c0_16, %c0_17] : memref<1x128xf32, #tpu.memory_space<vmem>>, vector<1x128xf32>
      %25 = arith.mulf %2, %2 : vector<512x128xf32>
      %cst_18 = arith.constant dense<0.000000e+00> : vector<128xf32>
      %26 = vector.multi_reduction <add>, %25, %cst_18 [0] : vector<512x128xf32> to vector<128xf32>
      %27 = vector.shape_cast %26 : vector<128xf32> to vector<1x128xf32>
      %28 = arith.addf %24, %27 : vector<1x128xf32>
      %c0_19 = arith.constant 0 : index
      %c0_20 = arith.constant 0 : index
      %29 = vector.load %arg8[%c0_19, %c0_20] : memref<1x128xf32, #tpu.memory_space<vmem>>, vector<1x128xf32>
      tpu.vector_store %arg8[%c0_19, %c0_20], %28 {strides = array<i32>} : memref<1x128xf32, #tpu.memory_space<vmem>>, vector<1x128xf32>,
    } else {
    }
    %c1_i32 = arith.constant 1 : i32
    %11 = arith.cmpi eq, %arg0, %c1_i32 : i32
    %c0_i32_7 = arith.constant 0 : i32
    %12 = arith.cmpi eq, %arg1, %c0_i32_7 : i32
    %13 = arith.andi %11, %12 : i1
    %14 = arith.extui %13 : i1 to i32
    %c0_i32_8 = arith.constant 0 : i32
    %15 = arith.cmpi ne, %14, %c0_i32_8 : i32
    scf.if %15 {
      %c0_11 = arith.constant 0 : index
      %c0_12 = arith.constant 0 : index
      %19 = vector.load %arg7[%c0_11, %c0_12] : memref<1x128xf32, #tpu.memory_space<vmem>>, vector<1x128xf32>
      %cst_13 = arith.constant 4.8828125E-4 : f32
      %20 = vector.broadcast %cst_13 : f32 to vector<1x128xf32>
      %21 = arith.mulf %19, %20 : vector<1x128xf32>
      %c0_14 = arith.constant 0 : index
      %c0_15 = arith.constant 0 : index
      %22 = vector.load %arg8[%c0_14, %c0_15] : memref<1x128xf32, #tpu.memory_space<vmem>>, vector<1x128xf32>
      %cst_16 = arith.constant 4.8828125E-4 : f32
      %23 = vector.broadcast %cst_16 : f32 to vector<1x128xf32>
      %24 = arith.mulf %22, %23 : vector<1x128xf32>
      %25 = arith.mulf %21, %21 : vector<1x128xf32>
      %26 = arith.subf %24, %25 : vector<1x128xf32>
      %cst_17 = arith.constant 0.000000e+00 : f32
      %27 = vector.broadcast %cst_17 : f32 to vector<1x128xf32>
      %28 = arith.maximumf %26, %27 : vector<1x128xf32>
      %c0_18 = arith.constant 0 : index
      %c0_19 = arith.constant 0 : index
      %29 = vector.load %arg4[%c0_18, %c0_19] : memref<1x128xf32, #tpu.memory_space<vmem>>, vector<1x128xf32>
      %cst_20 = arith.constant 9.99999974E-6 : f32
      %30 = vector.broadcast %cst_20 : f32 to vector<1x128xf32>
      %31 = arith.addf %28, %30 : vector<1x128xf32>
      %32 = math.rsqrt %31 : vector<1x128xf32>
      %33 = arith.mulf %29, %32 : vector<1x128xf32>
      %c0_21 = arith.constant 0 : index
      %c0_22 = arith.constant 0 : index
      %34 = vector.load %arg9[%c0_21, %c0_22] : memref<1x128xf32, #tpu.memory_space<vmem>>, vector<1x128xf32>
      tpu.vector_store %arg9[%c0_21, %c0_22], %33 {strides = array<i32>} : memref<1x128xf32, #tpu.memory_space<vmem>>, vector<1x128xf32>,
      %c0_23 = arith.constant 0 : index
      %c0_24 = arith.constant 0 : index
      %35 = vector.load %arg5[%c0_23, %c0_24] : memref<1x128xf32, #tpu.memory_space<vmem>>, vector<1x128xf32>
      %36 = arith.mulf %21, %33 : vector<1x128xf32>
      %37 = arith.subf %35, %36 : vector<1x128xf32>
      %c0_25 = arith.constant 0 : index
      %c0_26 = arith.constant 0 : index
      %38 = vector.load %arg10[%c0_25, %c0_26] : memref<1x128xf32, #tpu.memory_space<vmem>>, vector<1x128xf32>
      tpu.vector_store %arg10[%c0_25, %c0_26], %37 {strides = array<i32>} : memref<1x128xf32, #tpu.memory_space<vmem>>, vector<1x128xf32>,
    } else {
    }
    %c1_i32_9 = arith.constant 1 : i32
    %16 = arith.cmpi eq, %arg0, %c1_i32_9 : i32
    %17 = arith.extui %16 : i1 to i32
    %c0_i32_10 = arith.constant 0 : i32
    %18 = arith.cmpi ne, %17, %c0_i32_10 : i32
    scf.if %18 {
      %c0_11 = arith.constant 0 : index
      %c0_12 = arith.constant 0 : index
      %19 = vector.load %arg9[%c0_11, %c0_12] : memref<1x128xf32, #tpu.memory_space<vmem>>, vector<1x128xf32>
      %20 = vector.broadcast %19 : vector<1x128xf32> to vector<512x128xf32>
      %21 = arith.mulf %2, %20 : vector<512x128xf32>
      %c0_13 = arith.constant 0 : index
      %c0_14 = arith.constant 0 : index
      %22 = vector.load %arg10[%c0_13, %c0_14] : memref<1x128xf32, #tpu.memory_space<vmem>>, vector<1x128xf32>
      %23 = vector.broadcast %22 : vector<1x128xf32> to vector<512x128xf32>
      %24 = arith.addf %21, %23 : vector<512x128xf32>
      %cst_15 = arith.constant 0.000000e+00 : f32
      %25 = vector.broadcast %cst_15 : f32 to vector<512x128xf32>
      %26 = arith.cmpf ogt, %24, %25 : vector<512x128xf32>
      %cst_16 = arith.constant 2.000000e-01 : f32
      %27 = vector.broadcast %cst_16 : f32 to vector<512x128xf32>
      %28 = arith.mulf %27, %24 : vector<512x128xf32>
      %29 = arith.select %26, %24, %28 : vector<512x128xi1>, vector<512x128xf32>
      %30 = arith.truncf %29 : vector<512x128xf32> to vector<512x128xbf16>
      %c0_17 = arith.constant 0 : index
      %c0_18 = arith.constant 0 : index
      %31 = vector.load %arg6[%c0_17, %c0_18] : memref<512x128xbf16, #tpu.memory_space<vmem>>, vector<512x128xbf16>
      tpu.vector_store %arg6[%c0_17, %c0_18], %30 {strides = array<i32>} : memref<512x128xbf16, #tpu.memory_space<vmem>>, vector<512x128xbf16>,
    } else {
    }
    return
  }
  func.func @transform_0(%arg0: i32, %arg1: i32) -> (i32, i32) {
    %c0_i32 = arith.constant 0 : i32
    %c0_i32_0 = arith.constant 0 : i32
    return %arg1, %c0_i32 : i32, i32
  }
  func.func @transform_1(%arg0: i32, %arg1: i32) -> (i32, i32) {
    %c0_i32 = arith.constant 0 : i32
    %c0_i32_0 = arith.constant 0 : i32
    %c0_i32_1 = arith.constant 0 : i32
    return %c0_i32, %c0_i32_0 : i32, i32
  }
  func.func @transform_2(%arg0: i32, %arg1: i32) -> (i32, i32) {
    %c0_i32 = arith.constant 0 : i32
    %c0_i32_0 = arith.constant 0 : i32
    %c0_i32_1 = arith.constant 0 : i32
    return %c0_i32, %c0_i32_0 : i32, i32
  }
  func.func @transform_3(%arg0: i32, %arg1: i32) -> (i32, i32) {
    %c0_i32 = arith.constant 0 : i32
    %c0_i32_0 = arith.constant 0 : i32
    %c0_i32_1 = arith.constant 0 : i32
    return %c0_i32, %c0_i32_0 : i32, i32
  }
  func.func @transform_4(%arg0: i32, %arg1: i32) -> (i32, i32) {
    %0 = arith.muli %arg0, %arg1 : i32
    %c0_i32 = arith.constant 0 : i32
    %c0_i32_0 = arith.constant 0 : i32
    return %0, %c0_i32 : i32, i32
  }
}

module attributes {stable_mosaic.version = 11 : i64} {
  func.func @kernel(%arg0: i32, %arg1: i32, %arg2: memref<512x128xbf16, #tpu.memory_space<vmem>>, %arg3: memref<128x128xbf16, #tpu.memory_space<vmem>>, %arg4: memref<1x128xf32, #tpu.memory_space<vmem>>, %arg5: memref<1x128xf32, #tpu.memory_space<vmem>>, %arg6: memref<512x128xbf16, #tpu.memory_space<vmem>>, %arg7: memref<1x128xf32, #tpu.memory_space<vmem>>, %arg8: memref<1x128xf32, #tpu.memory_space<vmem>>, %arg9: memref<1x128xf32, #tpu.memory_space<vmem>>, %arg10: memref<1x128xf32, #tpu.memory_space<vmem>>) attributes {dimension_semantics = [#tpu.dimension_semantics<arbitrary>, #tpu.dimension_semantics<arbitrary>], iteration_bounds = array<i64: 2, 1>, scalar_prefetch = 0 : i64, scratch_operands = 4 : i64, tpu.core_type = #tpu.core_type<tc>, window_params = [{transform_indices = @transform_0, window_bounds = array<i64: 512, 128>}, {pipeline_mode = #tpu.pipeline_mode<synchronous>, transform_indices = @transform_1, window_bounds = array<i64: 128, 128>}, {pipeline_mode = #tpu.pipeline_mode<synchronous>, transform_indices = @transform_2, window_bounds = array<i64: 1, 128>}, {pipeline_mode = #tpu.pipeline_mode<synchronous>, transform_indices = @transform_3, window_bounds = array<i64: 1, 128>}, {transform_indices = @transform_4, window_bounds = array<i64: 512, 128>}]} {
    %c0 = arith.constant 0 : index
    %c0_0 = arith.constant 0 : index
    %0 = vector.load %arg2[%c0, %c0_0] : memref<512x128xbf16, #tpu.memory_space<vmem>>, vector<512x128xbf16>
    %c0_1 = arith.constant 0 : index
    %c0_2 = arith.constant 0 : index
    %1 = vector.load %arg3[%c0_1, %c0_2] : memref<128x128xbf16, #tpu.memory_space<vmem>>, vector<128x128xbf16>
    %cst = arith.constant dense<0.000000e+00> : vector<512x128xf32>
    %2 = tpu.matmul %0, %1, %cst {dimension_numbers = #tpu.dot_dimension_numbers<[1], [0], [0], [1], [0, 0, 1, 1], [], []>} : vector<512x128xbf16>, vector<128x128xbf16>, vector<512x128xf32> -> vector<512x128xf32>
    %c0_i32 = arith.constant 0 : i32
    %3 = arith.cmpi eq, %arg0, %c0_i32 : i32
    %c0_i32_3 = arith.constant 0 : i32
    %4 = arith.cmpi eq, %arg1, %c0_i32_3 : i32
    %5 = arith.andi %3, %4 : i1
    %6 = arith.extui %5 : i1 to i32
    %c0_i32_4 = arith.constant 0 : i32
    %7 = arith.cmpi ne, %6, %c0_i32_4 : i32
    scf.if %7 {
      %cst_11 = arith.constant 0.000000e+00 : f32
      %19 = vector.broadcast %cst_11 : f32 to vector<1x128xf32>
      %c0_12 = arith.constant 0 : index
      %c0_13 = arith.constant 0 : index
      %20 = vector.load %arg7[%c0_12, %c0_13] : memref<1x128xf32, #tpu.memory_space<vmem>>, vector<1x128xf32>
      tpu.vector_store %arg7[%c0_12, %c0_13], %19 {strides = array<i32>} : memref<1x128xf32, #tpu.memory_space<vmem>>, vector<1x128xf32>,
      %cst_14 = arith.constant 0.000000e+00 : f32
      %21 = vector.broadcast %cst_14 : f32 to vector<1x128xf32>
      %c0_15 = arith.constant 0 : index
      %c0_16 = arith.constant 0 : index
      %22 = vector.load %arg8[%c0_15, %c0_16] : memref<1x128xf32, #tpu.memory_space<vmem>>, vector<1x128xf32>
      tpu.vector_store %arg8[%c0_15, %c0_16], %21 {strides = array<i32>} : memref<1x128xf32, #tpu.memory_space<vmem>>, vector<1x128xf32>,
    } else {
    }
    %c0_i32_5 = arith.constant 0 : i32
    %8 = arith.cmpi eq, %arg0, %c0_i32_5 : i32
    %9 = arith.extui %8 : i1 to i32
    %c0_i32_6 = arith.constant 0 : i32
    %10 = arith.cmpi ne, %9, %c0_i32_6 : i32
    scf.if %10 {
      %c0_11 = arith.constant 0 : index
      %c0_12 = arith.constant 0 : index
      %19 = vector.load %arg7[%c0_11, %c0_12] : memref<1x128xf32, #tpu.memory_space<vmem>>, vector<1x128xf32>
      %cst_13 = arith.constant dense<0.000000e+00> : vector<128xf32>
      %20 = vector.multi_reduction <add>, %2, %cst_13 [0] : vector<512x128xf32> to vector<128xf32>
      %21 = vector.shape_cast %20 : vector<128xf32> to vector<1x128xf32>
      %22 = arith.addf %19, %21 : vector<1x128xf32>
      %c0_14 = arith.constant 0 : index
      %c0_15 = arith.constant 0 : index
      %23 = vector.load %arg7[%c0_14, %c0_15] : memref<1x128xf32, #tpu.memory_space<vmem>>, vector<1x128xf32>
      tpu.vector_store %arg7[%c0_14, %c0_15], %22 {strides = array<i32>} : memref<1x128xf32, #tpu.memory_space<vmem>>, vector<1x128xf32>,
      %c0_16 = arith.constant 0 : index
      %c0_17 = arith.constant 0 : index
      %24 = vector.load %arg8[%c0_16, %c0_17] : memref<1x128xf32, #tpu.memory_space<vmem>>, vector<1x128xf32>
      %25 = arith.mulf %2, %2 : vector<512x128xf32>
      %cst_18 = arith.constant dense<0.000000e+00> : vector<128xf32>
      %26 = vector.multi_reduction <add>, %25, %cst_18 [0] : vector<512x128xf32> to vector<128xf32>
      %27 = vector.shape_cast %26 : vector<128xf32> to vector<1x128xf32>
      %28 = arith.addf %24, %27 : vector<1x128xf32>
      %c0_19 = arith.constant 0 : index
      %c0_20 = arith.constant 0 : index
      %29 = vector.load %arg8[%c0_19, %c0_20] : memref<1x128xf32, #tpu.memory_space<vmem>>, vector<1x128xf32>
      tpu.vector_store %arg8[%c0_19, %c0_20], %28 {strides = array<i32>} : memref<1x128xf32, #tpu.memory_space<vmem>>, vector<1x128xf32>,
    } else {
    }
    %c1_i32 = arith.constant 1 : i32
    %11 = arith.cmpi eq, %arg0, %c1_i32 : i32
    %c0_i32_7 = arith.constant 0 : i32
    %12 = arith.cmpi eq, %arg1, %c0_i32_7 : i32
    %13 = arith.andi %11, %12 : i1
    %14 = arith.extui %13 : i1 to i32
    %c0_i32_8 = arith.constant 0 : i32
    %15 = arith.cmpi ne, %14, %c0_i32_8 : i32
    scf.if %15 {
      %c0_11 = arith.constant 0 : index
      %c0_12 = arith.constant 0 : index
      %19 = vector.load %arg7[%c0_11, %c0_12] : memref<1x128xf32, #tpu.memory_space<vmem>>, vector<1x128xf32>
      %cst_13 = arith.constant 0.001953125 : f32
      %20 = vector.broadcast %cst_13 : f32 to vector<1x128xf32>
      %21 = arith.mulf %19, %20 : vector<1x128xf32>
      %c0_14 = arith.constant 0 : index
      %c0_15 = arith.constant 0 : index
      %22 = vector.load %arg8[%c0_14, %c0_15] : memref<1x128xf32, #tpu.memory_space<vmem>>, vector<1x128xf32>
      %cst_16 = arith.constant 0.001953125 : f32
      %23 = vector.broadcast %cst_16 : f32 to vector<1x128xf32>
      %24 = arith.mulf %22, %23 : vector<1x128xf32>
      %25 = arith.mulf %21, %21 : vector<1x128xf32>
      %26 = arith.subf %24, %25 : vector<1x128xf32>
      %cst_17 = arith.constant 0.000000e+00 : f32
      %27 = vector.broadcast %cst_17 : f32 to vector<1x128xf32>
      %28 = arith.maximumf %26, %27 : vector<1x128xf32>
      %c0_18 = arith.constant 0 : index
      %c0_19 = arith.constant 0 : index
      %29 = vector.load %arg4[%c0_18, %c0_19] : memref<1x128xf32, #tpu.memory_space<vmem>>, vector<1x128xf32>
      %cst_20 = arith.constant 9.99999974E-6 : f32
      %30 = vector.broadcast %cst_20 : f32 to vector<1x128xf32>
      %31 = arith.addf %28, %30 : vector<1x128xf32>
      %32 = math.rsqrt %31 : vector<1x128xf32>
      %33 = arith.mulf %29, %32 : vector<1x128xf32>
      %c0_21 = arith.constant 0 : index
      %c0_22 = arith.constant 0 : index
      %34 = vector.load %arg9[%c0_21, %c0_22] : memref<1x128xf32, #tpu.memory_space<vmem>>, vector<1x128xf32>
      tpu.vector_store %arg9[%c0_21, %c0_22], %33 {strides = array<i32>} : memref<1x128xf32, #tpu.memory_space<vmem>>, vector<1x128xf32>,
      %c0_23 = arith.constant 0 : index
      %c0_24 = arith.constant 0 : index
      %35 = vector.load %arg5[%c0_23, %c0_24] : memref<1x128xf32, #tpu.memory_space<vmem>>, vector<1x128xf32>
      %36 = arith.mulf %21, %33 : vector<1x128xf32>
      %37 = arith.subf %35, %36 : vector<1x128xf32>
      %c0_25 = arith.constant 0 : index
      %c0_26 = arith.constant 0 : index
      %38 = vector.load %arg10[%c0_25, %c0_26] : memref<1x128xf32, #tpu.memory_space<vmem>>, vector<1x128xf32>
      tpu.vector_store %arg10[%c0_25, %c0_26], %37 {strides = array<i32>} : memref<1x128xf32, #tpu.memory_space<vmem>>, vector<1x128xf32>,
    } else {
    }
    %c1_i32_9 = arith.constant 1 : i32
    %16 = arith.cmpi eq, %arg0, %c1_i32_9 : i32
    %17 = arith.extui %16 : i1 to i32
    %c0_i32_10 = arith.constant 0 : i32
    %18 = arith.cmpi ne, %17, %c0_i32_10 : i32
    scf.if %18 {
      %c0_11 = arith.constant 0 : index
      %c0_12 = arith.constant 0 : index
      %19 = vector.load %arg9[%c0_11, %c0_12] : memref<1x128xf32, #tpu.memory_space<vmem>>, vector<1x128xf32>
      %20 = vector.broadcast %19 : vector<1x128xf32> to vector<512x128xf32>
      %21 = arith.mulf %2, %20 : vector<512x128xf32>
      %c0_13 = arith.constant 0 : index
      %c0_14 = arith.constant 0 : index
      %22 = vector.load %arg10[%c0_13, %c0_14] : memref<1x128xf32, #tpu.memory_space<vmem>>, vector<1x128xf32>
      %23 = vector.broadcast %22 : vector<1x128xf32> to vector<512x128xf32>
      %24 = arith.addf %21, %23 : vector<512x128xf32>
      %cst_15 = arith.constant 0.000000e+00 : f32
      %25 = vector.broadcast %cst_15 : f32 to vector<512x128xf32>
      %26 = arith.cmpf ogt, %24, %25 : vector<512x128xf32>
      %cst_16 = arith.constant 2.000000e-01 : f32
      %27 = vector.broadcast %cst_16 : f32 to vector<512x128xf32>
      %28 = arith.mulf %27, %24 : vector<512x128xf32>
      %29 = arith.select %26, %24, %28 : vector<512x128xi1>, vector<512x128xf32>
      %30 = arith.truncf %29 : vector<512x128xf32> to vector<512x128xbf16>
      %c0_17 = arith.constant 0 : index
      %c0_18 = arith.constant 0 : index
      %31 = vector.load %arg6[%c0_17, %c0_18] : memref<512x128xbf16, #tpu.memory_space<vmem>>, vector<512x128xbf16>
      tpu.vector_store %arg6[%c0_17, %c0_18], %30 {strides = array<i32>} : memref<512x128xbf16, #tpu.memory_space<vmem>>, vector<512x128xbf16>,
    } else {
    }
    return
  }
  func.func @transform_0(%arg0: i32, %arg1: i32) -> (i32, i32) {
    %c0_i32 = arith.constant 0 : i32
    %c0_i32_0 = arith.constant 0 : i32
    return %arg1, %c0_i32 : i32, i32
  }
  func.func @transform_1(%arg0: i32, %arg1: i32) -> (i32, i32) {
    %c0_i32 = arith.constant 0 : i32
    %c0_i32_0 = arith.constant 0 : i32
    %c0_i32_1 = arith.constant 0 : i32
    return %c0_i32, %c0_i32_0 : i32, i32
  }
  func.func @transform_2(%arg0: i32, %arg1: i32) -> (i32, i32) {
    %c0_i32 = arith.constant 0 : i32
    %c0_i32_0 = arith.constant 0 : i32
    %c0_i32_1 = arith.constant 0 : i32
    return %c0_i32, %c0_i32_0 : i32, i32
  }
  func.func @transform_3(%arg0: i32, %arg1: i32) -> (i32, i32) {
    %c0_i32 = arith.constant 0 : i32
    %c0_i32_0 = arith.constant 0 : i32
    %c0_i32_1 = arith.constant 0 : i32
    return %c0_i32, %c0_i32_0 : i32, i32
  }
  func.func @transform_4(%arg0: i32, %arg1: i32) -> (i32, i32) {
    %0 = arith.muli %arg0, %arg1 : i32
    %c0_i32 = arith.constant 0 : i32
    %c0_i32_0 = arith.constant 0 : i32
    return %0, %c0_i32 : i32, i32
  }
}

module attributes {stable_mosaic.version = 11 : i64} {
  func.func @kernel(%arg0: i32, %arg1: i32, %arg2: memref<128x256xbf16, #tpu.memory_space<vmem>>, %arg3: memref<256x128xbf16, #tpu.memory_space<vmem>>, %arg4: memref<1x128xf32, #tpu.memory_space<vmem>>, %arg5: memref<1x128xf32, #tpu.memory_space<vmem>>, %arg6: memref<128x128xbf16, #tpu.memory_space<vmem>>, %arg7: memref<1x128xf32, #tpu.memory_space<vmem>>, %arg8: memref<1x128xf32, #tpu.memory_space<vmem>>, %arg9: memref<1x128xf32, #tpu.memory_space<vmem>>, %arg10: memref<1x128xf32, #tpu.memory_space<vmem>>) attributes {dimension_semantics = [#tpu.dimension_semantics<arbitrary>, #tpu.dimension_semantics<arbitrary>], iteration_bounds = array<i64: 2, 1>, scalar_prefetch = 0 : i64, scratch_operands = 4 : i64, tpu.core_type = #tpu.core_type<tc>, window_params = [{transform_indices = @transform_0, window_bounds = array<i64: 128, 256>}, {pipeline_mode = #tpu.pipeline_mode<synchronous>, transform_indices = @transform_1, window_bounds = array<i64: 256, 128>}, {pipeline_mode = #tpu.pipeline_mode<synchronous>, transform_indices = @transform_2, window_bounds = array<i64: 1, 128>}, {pipeline_mode = #tpu.pipeline_mode<synchronous>, transform_indices = @transform_3, window_bounds = array<i64: 1, 128>}, {transform_indices = @transform_4, window_bounds = array<i64: 128, 128>}]} {
    %c0 = arith.constant 0 : index
    %c0_0 = arith.constant 0 : index
    %0 = vector.load %arg2[%c0, %c0_0] : memref<128x256xbf16, #tpu.memory_space<vmem>>, vector<128x256xbf16>
    %c0_1 = arith.constant 0 : index
    %c0_2 = arith.constant 0 : index
    %1 = vector.load %arg3[%c0_1, %c0_2] : memref<256x128xbf16, #tpu.memory_space<vmem>>, vector<256x128xbf16>
    %cst = arith.constant dense<0.000000e+00> : vector<128x128xf32>
    %2 = tpu.matmul %0, %1, %cst {dimension_numbers = #tpu.dot_dimension_numbers<[1], [0], [0], [1], [0, 0, 1, 1], [], []>} : vector<128x256xbf16>, vector<256x128xbf16>, vector<128x128xf32> -> vector<128x128xf32>
    %c0_i32 = arith.constant 0 : i32
    %3 = arith.cmpi eq, %arg0, %c0_i32 : i32
    %c0_i32_3 = arith.constant 0 : i32
    %4 = arith.cmpi eq, %arg1, %c0_i32_3 : i32
    %5 = arith.andi %3, %4 : i1
    %6 = arith.extui %5 : i1 to i32
    %c0_i32_4 = arith.constant 0 : i32
    %7 = arith.cmpi ne, %6, %c0_i32_4 : i32
    scf.if %7 {
      %cst_11 = arith.constant 0.000000e+00 : f32
      %19 = vector.broadcast %cst_11 : f32 to vector<1x128xf32>
      %c0_12 = arith.constant 0 : index
      %c0_13 = arith.constant 0 : index
      %20 = vector.load %arg7[%c0_12, %c0_13] : memref<1x128xf32, #tpu.memory_space<vmem>>, vector<1x128xf32>
      tpu.vector_store %arg7[%c0_12, %c0_13], %19 {strides = array<i32>} : memref<1x128xf32, #tpu.memory_space<vmem>>, vector<1x128xf32>,
      %cst_14 = arith.constant 0.000000e+00 : f32
      %21 = vector.broadcast %cst_14 : f32 to vector<1x128xf32>
      %c0_15 = arith.constant 0 : index
      %c0_16 = arith.constant 0 : index
      %22 = vector.load %arg8[%c0_15, %c0_16] : memref<1x128xf32, #tpu.memory_space<vmem>>, vector<1x128xf32>
      tpu.vector_store %arg8[%c0_15, %c0_16], %21 {strides = array<i32>} : memref<1x128xf32, #tpu.memory_space<vmem>>, vector<1x128xf32>,
    } else {
    }
    %c0_i32_5 = arith.constant 0 : i32
    %8 = arith.cmpi eq, %arg0, %c0_i32_5 : i32
    %9 = arith.extui %8 : i1 to i32
    %c0_i32_6 = arith.constant 0 : i32
    %10 = arith.cmpi ne, %9, %c0_i32_6 : i32
    scf.if %10 {
      %c0_11 = arith.constant 0 : index
      %c0_12 = arith.constant 0 : index
      %19 = vector.load %arg7[%c0_11, %c0_12] : memref<1x128xf32, #tpu.memory_space<vmem>>, vector<1x128xf32>
      %cst_13 = arith.constant dense<0.000000e+00> : vector<128xf32>
      %20 = vector.multi_reduction <add>, %2, %cst_13 [0] : vector<128x128xf32> to vector<128xf32>
      %21 = vector.shape_cast %20 : vector<128xf32> to vector<1x128xf32>
      %22 = arith.addf %19, %21 : vector<1x128xf32>
      %c0_14 = arith.constant 0 : index
      %c0_15 = arith.constant 0 : index
      %23 = vector.load %arg7[%c0_14, %c0_15] : memref<1x128xf32, #tpu.memory_space<vmem>>, vector<1x128xf32>
      tpu.vector_store %arg7[%c0_14, %c0_15], %22 {strides = array<i32>} : memref<1x128xf32, #tpu.memory_space<vmem>>, vector<1x128xf32>,
      %c0_16 = arith.constant 0 : index
      %c0_17 = arith.constant 0 : index
      %24 = vector.load %arg8[%c0_16, %c0_17] : memref<1x128xf32, #tpu.memory_space<vmem>>, vector<1x128xf32>
      %25 = arith.mulf %2, %2 : vector<128x128xf32>
      %cst_18 = arith.constant dense<0.000000e+00> : vector<128xf32>
      %26 = vector.multi_reduction <add>, %25, %cst_18 [0] : vector<128x128xf32> to vector<128xf32>
      %27 = vector.shape_cast %26 : vector<128xf32> to vector<1x128xf32>
      %28 = arith.addf %24, %27 : vector<1x128xf32>
      %c0_19 = arith.constant 0 : index
      %c0_20 = arith.constant 0 : index
      %29 = vector.load %arg8[%c0_19, %c0_20] : memref<1x128xf32, #tpu.memory_space<vmem>>, vector<1x128xf32>
      tpu.vector_store %arg8[%c0_19, %c0_20], %28 {strides = array<i32>} : memref<1x128xf32, #tpu.memory_space<vmem>>, vector<1x128xf32>,
    } else {
    }
    %c1_i32 = arith.constant 1 : i32
    %11 = arith.cmpi eq, %arg0, %c1_i32 : i32
    %c0_i32_7 = arith.constant 0 : i32
    %12 = arith.cmpi eq, %arg1, %c0_i32_7 : i32
    %13 = arith.andi %11, %12 : i1
    %14 = arith.extui %13 : i1 to i32
    %c0_i32_8 = arith.constant 0 : i32
    %15 = arith.cmpi ne, %14, %c0_i32_8 : i32
    scf.if %15 {
      %c0_11 = arith.constant 0 : index
      %c0_12 = arith.constant 0 : index
      %19 = vector.load %arg7[%c0_11, %c0_12] : memref<1x128xf32, #tpu.memory_space<vmem>>, vector<1x128xf32>
      %cst_13 = arith.constant 7.812500e-03 : f32
      %20 = vector.broadcast %cst_13 : f32 to vector<1x128xf32>
      %21 = arith.mulf %19, %20 : vector<1x128xf32>
      %c0_14 = arith.constant 0 : index
      %c0_15 = arith.constant 0 : index
      %22 = vector.load %arg8[%c0_14, %c0_15] : memref<1x128xf32, #tpu.memory_space<vmem>>, vector<1x128xf32>
      %cst_16 = arith.constant 7.812500e-03 : f32
      %23 = vector.broadcast %cst_16 : f32 to vector<1x128xf32>
      %24 = arith.mulf %22, %23 : vector<1x128xf32>
      %25 = arith.mulf %21, %21 : vector<1x128xf32>
      %26 = arith.subf %24, %25 : vector<1x128xf32>
      %cst_17 = arith.constant 0.000000e+00 : f32
      %27 = vector.broadcast %cst_17 : f32 to vector<1x128xf32>
      %28 = arith.maximumf %26, %27 : vector<1x128xf32>
      %c0_18 = arith.constant 0 : index
      %c0_19 = arith.constant 0 : index
      %29 = vector.load %arg4[%c0_18, %c0_19] : memref<1x128xf32, #tpu.memory_space<vmem>>, vector<1x128xf32>
      %cst_20 = arith.constant 9.99999974E-6 : f32
      %30 = vector.broadcast %cst_20 : f32 to vector<1x128xf32>
      %31 = arith.addf %28, %30 : vector<1x128xf32>
      %32 = math.rsqrt %31 : vector<1x128xf32>
      %33 = arith.mulf %29, %32 : vector<1x128xf32>
      %c0_21 = arith.constant 0 : index
      %c0_22 = arith.constant 0 : index
      %34 = vector.load %arg9[%c0_21, %c0_22] : memref<1x128xf32, #tpu.memory_space<vmem>>, vector<1x128xf32>
      tpu.vector_store %arg9[%c0_21, %c0_22], %33 {strides = array<i32>} : memref<1x128xf32, #tpu.memory_space<vmem>>, vector<1x128xf32>,
      %c0_23 = arith.constant 0 : index
      %c0_24 = arith.constant 0 : index
      %35 = vector.load %arg5[%c0_23, %c0_24] : memref<1x128xf32, #tpu.memory_space<vmem>>, vector<1x128xf32>
      %36 = arith.mulf %21, %33 : vector<1x128xf32>
      %37 = arith.subf %35, %36 : vector<1x128xf32>
      %c0_25 = arith.constant 0 : index
      %c0_26 = arith.constant 0 : index
      %38 = vector.load %arg10[%c0_25, %c0_26] : memref<1x128xf32, #tpu.memory_space<vmem>>, vector<1x128xf32>
      tpu.vector_store %arg10[%c0_25, %c0_26], %37 {strides = array<i32>} : memref<1x128xf32, #tpu.memory_space<vmem>>, vector<1x128xf32>,
    } else {
    }
    %c1_i32_9 = arith.constant 1 : i32
    %16 = arith.cmpi eq, %arg0, %c1_i32_9 : i32
    %17 = arith.extui %16 : i1 to i32
    %c0_i32_10 = arith.constant 0 : i32
    %18 = arith.cmpi ne, %17, %c0_i32_10 : i32
    scf.if %18 {
      %c0_11 = arith.constant 0 : index
      %c0_12 = arith.constant 0 : index
      %19 = vector.load %arg9[%c0_11, %c0_12] : memref<1x128xf32, #tpu.memory_space<vmem>>, vector<1x128xf32>
      %20 = vector.broadcast %19 : vector<1x128xf32> to vector<128x128xf32>
      %21 = arith.mulf %2, %20 : vector<128x128xf32>
      %c0_13 = arith.constant 0 : index
      %c0_14 = arith.constant 0 : index
      %22 = vector.load %arg10[%c0_13, %c0_14] : memref<1x128xf32, #tpu.memory_space<vmem>>, vector<1x128xf32>
      %23 = vector.broadcast %22 : vector<1x128xf32> to vector<128x128xf32>
      %24 = arith.addf %21, %23 : vector<128x128xf32>
      %cst_15 = arith.constant 0.000000e+00 : f32
      %25 = vector.broadcast %cst_15 : f32 to vector<128x128xf32>
      %26 = arith.cmpf ogt, %24, %25 : vector<128x128xf32>
      %cst_16 = arith.constant 2.000000e-01 : f32
      %27 = vector.broadcast %cst_16 : f32 to vector<128x128xf32>
      %28 = arith.mulf %27, %24 : vector<128x128xf32>
      %29 = arith.select %26, %24, %28 : vector<128x128xi1>, vector<128x128xf32>
      %30 = arith.truncf %29 : vector<128x128xf32> to vector<128x128xbf16>
      %c0_17 = arith.constant 0 : index
      %c0_18 = arith.constant 0 : index
      %31 = vector.load %arg6[%c0_17, %c0_18] : memref<128x128xbf16, #tpu.memory_space<vmem>>, vector<128x128xbf16>
      tpu.vector_store %arg6[%c0_17, %c0_18], %30 {strides = array<i32>} : memref<128x128xbf16, #tpu.memory_space<vmem>>, vector<128x128xbf16>,
    } else {
    }
    return
  }
  func.func @transform_0(%arg0: i32, %arg1: i32) -> (i32, i32) {
    %c0_i32 = arith.constant 0 : i32
    %c0_i32_0 = arith.constant 0 : i32
    return %arg1, %c0_i32 : i32, i32
  }
  func.func @transform_1(%arg0: i32, %arg1: i32) -> (i32, i32) {
    %c0_i32 = arith.constant 0 : i32
    %c0_i32_0 = arith.constant 0 : i32
    %c0_i32_1 = arith.constant 0 : i32
    return %c0_i32, %c0_i32_0 : i32, i32
  }
  func.func @transform_2(%arg0: i32, %arg1: i32) -> (i32, i32) {
    %c0_i32 = arith.constant 0 : i32
    %c0_i32_0 = arith.constant 0 : i32
    %c0_i32_1 = arith.constant 0 : i32
    return %c0_i32, %c0_i32_0 : i32, i32
  }
  func.func @transform_3(%arg0: i32, %arg1: i32) -> (i32, i32) {
    %c0_i32 = arith.constant 0 : i32
    %c0_i32_0 = arith.constant 0 : i32
    %c0_i32_1 = arith.constant 0 : i32
    return %c0_i32, %c0_i32_0 : i32, i32
  }
  func.func @transform_4(%arg0: i32, %arg1: i32) -> (i32, i32) {
    %0 = arith.muli %arg0, %arg1 : i32
    %c0_i32 = arith.constant 0 : i32
    %c0_i32_0 = arith.constant 0 : i32
    return %0, %c0_i32 : i32, i32
  }
}

module attributes {stable_mosaic.version = 11 : i64} {
  func.func @kernel(%arg0: i32, %arg1: i32, %arg2: memref<32x512xbf16, #tpu.memory_space<vmem>>, %arg3: memref<512x128xbf16, #tpu.memory_space<vmem>>, %arg4: memref<1x128xf32, #tpu.memory_space<vmem>>, %arg5: memref<1x128xf32, #tpu.memory_space<vmem>>, %arg6: memref<32x128xbf16, #tpu.memory_space<vmem>>, %arg7: memref<1x128xf32, #tpu.memory_space<vmem>>, %arg8: memref<1x128xf32, #tpu.memory_space<vmem>>, %arg9: memref<1x128xf32, #tpu.memory_space<vmem>>, %arg10: memref<1x128xf32, #tpu.memory_space<vmem>>) attributes {dimension_semantics = [#tpu.dimension_semantics<arbitrary>, #tpu.dimension_semantics<arbitrary>], iteration_bounds = array<i64: 2, 1>, scalar_prefetch = 0 : i64, scratch_operands = 4 : i64, tpu.core_type = #tpu.core_type<tc>, window_params = [{transform_indices = @transform_0, window_bounds = array<i64: 32, 512>}, {pipeline_mode = #tpu.pipeline_mode<synchronous>, transform_indices = @transform_1, window_bounds = array<i64: 512, 128>}, {pipeline_mode = #tpu.pipeline_mode<synchronous>, transform_indices = @transform_2, window_bounds = array<i64: 1, 128>}, {pipeline_mode = #tpu.pipeline_mode<synchronous>, transform_indices = @transform_3, window_bounds = array<i64: 1, 128>}, {transform_indices = @transform_4, window_bounds = array<i64: 32, 128>}]} {
    %c0 = arith.constant 0 : index
    %c0_0 = arith.constant 0 : index
    %0 = vector.load %arg2[%c0, %c0_0] : memref<32x512xbf16, #tpu.memory_space<vmem>>, vector<32x512xbf16>
    %c0_1 = arith.constant 0 : index
    %c0_2 = arith.constant 0 : index
    %1 = vector.load %arg3[%c0_1, %c0_2] : memref<512x128xbf16, #tpu.memory_space<vmem>>, vector<512x128xbf16>
    %cst = arith.constant dense<0.000000e+00> : vector<32x128xf32>
    %2 = tpu.matmul %0, %1, %cst {dimension_numbers = #tpu.dot_dimension_numbers<[1], [0], [0], [1], [0, 0, 1, 1], [], []>} : vector<32x512xbf16>, vector<512x128xbf16>, vector<32x128xf32> -> vector<32x128xf32>
    %c0_i32 = arith.constant 0 : i32
    %3 = arith.cmpi eq, %arg0, %c0_i32 : i32
    %c0_i32_3 = arith.constant 0 : i32
    %4 = arith.cmpi eq, %arg1, %c0_i32_3 : i32
    %5 = arith.andi %3, %4 : i1
    %6 = arith.extui %5 : i1 to i32
    %c0_i32_4 = arith.constant 0 : i32
    %7 = arith.cmpi ne, %6, %c0_i32_4 : i32
    scf.if %7 {
      %cst_11 = arith.constant 0.000000e+00 : f32
      %19 = vector.broadcast %cst_11 : f32 to vector<1x128xf32>
      %c0_12 = arith.constant 0 : index
      %c0_13 = arith.constant 0 : index
      %20 = vector.load %arg7[%c0_12, %c0_13] : memref<1x128xf32, #tpu.memory_space<vmem>>, vector<1x128xf32>
      tpu.vector_store %arg7[%c0_12, %c0_13], %19 {strides = array<i32>} : memref<1x128xf32, #tpu.memory_space<vmem>>, vector<1x128xf32>,
      %cst_14 = arith.constant 0.000000e+00 : f32
      %21 = vector.broadcast %cst_14 : f32 to vector<1x128xf32>
      %c0_15 = arith.constant 0 : index
      %c0_16 = arith.constant 0 : index
      %22 = vector.load %arg8[%c0_15, %c0_16] : memref<1x128xf32, #tpu.memory_space<vmem>>, vector<1x128xf32>
      tpu.vector_store %arg8[%c0_15, %c0_16], %21 {strides = array<i32>} : memref<1x128xf32, #tpu.memory_space<vmem>>, vector<1x128xf32>,
    } else {
    }
    %c0_i32_5 = arith.constant 0 : i32
    %8 = arith.cmpi eq, %arg0, %c0_i32_5 : i32
    %9 = arith.extui %8 : i1 to i32
    %c0_i32_6 = arith.constant 0 : i32
    %10 = arith.cmpi ne, %9, %c0_i32_6 : i32
    scf.if %10 {
      %c0_11 = arith.constant 0 : index
      %c0_12 = arith.constant 0 : index
      %19 = vector.load %arg7[%c0_11, %c0_12] : memref<1x128xf32, #tpu.memory_space<vmem>>, vector<1x128xf32>
      %cst_13 = arith.constant dense<0.000000e+00> : vector<128xf32>
      %20 = vector.multi_reduction <add>, %2, %cst_13 [0] : vector<32x128xf32> to vector<128xf32>
      %21 = vector.shape_cast %20 : vector<128xf32> to vector<1x128xf32>
      %22 = arith.addf %19, %21 : vector<1x128xf32>
      %c0_14 = arith.constant 0 : index
      %c0_15 = arith.constant 0 : index
      %23 = vector.load %arg7[%c0_14, %c0_15] : memref<1x128xf32, #tpu.memory_space<vmem>>, vector<1x128xf32>
      tpu.vector_store %arg7[%c0_14, %c0_15], %22 {strides = array<i32>} : memref<1x128xf32, #tpu.memory_space<vmem>>, vector<1x128xf32>,
      %c0_16 = arith.constant 0 : index
      %c0_17 = arith.constant 0 : index
      %24 = vector.load %arg8[%c0_16, %c0_17] : memref<1x128xf32, #tpu.memory_space<vmem>>, vector<1x128xf32>
      %25 = arith.mulf %2, %2 : vector<32x128xf32>
      %cst_18 = arith.constant dense<0.000000e+00> : vector<128xf32>
      %26 = vector.multi_reduction <add>, %25, %cst_18 [0] : vector<32x128xf32> to vector<128xf32>
      %27 = vector.shape_cast %26 : vector<128xf32> to vector<1x128xf32>
      %28 = arith.addf %24, %27 : vector<1x128xf32>
      %c0_19 = arith.constant 0 : index
      %c0_20 = arith.constant 0 : index
      %29 = vector.load %arg8[%c0_19, %c0_20] : memref<1x128xf32, #tpu.memory_space<vmem>>, vector<1x128xf32>
      tpu.vector_store %arg8[%c0_19, %c0_20], %28 {strides = array<i32>} : memref<1x128xf32, #tpu.memory_space<vmem>>, vector<1x128xf32>,
    } else {
    }
    %c1_i32 = arith.constant 1 : i32
    %11 = arith.cmpi eq, %arg0, %c1_i32 : i32
    %c0_i32_7 = arith.constant 0 : i32
    %12 = arith.cmpi eq, %arg1, %c0_i32_7 : i32
    %13 = arith.andi %11, %12 : i1
    %14 = arith.extui %13 : i1 to i32
    %c0_i32_8 = arith.constant 0 : i32
    %15 = arith.cmpi ne, %14, %c0_i32_8 : i32
    scf.if %15 {
      %c0_11 = arith.constant 0 : index
      %c0_12 = arith.constant 0 : index
      %19 = vector.load %arg7[%c0_11, %c0_12] : memref<1x128xf32, #tpu.memory_space<vmem>>, vector<1x128xf32>
      %cst_13 = arith.constant 3.125000e-02 : f32
      %20 = vector.broadcast %cst_13 : f32 to vector<1x128xf32>
      %21 = arith.mulf %19, %20 : vector<1x128xf32>
      %c0_14 = arith.constant 0 : index
      %c0_15 = arith.constant 0 : index
      %22 = vector.load %arg8[%c0_14, %c0_15] : memref<1x128xf32, #tpu.memory_space<vmem>>, vector<1x128xf32>
      %cst_16 = arith.constant 3.125000e-02 : f32
      %23 = vector.broadcast %cst_16 : f32 to vector<1x128xf32>
      %24 = arith.mulf %22, %23 : vector<1x128xf32>
      %25 = arith.mulf %21, %21 : vector<1x128xf32>
      %26 = arith.subf %24, %25 : vector<1x128xf32>
      %cst_17 = arith.constant 0.000000e+00 : f32
      %27 = vector.broadcast %cst_17 : f32 to vector<1x128xf32>
      %28 = arith.maximumf %26, %27 : vector<1x128xf32>
      %c0_18 = arith.constant 0 : index
      %c0_19 = arith.constant 0 : index
      %29 = vector.load %arg4[%c0_18, %c0_19] : memref<1x128xf32, #tpu.memory_space<vmem>>, vector<1x128xf32>
      %cst_20 = arith.constant 9.99999974E-6 : f32
      %30 = vector.broadcast %cst_20 : f32 to vector<1x128xf32>
      %31 = arith.addf %28, %30 : vector<1x128xf32>
      %32 = math.rsqrt %31 : vector<1x128xf32>
      %33 = arith.mulf %29, %32 : vector<1x128xf32>
      %c0_21 = arith.constant 0 : index
      %c0_22 = arith.constant 0 : index
      %34 = vector.load %arg9[%c0_21, %c0_22] : memref<1x128xf32, #tpu.memory_space<vmem>>, vector<1x128xf32>
      tpu.vector_store %arg9[%c0_21, %c0_22], %33 {strides = array<i32>} : memref<1x128xf32, #tpu.memory_space<vmem>>, vector<1x128xf32>,
      %c0_23 = arith.constant 0 : index
      %c0_24 = arith.constant 0 : index
      %35 = vector.load %arg5[%c0_23, %c0_24] : memref<1x128xf32, #tpu.memory_space<vmem>>, vector<1x128xf32>
      %36 = arith.mulf %21, %33 : vector<1x128xf32>
      %37 = arith.subf %35, %36 : vector<1x128xf32>
      %c0_25 = arith.constant 0 : index
      %c0_26 = arith.constant 0 : index
      %38 = vector.load %arg10[%c0_25, %c0_26] : memref<1x128xf32, #tpu.memory_space<vmem>>, vector<1x128xf32>
      tpu.vector_store %arg10[%c0_25, %c0_26], %37 {strides = array<i32>} : memref<1x128xf32, #tpu.memory_space<vmem>>, vector<1x128xf32>,
    } else {
    }
    %c1_i32_9 = arith.constant 1 : i32
    %16 = arith.cmpi eq, %arg0, %c1_i32_9 : i32
    %17 = arith.extui %16 : i1 to i32
    %c0_i32_10 = arith.constant 0 : i32
    %18 = arith.cmpi ne, %17, %c0_i32_10 : i32
    scf.if %18 {
      %c0_11 = arith.constant 0 : index
      %c0_12 = arith.constant 0 : index
      %19 = vector.load %arg9[%c0_11, %c0_12] : memref<1x128xf32, #tpu.memory_space<vmem>>, vector<1x128xf32>
      %20 = vector.broadcast %19 : vector<1x128xf32> to vector<32x128xf32>
      %21 = arith.mulf %2, %20 : vector<32x128xf32>
      %c0_13 = arith.constant 0 : index
      %c0_14 = arith.constant 0 : index
      %22 = vector.load %arg10[%c0_13, %c0_14] : memref<1x128xf32, #tpu.memory_space<vmem>>, vector<1x128xf32>
      %23 = vector.broadcast %22 : vector<1x128xf32> to vector<32x128xf32>
      %24 = arith.addf %21, %23 : vector<32x128xf32>
      %cst_15 = arith.constant 0.000000e+00 : f32
      %25 = vector.broadcast %cst_15 : f32 to vector<32x128xf32>
      %26 = arith.cmpf ogt, %24, %25 : vector<32x128xf32>
      %cst_16 = arith.constant 2.000000e-01 : f32
      %27 = vector.broadcast %cst_16 : f32 to vector<32x128xf32>
      %28 = arith.mulf %27, %24 : vector<32x128xf32>
      %29 = arith.select %26, %24, %28 : vector<32x128xi1>, vector<32x128xf32>
      %30 = arith.truncf %29 : vector<32x128xf32> to vector<32x128xbf16>
      %c0_17 = arith.constant 0 : index
      %c0_18 = arith.constant 0 : index
      %31 = vector.load %arg6[%c0_17, %c0_18] : memref<32x128xbf16, #tpu.memory_space<vmem>>, vector<32x128xbf16>
      tpu.vector_store %arg6[%c0_17, %c0_18], %30 {strides = array<i32>} : memref<32x128xbf16, #tpu.memory_space<vmem>>, vector<32x128xbf16>,
    } else {
    }
    return
  }
  func.func @transform_0(%arg0: i32, %arg1: i32) -> (i32, i32) {
    %c0_i32 = arith.constant 0 : i32
    %c0_i32_0 = arith.constant 0 : i32
    return %arg1, %c0_i32 : i32, i32
  }
  func.func @transform_1(%arg0: i32, %arg1: i32) -> (i32, i32) {
    %c0_i32 = arith.constant 0 : i32
    %c0_i32_0 = arith.constant 0 : i32
    %c0_i32_1 = arith.constant 0 : i32
    return %c0_i32, %c0_i32_0 : i32, i32
  }
  func.func @transform_2(%arg0: i32, %arg1: i32) -> (i32, i32) {
    %c0_i32 = arith.constant 0 : i32
    %c0_i32_0 = arith.constant 0 : i32
    %c0_i32_1 = arith.constant 0 : i32
    return %c0_i32, %c0_i32_0 : i32, i32
  }
  func.func @transform_3(%arg0: i32, %arg1: i32) -> (i32, i32) {
    %c0_i32 = arith.constant 0 : i32
    %c0_i32_0 = arith.constant 0 : i32
    %c0_i32_1 = arith.constant 0 : i32
    return %c0_i32, %c0_i32_0 : i32, i32
  }
  func.func @transform_4(%arg0: i32, %arg1: i32) -> (i32, i32) {
    %0 = arith.muli %arg0, %arg1 : i32
    %c0_i32 = arith.constant 0 : i32
    %c0_i32_0 = arith.constant 0 : i32
    return %0, %c0_i32 : i32, i32
  }
}

module attributes {stable_mosaic.version = 11 : i64} {
  func.func @_conv_sigmoid_kernel(%arg0: i32, %arg1: memref<8x1024xbf16, #tpu.memory_space<vmem>>, %arg2: memref<1024x128xbf16, #tpu.memory_space<vmem>>, %arg3: memref<8x128xf32, #tpu.memory_space<vmem>>) attributes {dimension_semantics = [#tpu.dimension_semantics<arbitrary>], iteration_bounds = array<i64: 1>, scalar_prefetch = 0 : i64, scratch_operands = 0 : i64, tpu.core_type = #tpu.core_type<tc>, window_params = [{transform_indices = @transform_0, window_bounds = array<i64: 8, 1024>}, {pipeline_mode = #tpu.pipeline_mode<synchronous>, transform_indices = @transform_1, window_bounds = array<i64: 1024, 128>}, {transform_indices = @transform_2, window_bounds = array<i64: 8, 128>}]} {
    %c0 = arith.constant 0 : index
    %c0_0 = arith.constant 0 : index
    %0 = vector.load %arg1[%c0, %c0_0] : memref<8x1024xbf16, #tpu.memory_space<vmem>>, vector<8x1024xbf16>
    %c0_1 = arith.constant 0 : index
    %c0_2 = arith.constant 0 : index
    %1 = vector.load %arg2[%c0_1, %c0_2] : memref<1024x128xbf16, #tpu.memory_space<vmem>>, vector<1024x128xbf16>
    %cst = arith.constant dense<0.000000e+00> : vector<8x128xf32>
    %2 = tpu.matmul %0, %1, %cst {dimension_numbers = #tpu.dot_dimension_numbers<[1], [0], [0], [1], [0, 0, 1, 1], [], []>} : vector<8x1024xbf16>, vector<1024x128xbf16>, vector<8x128xf32> -> vector<8x128xf32>
    %3 = arith.negf %2 : vector<8x128xf32>
    %4 = math.exp %3 : vector<8x128xf32>
    %cst_3 = arith.constant 1.000000e+00 : f32
    %5 = vector.broadcast %cst_3 : f32 to vector<8x128xf32>
    %6 = arith.addf %5, %4 : vector<8x128xf32>
    %7 = arith.divf %5, %6 : vector<8x128xf32>
    %c0_4 = arith.constant 0 : index
    %c0_5 = arith.constant 0 : index
    %8 = vector.load %arg3[%c0_4, %c0_5] : memref<8x128xf32, #tpu.memory_space<vmem>>, vector<8x128xf32>
    tpu.vector_store %arg3[%c0_4, %c0_5], %7 {strides = array<i32>} : memref<8x128xf32, #tpu.memory_space<vmem>>, vector<8x128xf32>,
    return
  }
  func.func @transform_0(%arg0: i32) -> (i32, i32) {
    %c0_i32 = arith.constant 0 : i32
    %c0_i32_0 = arith.constant 0 : i32
    return %arg0, %c0_i32 : i32, i32
  }
  func.func @transform_1(%arg0: i32) -> (i32, i32) {
    %c0_i32 = arith.constant 0 : i32
    %c0_i32_0 = arith.constant 0 : i32
    %c0_i32_1 = arith.constant 0 : i32
    return %c0_i32, %c0_i32_0 : i32, i32
  }
  func.func @transform_2(%arg0: i32) -> (i32, i32) {
    %c0_i32 = arith.constant 0 : i32
    %c0_i32_0 = arith.constant 0 : i32
    return %arg0, %c0_i32 : i32, i32
  }
}

</mosaic_0001>

<llo_original>
// kernel: dcgan_discriminator.5
$region0: #{dcgan_discriminator.5}
  #allocation0 [shape = 'u32[]', space=smem, size = 0x4, offset = 0x4, fixed_abs, tag = 'smem constant byte address 0x4 - core index']
  #allocation1 [shape = 'u32[72,128]{1,0:T(1,128)}', space=vmem, size = 0x9000, scoped, tag = 'internal scratch']
  #allocation2 [shape = 'f32[1,128]{1,0:T(1,128)}', space=vmem, size = 0x200, scoped, tag = 'scratch operand']
  #allocation3 [shape = 'f32[1,128]{1,0:T(1,128)}', space=vmem, size = 0x200, scoped, tag = 'scratch operand']
  #allocation4 [shape = 'f32[1,128]{1,0:T(1,128)}', space=vmem, size = 0x200, scoped, tag = 'scratch operand']
  #allocation5 [shape = 'f32[1,128]{1,0:T(1,128)}', space=vmem, size = 0x200, scoped, tag = 'scratch operand']
  %s0 = inlined_call_operand.vmem [shape: bf16[2048,128], index: 0, kind: input, shape index: {}]
  %s1 = inlined_call_operand.vmem [shape: bf16[128,128], index: 1, kind: input, shape index: {}]
  %s2 = inlined_call_operand.vmem [shape: f32[1,128], index: 2, kind: input, shape index: {}]
  %s3 = inlined_call_operand.vmem [shape: f32[1,128], index: 3, kind: input, shape index: {}]
  %s4 = inlined_call_operand.vmem [shape: bf16[2048,128], index: 4, kind: output, shape index: {}]
  %s5 = sld [smem:[#allocation0]]
  $region65: #{dcgan_discriminator.5} parent=0
    _
  %s7 = ssub.s32 1, %s5
  %s8 = scalar_select 0, %s7, %s5
  loop: start=0, step=1, limit=10
  $region2: #{dcgan_discriminator.5} parent=0 // loop_pre_header
    _
  $region3: #{dcgan_discriminator.5} parent=0 // loop_header
    %s10 = sphi 0, %s14
    %p11 = scmp.ge.s32.totalorder %s10, 10
    %s17 = sphi 0, %s29
    %s18 = sphi 0, %s25
    %s19 = sphi 0, %s17
    %s20 = sphi 0, %s18
    %s21 = sphi 0, %s19
    %s22 = sphi 0, %s20
    %s32 = sphi 0, %s34
    %s35 = sphi 0, %s32
    %s36 = sphi 0, %s35
    %s52 = sphi 0, %s36
    %s56 = sphi 0, %s56
    %s58 = sphi 0, %s56
    %s59 = sphi 0, %s58
    %s73 = sphi 0, %s59
    %s77 = sphi 0, %s77
    %s79 = sphi 0, %s77
    %s80 = sphi 0, %s79
    %s94 = sphi 0, %s80
    %s98 = sphi 0, %s98
    %s100 = sphi 0, %s98
    %s101 = sphi 0, %s100
    %s115 = sphi 0, %s101
    %s123 = sphi 0, %s125
    %s126 = sphi 0, %s123
    %s127 = sphi 0, %s126
    %s143 = sphi 0, %s127
  $region4: #{dcgan_discriminator.5} parent=0 // loop_header_branch
    %13 = sbr.rel (%p11) target = $region8
  $region5: #{dcgan_discriminator.5} parent=0 // loop_body
    %s15 = ssub.s32 %s10, 1
    %s16 = ssub.s32 %s10, 2
    %s23 = sadd.s32 1, %s18
    %p24 = scmp.ge.s32.totalorder %s23, 4
    %s25 = scalar_select %p24, 0, %s23
    %s26 = sadd.s32 1, %s17
    %s27 = scalar_select %p24, %s26, %s17
    %p28 = scmp.ge.s32.totalorder %s27, 2
    %s29 = scalar_select %p28, 0, %s27
    %s30 = ssub.s32 %s18, %s25
    %p31 = scmp.eq.s32.totalorder %s30, 0
    %s33 = sadd.s32 %s32, 1
    %s34 = scalar_select %p31, %s32, %s33
    %p37 = pneg %p31
    %p38 = scmp.eq.s32.totalorder %s10, 7
    %p39 = por %p37, %p38
    %p40 = scmp.ne.s32.totalorder %s32, %s35
    %p41 = scmp.eq.s32.totalorder %s10, 0
    %p42 = por %p40, %p41
    %p43 = scmp.ne.s32.totalorder %s32, %s35
    %p44 = scmp.eq.s32.totalorder %s15, 7
    %p45 = por %p43, %p44
    %p46 = scmp.ne.s32.totalorder %s35, %s36
    %p47 = scmp.eq.s32.totalorder %s15, 0
    %p48 = por %p46, %p47
    %p49 = scmp.ne.s32.totalorder %s35, %s36
    %p50 = scmp.eq.s32.totalorder %s16, 7
    %p51 = por %p49, %p50
    %p53 = scmp.ne.s32.totalorder %s36, %s52
    %p54 = scmp.eq.s32.totalorder %s16, 0
    %p55 = por %p53, %p54
    %s57 = sadd.s32 %s56, 1
    %p60 = scmp.eq.s32.totalorder %s10, 7
    %p61 = scmp.ne.s32.totalorder %s56, %s58
    %p62 = scmp.eq.s32.totalorder %s10, 0
    %p63 = por %p61, %p62
    %p64 = scmp.ne.s32.totalorder %s56, %s58
    %p65 = scmp.eq.s32.totalorder %s15, 7
    %p66 = por %p64, %p65
    %p67 = scmp.ne.s32.totalorder %s58, %s59
    %p68 = scmp.eq.s32.totalorder %s15, 0
    %p69 = por %p67, %p68
    %p70 = scmp.ne.s32.totalorder %s58, %s59
    %p71 = scmp.eq.s32.totalorder %s16, 7
    %p72 = por %p70, %p71
    %p74 = scmp.ne.s32.totalorder %s59, %s73
    %p75 = scmp.eq.s32.totalorder %s16, 0
    %p76 = por %p74, %p75
    %s78 = sadd.s32 %s77, 1
    %p81 = scmp.eq.s32.totalorder %s10, 7
    %p82 = scmp.ne.s32.totalorder %s77, %s79
    %p83 = scmp.eq.s32.totalorder %s10, 0
    %p84 = por %p82, %p83
    %p85 = scmp.ne.s32.totalorder %s77, %s79
    %p86 = scmp.eq.s32.totalorder %s15, 7
    %p87 = por %p85, %p86
    %p88 = scmp.ne.s32.totalorder %s79, %s80
    %p89 = scmp.eq.s32.totalorder %s15, 0
    %p90 = por %p88, %p89
    %p91 = scmp.ne.s32.totalorder %s79, %s80
    %p92 = scmp.eq.s32.totalorder %s16, 7
    %p93 = por %p91, %p92
    %p95 = scmp.ne.s32.totalorder %s80, %s94
    %p96 = scmp.eq.s32.totalorder %s16, 0
    %p97 = por %p95, %p96
    %s99 = sadd.s32 %s98, 1
    %p102 = scmp.eq.s32.totalorder %s10, 7
    %p103 = scmp.ne.s32.totalorder %s98, %s100
    %p104 = scmp.eq.s32.totalorder %s10, 0
    %p105 = por %p103, %p104
    %p106 = scmp.ne.s32.totalorder %s98, %s100
    %p107 = scmp.eq.s32.totalorder %s15, 7
    %p108 = por %p106, %p107
    %p109 = scmp.ne.s32.totalorder %s100, %s101
    %p110 = scmp.eq.s32.totalorder %s15, 0
    %p111 = por %p109, %p110
    %p112 = scmp.ne.s32.totalorder %s100, %s101
    %p113 = scmp.eq.s32.totalorder %s16, 7
    %p114 = por %p112, %p113
    %p116 = scmp.ne.s32.totalorder %s101, %s115
    %p117 = scmp.eq.s32.totalorder %s16, 0
    %p118 = por %p116, %p117
    %s119 = smul.u32 %s17, %s18
    %s120 = smul.u32 %s29, %s25
    %s121 = ssub.s32 %s119, %s120
    %p122 = scmp.eq.s32.totalorder %s121, 0
    %s124 = sadd.s32 %s123, 1
    %s125 = scalar_select %p122, %s123, %s124
    %p128 = pneg %p122
    %p129 = scmp.eq.s32.totalorder %s10, 7
    %p130 = por %p128, %p129
    %p131 = scmp.ne.s32.totalorder %s123, %s126
    %p132 = scmp.eq.s32.totalorder %s10, 0
    %p133 = por %p131, %p132
    %p134 = scmp.ne.s32.totalorder %s123, %s126
    %p135 = scmp.eq.s32.totalorder %s15, 7
    %p136 = por %p134, %p135
    %p137 = scmp.ne.s32.totalorder %s126, %s127
    %p138 = scmp.eq.s32.totalorder %s15, 0
    %p139 = por %p137, %p138
    %p140 = scmp.ne.s32.totalorder %s126, %s127
    %p141 = scmp.eq.s32.totalorder %s16, 7
    %p142 = por %p140, %p141
    %p144 = scmp.ne.s32.totalorder %s127, %s143
    %p145 = scmp.eq.s32.totalorder %s16, 0
    %p146 = por %p144, %p145
    %p147 = scmp.le.s32.totalorder 1, %s10
    %p148 = scmp.lt.s32.totalorder %s10, 9
    %p149 = pnand %p147, %p148
    %p150 = pneg %p149
    // Predicated region
    $region9: #{dcgan_discriminator.5} parent=5 // pred_check
      _
    $region10: #{dcgan_discriminator.5} parent=5 // pred_check_branch
      %152 = sbr.rel (%p149) target = $region12
    $region11: #{dcgan_discriminator.5} parent=5 // pred_region
      %s153 = ssub.s32 %s10, 1
      // Predicated region
      $region13: #{dcgan_discriminator.5} parent=11 // pred_check
        %p154 = pneg %p69
      $region14: #{dcgan_discriminator.5} parent=11 // pred_check_branch
        %156 = sbr.rel (%p154) target = $region16
      $region15: #{dcgan_discriminator.5} parent=11 // pred_region
        _
      $region16: #{dcgan_discriminator.5} parent=11 // pred_fallthru
        _
      // Predicated region
      $region17: #{dcgan_discriminator.5} parent=11 // pred_check
        %p157 = pneg %p90
      $region18: #{dcgan_discriminator.5} parent=11 // pred_check_branch
        %159 = sbr.rel (%p157) target = $region20
      $region19: #{dcgan_discriminator.5} parent=11 // pred_region
        _
      $region20: #{dcgan_discriminator.5} parent=11 // pred_fallthru
        _
      // Predicated region
      $region21: #{dcgan_discriminator.5} parent=11 // pred_check
        %p160 = pneg %p111
      $region22: #{dcgan_discriminator.5} parent=11 // pred_check_branch
        %162 = sbr.rel (%p160) target = $region24
      $region23: #{dcgan_discriminator.5} parent=11 // pred_region
        _
      $region24: #{dcgan_discriminator.5} parent=11 // pred_fallthru
        _
    $region12: #{dcgan_discriminator.5} parent=5 // pred_fallthru
      _
    %p163 = scmp.lt.s32.totalorder %s10, 8
    // Predicated region
    $region25: #{dcgan_discriminator.5} parent=5 // pred_check
      %p164 = pneg %p163
    $region26: #{dcgan_discriminator.5} parent=5 // pred_check_branch
      %166 = sbr.rel (%p164) target = $region28
    $region27: #{dcgan_discriminator.5} parent=5 // pred_region
      // Predicated region
      $region29: #{dcgan_discriminator.5} parent=27 // pred_check
        %p167 = pneg %p42
      $region30: #{dcgan_discriminator.5} parent=27 // pred_check_branch
        %169 = sbr.rel (%p167) target = $region32
      $region31: #{dcgan_discriminator.5} parent=27 // pred_region
        %s170 = smul.u32 64, %s18
        %p171 = scmp.lt.s32.totalorder %s170, 255
        %s172 = scalar_select %p171, %s170, 255
        %s173 = smul.addr %s172, 4
        %s174 = scalar_lea.vmem %s0, %s173
        %s175 = smul.u32 64, %s18
      $region32: #{dcgan_discriminator.5} parent=27 // pred_fallthru
        _
    $region28: #{dcgan_discriminator.5} parent=5 // pred_fallthru
      _
    %p176 = scmp.le.s32.totalorder 1, %s10
    %p177 = scmp.lt.s32.totalorder %s10, 9
    %p178 = pnand %p176, %p177
    %p179 = pneg %p178
    // Predicated region
    $region33: #{dcgan_discriminator.5} parent=5 // pred_check
      _
    $region34: #{dcgan_discriminator.5} parent=5 // pred_check_branch
      %181 = sbr.rel (%p178) target = $region36
    $region35: #{dcgan_discriminator.5} parent=5 // pred_region
      %s182 = ssub.s32 %s10, 1
      %s183 = smul.u32 64, %s20
      %p184 = scmp.lt.s32.totalorder %s183, 255
      %s185 = scalar_select %p184, %s183, 255
      %s186 = smul.addr %s185, 4
      %s187 = scalar_lea.vmem %s0, %s186
      %p188 = pneg %p48
      %p189 = pneg %p45
      %p190 = pneg %p69
      %p191 = pneg %p66
      %p192 = pneg %p90
      %p193 = pneg %p87
      %p194 = pneg %p111
      %p195 = pneg %p108
      %p196 = pneg %p139
      %p197 = pneg %p136
      %s198 = smul.u32 %s19, %s20
      %s199 = smul.u32 64, %s198
      %p200 = scmp.lt.s32.totalorder %s199, 255
      %s201 = scalar_select %p200, %s199, 255
      %s202 = smul.addr %s201, 4
      %s203 = scalar_lea.vmem %s4, %s202
      %s204 = smul.u32 64, %s20
      %p205 = scmp.lt.s32.totalorder %s204, 255
      %s206 = scalar_select %p205, %s204, 255
      %s207 = smul.addr %s206, 4
      %s208 = scalar_lea.vmem %s0, %s207
      %s209 = smul.u32 64, %s20
      %s210 = smul.u32 %s19, %s20
      %s211 = smul.u32 64, %s210
      %p212 = scmp.lt.s32.totalorder %s211, 255
      %s213 = scalar_select %p212, %s211, 255
      %s214 = smul.addr %s213, 4
      %s215 = scalar_lea.vmem %s4, %s214
      %s216 = smul.u32 %s19, %s20
      %s217 = smul.u32 64, %s216
      %v218 = vld [vmem:[%s208] sm:$0xf]
      %v219 = vld [vmem:[%s208 + $0x4] sm:$0xf]
      %v220 = vld [vmem:[%s208 + $0x8] sm:$0xf]
      %v221 = vld [vmem:[%s208 + $0xc] sm:$0xf]
      %v222 = vld [vmem:[%s208 + $0x10] sm:$0xf]
      %v223 = vld [vmem:[%s208 + $0x14] sm:$0xf]
      %v224 = vld [vmem:[%s208 + $0x18] sm:$0xf]
      %v225 = vld [vmem:[%s208 + $0x1c] sm:$0xf]
      %v226 = vld [vmem:[%s208 + $0x20] sm:$0xf]
      %v227 = vld [vmem:[%s208 + $0x24] sm:$0xf]
      %v228 = vld [vmem:[%s208 + $0x28] sm:$0xf]
      %v229 = vld [vmem:[%s208 + $0x2c] sm:$0xf]
      %v230 = vld [vmem:[%s208 + $0x30] sm:$0xf]
      %v231 = vld [vmem:[%s208 + $0x34] sm:$0xf]
      %v232 = vld [vmem:[%s208 + $0x38] sm:$0xf]
      %v233 = vld [vmem:[%s208 + $0x3c] sm:$0xf]
      %v234 = vld [vmem:[%s208 + $0x40] sm:$0xf]
      %v235 = vld [vmem:[%s208 + $0x44] sm:$0xf]
      %v236 = vld [vmem:[%s208 + $0x48] sm:$0xf]
      %v237 = vld [vmem:[%s208 + $0x4c] sm:$0xf]
      %v238 = vld [vmem:[%s208 + $0x50] sm:$0xf]
      %v239 = vld [vmem:[%s208 + $0x54] sm:$0xf]
      %v240 = vld [vmem:[%s208 + $0x58] sm:$0xf]
      %v241 = vld [vmem:[%s208 + $0x5c] sm:$0xf]
      %v242 = vld [vmem:[%s208 + $0x60] sm:$0xf]
      %v243 = vld [vmem:[%s208 + $0x64] sm:$0xf]
      %v244 = vld [vmem:[%s208 + $0x68] sm:$0xf]
      %v245 = vld [vmem:[%s208 + $0x6c] sm:$0xf]
      %v246 = vld [vmem:[%s208 + $0x70] sm:$0xf]
      %v247 = vld [vmem:[%s208 + $0x74] sm:$0xf]
      %v248 = vld [vmem:[%s208 + $0x78] sm:$0xf]
      %v249 = vld [vmem:[%s208 + $0x7c] sm:$0xf]
      %v250 = vld [vmem:[%s208 + $0x80] sm:$0xf]
      %v251 = vld [vmem:[%s208 + $0x84] sm:$0xf]
      %v252 = vld [vmem:[%s208 + $0x88] sm:$0xf]
      %v253 = vld [vmem:[%s208 + $0x8c] sm:$0xf]
      %v254 = vld [vmem:[%s208 + $0x90] sm:$0xf]
      %v255 = vld [vmem:[%s208 + $0x94] sm:$0xf]
      %v256 = vld [vmem:[%s208 + $0x98] sm:$0xf]
      %v257 = vld [vmem:[%s208 + $0x9c] sm:$0xf]
      %v258 = vld [vmem:[%s208 + $0xa0] sm:$0xf]
      %v259 = vld [vmem:[%s208 + $0xa4] sm:$0xf]
      %v260 = vld [vmem:[%s208 + $0xa8] sm:$0xf]
      %v261 = vld [vmem:[%s208 + $0xac] sm:$0xf]
      %v262 = vld [vmem:[%s208 + $0xb0] sm:$0xf]
      %v263 = vld [vmem:[%s208 + $0xb4] sm:$0xf]
      %v264 = vld [vmem:[%s208 + $0xb8] sm:$0xf]
      %v265 = vld [vmem:[%s208 + $0xbc] sm:$0xf]
      %v266 = vld [vmem:[%s208 + $0xc0] sm:$0xf]
      %v267 = vld [vmem:[%s208 + $0xc4] sm:$0xf]
      %v268 = vld [vmem:[%s208 + $0xc8] sm:$0xf]
      %v269 = vld [vmem:[%s208 + $0xcc] sm:$0xf]
      %v270 = vld [vmem:[%s208 + $0xd0] sm:$0xf]
      %v271 = vld [vmem:[%s208 + $0xd4] sm:$0xf]
      %v272 = vld [vmem:[%s208 + $0xd8] sm:$0xf]
      %v273 = vld [vmem:[%s208 + $0xdc] sm:$0xf]
      %v274 = vld [vmem:[%s208 + $0xe0] sm:$0xf]
      %v275 = vld [vmem:[%s208 + $0xe4] sm:$0xf]
      %v276 = vld [vmem:[%s208 + $0xe8] sm:$0xf]
      %v277 = vld [vmem:[%s208 + $0xec] sm:$0xf]
      %v278 = vld [vmem:[%s208 + $0xf0] sm:$0xf]
      %v279 = vld [vmem:[%s208 + $0xf4] sm:$0xf]
      %v280 = vld [vmem:[%s208 + $0xf8] sm:$0xf]
      %v281 = vld [vmem:[%s208 + $0xfc] sm:$0xf]
      %v282 = vld [vmem:[%s1] sm:$0xf]
      %v283 = vld [vmem:[%s1 + $0x4] sm:$0xf]
      %v284 = vld [vmem:[%s1 + $0x8] sm:$0xf]
      %v285 = vld [vmem:[%s1 + $0xc] sm:$0xf]
      %v286 = vld [vmem:[%s1 + $0x10] sm:$0xf]
      %v287 = vld [vmem:[%s1 + $0x14] sm:$0xf]
      %v288 = vld [vmem:[%s1 + $0x18] sm:$0xf]
      %v289 = vld [vmem:[%s1 + $0x1c] sm:$0xf]
      %v290 = vld [vmem:[%s1 + $0x20] sm:$0xf]
      %v291 = vld [vmem:[%s1 + $0x24] sm:$0xf]
      %v292 = vld [vmem:[%s1 + $0x28] sm:$0xf]
      %v293 = vld [vmem:[%s1 + $0x2c] sm:$0xf]
      %v294 = vld [vmem:[%s1 + $0x30] sm:$0xf]
      %v295 = vld [vmem:[%s1 + $0x34] sm:$0xf]
      %v296 = vld [vmem:[%s1 + $0x38] sm:$0xf]
      %v297 = vld [vmem:[%s1 + $0x3c] sm:$0xf]
      %v362 = vunpack.c.l.b16 %v218
      %v363 = vunpack.c.l.b16 %v219
      %v364 = vunpack.c.l.b16 %v220
      %v365 = vunpack.c.l.b16 %v221
      %v366 = vunpack.c.l.b16 %v222
      %v367 = vunpack.c.l.b16 %v223
      %v368 = vunpack.c.l.b16 %v224
      %v369 = vunpack.c.l.b16 %v225
      %v370 = vunpack.c.l.b16 %v226
      %v371 = vunpack.c.l.b16 %v227
      %v372 = vunpack.c.l.b16 %v228
      %v373 = vunpack.c.l.b16 %v229
      %v374 = vunpack.c.l.b16 %v230
      %v375 = vunpack.c.l.b16 %v231
      %v376 = vunpack.c.l.b16 %v232
      %v377 = vunpack.c.l.b16 %v233
      %v378 = vunpack.c.l.b16 %v234
      %v379 = vunpack.c.l.b16 %v235
      %v380 = vunpack.c.l.b16 %v236
      %v381 = vunpack.c.l.b16 %v237
      %v382 = vunpack.c.l.b16 %v238
      %v383 = vunpack.c.l.b16 %v239
      %v384 = vunpack.c.l.b16 %v240
      %v385 = vunpack.c.l.b16 %v241
      %v386 = vunpack.c.l.b16 %v242
      %v387 = vunpack.c.l.b16 %v243
      %v388 = vunpack.c.l.b16 %v244
      %v389 = vunpack.c.l.b16 %v245
      %v390 = vunpack.c.l.b16 %v246
      %v391 = vunpack.c.l.b16 %v247
      %v392 = vunpack.c.l.b16 %v248
      %v393 = vunpack.c.l.b16 %v249
      %v394 = vunpack.c.l.b16 %v250
      %v395 = vunpack.c.l.b16 %v251
      %v396 = vunpack.c.l.b16 %v252
      %v397 = vunpack.c.l.b16 %v253
      %v398 = vunpack.c.l.b16 %v254
      %v399 = vunpack.c.l.b16 %v255
      %v400 = vunpack.c.l.b16 %v256
      %v401 = vunpack.c.l.b16 %v257
      %v402 = vunpack.c.l.b16 %v258
      %v403 = vunpack.c.l.b16 %v259
      %v404 = vunpack.c.l.b16 %v260
      %v405 = vunpack.c.l.b16 %v261
      %v406 = vunpack.c.l.b16 %v262
      %v407 = vunpack.c.l.b16 %v263
      %v408 = vunpack.c.l.b16 %v264
      %v409 = vunpack.c.l.b16 %v265
      %v410 = vunpack.c.l.b16 %v266
      %v411 = vunpack.c.l.b16 %v267
      %v412 = vunpack.c.l.b16 %v268
      %v413 = vunpack.c.l.b16 %v269
      %v414 = vunpack.c.l.b16 %v270
      %v415 = vunpack.c.l.b16 %v271
      %v416 = vunpack.c.l.b16 %v272
      %v417 = vunpack.c.l.b16 %v273
      %v418 = vunpack.c.l.b16 %v274
      %v419 = vunpack.c.l.b16 %v275
      %v420 = vunpack.c.l.b16 %v276
      %v421 = vunpack.c.l.b16 %v277
      %v422 = vunpack.c.l.b16 %v278
      %v423 = vunpack.c.l.b16 %v279
      %v424 = vunpack.c.l.b16 %v280
      %v425 = vunpack.c.l.b16 %v281
      %v426 = vpack.c.b16 %v363, %v362
      %v427 = vpack.c.b16 %v365, %v364
      %v428 = vpack.c.b16 %v367, %v366
      %v429 = vpack.c.b16 %v369, %v368
      %v430 = vpack.c.b16 %v371, %v370
      %v431 = vpack.c.b16 %v373, %v372
      %v432 = vpack.c.b16 %v375, %v374
      %v433 = vpack.c.b16 %v377, %v376
      %v434 = vpack.c.b16 %v379, %v378
      %v435 = vpack.c.b16 %v381, %v380
      %v436 = vpack.c.b16 %v383, %v382
      %v437 = vpack.c.b16 %v385, %v384
      %v438 = vpack.c.b16 %v387, %v386
      %v439 = vpack.c.b16 %v389, %v388
      %v440 = vpack.c.b16 %v391, %v390
      %v441 = vpack.c.b16 %v393, %v392
      %v442 = vpack.c.b16 %v395, %v394
      %v443 = vpack.c.b16 %v397, %v396
      %v444 = vpack.c.b16 %v399, %v398
      %v445 = vpack.c.b16 %v401, %v400
      %v446 = vpack.c.b16 %v403, %v402
      %v447 = vpack.c.b16 %v405, %v404
      %v448 = vpack.c.b16 %v407, %v406
      %v449 = vpack.c.b16 %v409, %v408
      %v450 = vpack.c.b16 %v411, %v410
      %v451 = vpack.c.b16 %v413, %v412
      %v452 = vpack.c.b16 %v415, %v414
      %v453 = vpack.c.b16 %v417, %v416
      %v454 = vpack.c.b16 %v419, %v418
      %v455 = vpack.c.b16 %v421, %v420
      %v456 = vpack.c.b16 %v423, %v422
      %v457 = vpack.c.b16 %v425, %v424
      %v506 = vunpack.c.l.b16 %v282
      %v507 = vunpack.c.l.b16 %v283
      %v508 = vunpack.c.l.b16 %v284
      %v509 = vunpack.c.l.b16 %v285
      %v510 = vunpack.c.l.b16 %v286
      %v511 = vunpack.c.l.b16 %v287
      %v512 = vunpack.c.l.b16 %v288
      %v513 = vunpack.c.l.b16 %v289
      %v514 = vunpack.c.l.b16 %v290
      %v515 = vunpack.c.l.b16 %v291
      %v516 = vunpack.c.l.b16 %v292
      %v517 = vunpack.c.l.b16 %v293
      %v518 = vunpack.c.l.b16 %v294
      %v519 = vunpack.c.l.b16 %v295
      %v520 = vunpack.c.l.b16 %v296
      %v521 = vunpack.c.l.b16 %v297
      %v522 = vpack.c.b16 %v507, %v506
      %v523 = vpack.c.b16 %v509, %v508
      %v524 = vpack.c.b16 %v511, %v510
      %v525 = vpack.c.b16 %v513, %v512
      %v526 = vpack.c.b16 %v515, %v514
      %v527 = vpack.c.b16 %v517, %v516
      %v528 = vpack.c.b16 %v519, %v518
      %v529 = vpack.c.b16 %v521, %v520
      %538 = vmatpush.bf16.msra.mxu0 %v529
      %539 = vmatpush.bf16.msra.mxu0 %v528
      %540 = vmatpush.bf16.msra.mxu0 %v527
      %541 = vmatpush.bf16.msra.mxu0 %v526
      %542 = vmatpush.bf16.msra.mxu0 %v525
      %543 = vmatpush.bf16.msra.mxu0 %v524
      %544 = vmatpush.bf16.msra.mxu0 %v523
      %545 = vmatpush.bf16.msra.mxu0 %v522
      %546 = vmatmul.bf16.gmra.mxu0 %v426
      %v547 = vpop.f32.mrf.mxu0
      %v548 = vadd.f32 0.0, %v547
      %v549 = vpop.f32.mrf.mxu0
      %v550 = vadd.f32 0.0, %v549
      %551 = vmatmul.bf16.gmra.mxu0 %v427
      %v552 = vpop.f32.mrf.mxu0
      %v553 = vadd.f32 0.0, %v552
      %v554 = vpop.f32.mrf.mxu0
      %v555 = vadd.f32 0.0, %v554
      %556 = vmatmul.bf16.gmra.mxu0 %v428
      %v557 = vpop.f32.mrf.mxu0
      %v558 = vadd.f32 0.0, %v557
      %v559 = vpop.f32.mrf.mxu0
      %v560 = vadd.f32 0.0, %v559
      %561 = vmatmul.bf16.gmra.mxu0 %v429
      %v562 = vpop.f32.mrf.mxu0
      %v563 = vadd.f32 0.0, %v562
      %v564 = vpop.f32.mrf.mxu0
      %v565 = vadd.f32 0.0, %v564
      %566 = vmatmul.bf16.gmra.mxu0 %v430
      %v567 = vpop.f32.mrf.mxu0
      %v568 = vadd.f32 0.0, %v567
      %v569 = vpop.f32.mrf.mxu0
      %v570 = vadd.f32 0.0, %v569
      %571 = vmatmul.bf16.gmra.mxu0 %v431
      %v572 = vpop.f32.mrf.mxu0
      %v573 = vadd.f32 0.0, %v572
      %v574 = vpop.f32.mrf.mxu0
      %v575 = vadd.f32 0.0, %v574
      %576 = vmatmul.bf16.gmra.mxu0 %v432
      %v577 = vpop.f32.mrf.mxu0
      %v578 = vadd.f32 0.0, %v577
      %v579 = vpop.f32.mrf.mxu0
      %v580 = vadd.f32 0.0, %v579
      %581 = vmatmul.bf16.gmra.mxu0 %v433
      %v582 = vpop.f32.mrf.mxu0
      %v583 = vadd.f32 0.0, %v582
      %v584 = vpop.f32.mrf.mxu0
      %v585 = vadd.f32 0.0, %v584
      %586 = vmatmul.bf16.gmra.mxu0 %v434
      %v587 = vpop.f32.mrf.mxu0
      %v588 = vadd.f32 0.0, %v587
      %v589 = vpop.f32.mrf.mxu0
      %v590 = vadd.f32 0.0, %v589
      %591 = vmatmul.bf16.gmra.mxu0 %v435
      %v592 = vpop.f32.mrf.mxu0
      %v593 = vadd.f32 0.0, %v592
      %v594 = vpop.f32.mrf.mxu0
      %v595 = vadd.f32 0.0, %v594
      %596 = vmatmul.bf16.gmra.mxu0 %v436
      %v597 = vpop.f32.mrf.mxu0
      %v598 = vadd.f32 0.0, %v597
      %v599 = vpop.f32.mrf.mxu0
      %v600 = vadd.f32 0.0, %v599
      %601 = vmatmul.bf16.gmra.mxu0 %v437
      %v602 = vpop.f32.mrf.mxu0
      %v603 = vadd.f32 0.0, %v602
      %v604 = vpop.f32.mrf.mxu0
      %v605 = vadd.f32 0.0, %v604
      %606 = vmatmul.bf16.gmra.mxu0 %v438
      %v607 = vpop.f32.mrf.mxu0
      %v608 = vadd.f32 0.0, %v607
      %v609 = vpop.f32.mrf.mxu0
      %v610 = vadd.f32 0.0, %v609
      %611 = vmatmul.bf16.gmra.mxu0 %v439
      %v612 = vpop.f32.mrf.mxu0
      %v613 = vadd.f32 0.0, %v612
      %v614 = vpop.f32.mrf.mxu0
      %v615 = vadd.f32 0.0, %v614
      %616 = vmatmul.bf16.gmra.mxu0 %v440
      %v617 = vpop.f32.mrf.mxu0
      %v618 = vadd.f32 0.0, %v617
      %v619 = vpop.f32.mrf.mxu0
      %v620 = vadd.f32 0.0, %v619
      %621 = vmatmul.bf16.gmra.mxu0 %v441
      %v622 = vpop.f32.mrf.mxu0
      %v623 = vadd.f32 0.0, %v622
      %v624 = vpop.f32.mrf.mxu0
      %v625 = vadd.f32 0.0, %v624
      %626 = vmatmul.bf16.gmra.mxu0 %v442
      %v627 = vpop.f32.mrf.mxu0
      %v628 = vadd.f32 0.0, %v627
      %v629 = vpop.f32.mrf.mxu0
      %v630 = vadd.f32 0.0, %v629
      %631 = vmatmul.bf16.gmra.mxu0 %v443
      %v632 = vpop.f32.mrf.mxu0
      %v633 = vadd.f32 0.0, %v632
      %v634 = vpop.f32.mrf.mxu0
      %v635 = vadd.f32 0.0, %v634
      %636 = vmatmul.bf16.gmra.mxu0 %v444
      %v637 = vpop.f32.mrf.mxu0
      %v638 = vadd.f32 0.0, %v637
      %v639 = vpop.f32.mrf.mxu0
      %v640 = vadd.f32 0.0, %v639
      %641 = vmatmul.bf16.gmra.mxu0 %v445
      %v642 = vpop.f32.mrf.mxu0
      %v643 = vadd.f32 0.0, %v642
      %v644 = vpop.f32.mrf.mxu0
      %v645 = vadd.f32 0.0, %v644
      %646 = vmatmul.bf16.gmra.mxu0 %v446
      %v647 = vpop.f32.mrf.mxu0
      %v648 = vadd.f32 0.0, %v647
      %v649 = vpop.f32.mrf.mxu0
      %v650 = vadd.f32 0.0, %v649
      %651 = vmatmul.bf16.gmra.mxu0 %v447
      %v652 = vpop.f32.mrf.mxu0
      %v653 = vadd.f32 0.0, %v652
      %v654 = vpop.f32.mrf.mxu0
      %v655 = vadd.f32 0.0, %v654
      %656 = vmatmul.bf16.gmra.mxu0 %v448
      %v657 = vpop.f32.mrf.mxu0
      %v658 = vadd.f32 0.0, %v657
      %v659 = vpop.f32.mrf.mxu0
      %v660 = vadd.f32 0.0, %v659
      %661 = vmatmul.bf16.gmra.mxu0 %v449
      %v662 = vpop.f32.mrf.mxu0
      %v663 = vadd.f32 0.0, %v662
      %v664 = vpop.f32.mrf.mxu0
      %v665 = vadd.f32 0.0, %v664
      %666 = vmatmul.bf16.gmra.mxu0 %v450
      %v667 = vpop.f32.mrf.mxu0
      %v668 = vadd.f32 0.0, %v667
      %v669 = vpop.f32.mrf.mxu0
      %v670 = vadd.f32 0.0, %v669
      %671 = vmatmul.bf16.gmra.mxu0 %v451
      %v672 = vpop.f32.mrf.mxu0
      %v673 = vadd.f32 0.0, %v672
      %v674 = vpop.f32.mrf.mxu0
      %v675 = vadd.f32 0.0, %v674
      %676 = vmatmul.bf16.gmra.mxu0 %v452
      %v677 = vpop.f32.mrf.mxu0
      %v678 = vadd.f32 0.0, %v677
      %v679 = vpop.f32.mrf.mxu0
      %v680 = vadd.f32 0.0, %v679
      %681 = vmatmul.bf16.gmra.mxu0 %v453
      %v682 = vpop.f32.mrf.mxu0
      %v683 = vadd.f32 0.0, %v682
      %v684 = vpop.f32.mrf.mxu0
      %v685 = vadd.f32 0.0, %v684
      %686 = vmatmul.bf16.gmra.mxu0 %v454
      %v687 = vpop.f32.mrf.mxu0
      %v688 = vadd.f32 0.0, %v687
      %v689 = vpop.f32.mrf.mxu0
      %v690 = vadd.f32 0.0, %v689
      %691 = vmatmul.bf16.gmra.mxu0 %v455
      %v692 = vpop.f32.mrf.mxu0
      %v693 = vadd.f32 0.0, %v692
      %v694 = vpop.f32.mrf.mxu0
      %v695 = vadd.f32 0.0, %v694
      %696 = vmatmul.bf16.gmra.mxu0 %v456
      %v697 = vpop.f32.mrf.mxu0
      %v698 = vadd.f32 0.0, %v697
      %v699 = vpop.f32.mrf.mxu0
      %v700 = vadd.f32 0.0, %v699
      %701 = vmatmul.bf16.gmra.mxu0 %v457
      %v702 = vpop.f32.mrf.mxu0
      %v703 = vadd.f32 0.0, %v702
      %v704 = vpop.f32.mrf.mxu0
      %v705 = vadd.f32 0.0, %v704
      %706 = vdwg.mxu0
      %p707 = scmp.eq.s32.totalorder %s19, 0
      %p708 = scmp.eq.s32.totalorder %s20, 0
      %p709 = pnand %p707, %p708
      %p710 = pneg %p709
      // Predicated region
      $region37: #{dcgan_discriminator.5} parent=35 // pred_check
        _
      $region38: #{dcgan_discriminator.5} parent=35 // pred_check_branch
        %712 = sbr.rel (%p709) target = $region40
      $region39: #{dcgan_discriminator.5} parent=35 // pred_region
        %713 = vst [vmem:[#allocation2] sm:$0x1] 0.0
        %714 = vst [vmem:[#allocation3] sm:$0x1] 0.0
      $region40: #{dcgan_discriminator.5} parent=35 // pred_fallthru
        _
      // Predicated region
      $region41: #{dcgan_discriminator.5} parent=35 // pred_check
        %p715 = pneg %p707
      $region42: #{dcgan_discriminator.5} parent=35 // pred_check_branch
        %717 = sbr.rel (%p715) target = $region44
      $region43: #{dcgan_discriminator.5} parent=35 // pred_region
        %v718 = vld [vmem:[#allocation2] sm:$0x1]
        %v719 = vadd.f32 %v548, %v550
        %v720 = vadd.f32 %v719, %v553
        %v721 = vadd.f32 %v720, %v555
        %v722 = vadd.f32 %v721, %v558
        %v723 = vadd.f32 %v722, %v560
        %v724 = vadd.f32 %v723, %v563
        %v725 = vadd.f32 %v724, %v565
        %v726 = vadd.f32 %v725, %v568
        %v727 = vadd.f32 %v726, %v570
        %v728 = vadd.f32 %v727, %v573
        %v729 = vadd.f32 %v728, %v575
        %v730 = vadd.f32 %v729, %v578
        %v731 = vadd.f32 %v730, %v580
        %v732 = vadd.f32 %v731, %v583
        %v733 = vadd.f32 %v732, %v585
        %v734 = vadd.f32 %v733, %v588
        %v735 = vadd.f32 %v734, %v590
        %v736 = vadd.f32 %v735, %v593
        %v737 = vadd.f32 %v736, %v595
        %v738 = vadd.f32 %v737, %v598
        %v739 = vadd.f32 %v738, %v600
        %v740 = vadd.f32 %v739, %v603
        %v741 = vadd.f32 %v740, %v605
        %v742 = vadd.f32 %v741, %v608
        %v743 = vadd.f32 %v742, %v610
        %v744 = vadd.f32 %v743, %v613
        %v745 = vadd.f32 %v744, %v615
        %v746 = vadd.f32 %v745, %v618
        %v747 = vadd.f32 %v746, %v620
        %v748 = vadd.f32 %v747, %v623
        %v749 = vadd.f32 %v748, %v625
        %v750 = vadd.f32 %v749, %v628
        %v751 = vadd.f32 %v750, %v630
        %v752 = vadd.f32 %v751, %v633
        %v753 = vadd.f32 %v752, %v635
        %v754 = vadd.f32 %v753, %v638
        %v755 = vadd.f32 %v754, %v640
        %v756 = vadd.f32 %v755, %v643
        %v757 = vadd.f32 %v756, %v645
        %v758 = vadd.f32 %v757, %v648
        %v759 = vadd.f32 %v758, %v650
        %v760 = vadd.f32 %v759, %v653
        %v761 = vadd.f32 %v760, %v655
        %v762 = vadd.f32 %v761, %v658
        %v763 = vadd.f32 %v762, %v660
        %v764 = vadd.f32 %v763, %v663
        %v765 = vadd.f32 %v764, %v665
        %v766 = vadd.f32 %v765, %v668
        %v767 = vadd.f32 %v766, %v670
        %v768 = vadd.f32 %v767, %v673
        %v769 = vadd.f32 %v768, %v675
        %v770 = vadd.f32 %v769, %v678
        %v771 = vadd.f32 %v770, %v680
        %v772 = vadd.f32 %v771, %v683
        %v773 = vadd.f32 %v772, %v685
        %v774 = vadd.f32 %v773, %v688
        %v775 = vadd.f32 %v774, %v690
        %v776 = vadd.f32 %v775, %v693
        %v777 = vadd.f32 %v776, %v695
        %v778 = vadd.f32 %v777, %v698
        %v779 = vadd.f32 %v778, %v700
        %v780 = vadd.f32 %v779, %v703
        %v781 = vadd.f32 %v780, %v705
        %v782 = vrot.slane %v781, 4
        %v783 = vadd.f32 %v781, %v782
        %v784 = vrot.slane %v783, 2
        %v785 = vadd.f32 %v783, %v784
        %v786 = vrot.slane %v785, 1
        %v787 = vadd.f32 %v785, %v786
        %v788 = vadd.f32 %v718, %v787
        %789 = vst [vmem:[#allocation2] sm:$0x1] %v788
        %v790 = vld [vmem:[#allocation3] sm:$0x1]
        %v791 = vmul.f32 %v548, %v548
        %v792 = vmul.f32 %v550, %v550
        %v793 = vmul.f32 %v553, %v553
        %v794 = vmul.f32 %v555, %v555
        %v795 = vmul.f32 %v558, %v558
        %v796 = vmul.f32 %v560, %v560
        %v797 = vmul.f32 %v563, %v563
        %v798 = vmul.f32 %v565, %v565
        %v799 = vmul.f32 %v568, %v568
        %v800 = vmul.f32 %v570, %v570
        %v801 = vmul.f32 %v573, %v573
        %v802 = vmul.f32 %v575, %v575
        %v803 = vmul.f32 %v578, %v578
        %v804 = vmul.f32 %v580, %v580
        %v805 = vmul.f32 %v583, %v583
        %v806 = vmul.f32 %v585, %v585
        %v807 = vmul.f32 %v588, %v588
        %v808 = vmul.f32 %v590, %v590
        %v809 = vmul.f32 %v593, %v593
        %v810 = vmul.f32 %v595, %v595
        %v811 = vmul.f32 %v598, %v598
        %v812 = vmul.f32 %v600, %v600
        %v813 = vmul.f32 %v603, %v603
        %v814 = vmul.f32 %v605, %v605
        %v815 = vmul.f32 %v608, %v608
        %v816 = vmul.f32 %v610, %v610
        %v817 = vmul.f32 %v613, %v613
        %v818 = vmul.f32 %v615, %v615
        %v819 = vmul.f32 %v618, %v618
        %v820 = vmul.f32 %v620, %v620
        %v821 = vmul.f32 %v623, %v623
        %v822 = vmul.f32 %v625, %v625
        %v823 = vmul.f32 %v628, %v628
        %v824 = vmul.f32 %v630, %v630
        %v825 = vmul.f32 %v633, %v633
        %v826 = vmul.f32 %v635, %v635
        %v827 = vmul.f32 %v638, %v638
        %v828 = vmul.f32 %v640, %v640
        %v829 = vmul.f32 %v643, %v643
        %v830 = vmul.f32 %v645, %v645
        %v831 = vmul.f32 %v648, %v648
        %v832 = vmul.f32 %v650, %v650
        %v833 = vmul.f32 %v653, %v653
        %v834 = vmul.f32 %v655, %v655
        %v835 = vmul.f32 %v658, %v658
        %v836 = vmul.f32 %v660, %v660
        %v837 = vmul.f32 %v663, %v663
        %v838 = vmul.f32 %v665, %v665
        %v839 = vmul.f32 %v668, %v668
        %v840 = vmul.f32 %v670, %v670
        %v841 = vmul.f32 %v673, %v673
        %v842 = vmul.f32 %v675, %v675
        %v843 = vmul.f32 %v678, %v678
        %v844 = vmul.f32 %v680, %v680
        %v845 = vmul.f32 %v683, %v683
        %v846 = vmul.f32 %v685, %v685
        %v847 = vmul.f32 %v688, %v688
        %v848 = vmul.f32 %v690, %v690
        %v849 = vmul.f32 %v693, %v693
        %v850 = vmul.f32 %v695, %v695
        %v851 = vmul.f32 %v698, %v698
        %v852 = vmul.f32 %v700, %v700
        %v853 = vmul.f32 %v703, %v703
        %v854 = vmul.f32 %v705, %v705
        %v855 = vadd.f32 %v791, %v792
        %v856 = vadd.f32 %v855, %v793
        %v857 = vadd.f32 %v856, %v794
        %v858 = vadd.f32 %v857, %v795
        %v859 = vadd.f32 %v858, %v796
        %v860 = vadd.f32 %v859, %v797
        %v861 = vadd.f32 %v860, %v798
        %v862 = vadd.f32 %v861, %v799
        %v863 = vadd.f32 %v862, %v800
        %v864 = vadd.f32 %v863, %v801
        %v865 = vadd.f32 %v864, %v802
        %v866 = vadd.f32 %v865, %v803
        %v867 = vadd.f32 %v866, %v804
        %v868 = vadd.f32 %v867, %v805
        %v869 = vadd.f32 %v868, %v806
        %v870 = vadd.f32 %v869, %v807
        %v871 = vadd.f32 %v870, %v808
        %v872 = vadd.f32 %v871, %v809
        %v873 = vadd.f32 %v872, %v810
        %v874 = vadd.f32 %v873, %v811
        %v875 = vadd.f32 %v874, %v812
        %v876 = vadd.f32 %v875, %v813
        %v877 = vadd.f32 %v876, %v814
        %v878 = vadd.f32 %v877, %v815
        %v879 = vadd.f32 %v878, %v816
        %v880 = vadd.f32 %v879, %v817
        %v881 = vadd.f32 %v880, %v818
        %v882 = vadd.f32 %v881, %v819
        %v883 = vadd.f32 %v882, %v820
        %v884 = vadd.f32 %v883, %v821
        %v885 = vadd.f32 %v884, %v822
        %v886 = vadd.f32 %v885, %v823
        %v887 = vadd.f32 %v886, %v824
        %v888 = vadd.f32 %v887, %v825
        %v889 = vadd.f32 %v888, %v826
        %v890 = vadd.f32 %v889, %v827
        %v891 = vadd.f32 %v890, %v828
        %v892 = vadd.f32 %v891, %v829
        %v893 = vadd.f32 %v892, %v830
        %v894 = vadd.f32 %v893, %v831
        %v895 = vadd.f32 %v894, %v832
        %v896 = vadd.f32 %v895, %v833
        %v897 = vadd.f32 %v896, %v834
        %v898 = vadd.f32 %v897, %v835
        %v899 = vadd.f32 %v898, %v836
        %v900 = vadd.f32 %v899, %v837
        %v901 = vadd.f32 %v900, %v838
        %v902 = vadd.f32 %v901, %v839
        %v903 = vadd.f32 %v902, %v840
        %v904 = vadd.f32 %v903, %v841
        %v905 = vadd.f32 %v904, %v842
        %v906 = vadd.f32 %v905, %v843
        %v907 = vadd.f32 %v906, %v844
        %v908 = vadd.f32 %v907, %v845
        %v909 = vadd.f32 %v908, %v846
        %v910 = vadd.f32 %v909, %v847
        %v911 = vadd.f32 %v910, %v848
        %v912 = vadd.f32 %v911, %v849
        %v913 = vadd.f32 %v912, %v850
        %v914 = vadd.f32 %v913, %v851
        %v915 = vadd.f32 %v914, %v852
        %v916 = vadd.f32 %v915, %v853
        %v917 = vadd.f32 %v916, %v854
        %v918 = vrot.slane %v917, 4
        %v919 = vadd.f32 %v917, %v918
        %v920 = vrot.slane %v919, 2
        %v921 = vadd.f32 %v919, %v920
        %v922 = vrot.slane %v921, 1
        %v923 = vadd.f32 %v921, %v922
        %v924 = vadd.f32 %v790, %v923
        %925 = vst [vmem:[#allocation3] sm:$0x1] %v924
      $region44: #{dcgan_discriminator.5} parent=35 // pred_fallthru
        _
      %p926 = scmp.eq.s32.totalorder %s19, 1
      %p927 = pnand %p926, %p708
      %p928 = pneg %p927
      // Predicated region
      $region45: #{dcgan_discriminator.5} parent=35 // pred_check
        _
      $region46: #{dcgan_discriminator.5} parent=35 // pred_check_branch
        %930 = sbr.rel (%p927) target = $region48
      $region47: #{dcgan_discriminator.5} parent=35 // pred_region
        %v931 = vld [vmem:[#allocation2] sm:$0x1]
        %v932 = vmul.f32 %v931, 0.00048828125
        %v933 = vld [vmem:[#allocation3] sm:$0x1]
        %v934 = vmul.f32 %v933, 0.00048828125
        %v935 = vmul.f32 %v932, %v932
        %v936 = vsub.f32 %v934, %v935
        %v937 = vmax.f32 %v936, 0.0
        %v938 = vld [vmem:[%s2] sm:$0x1]
        %v939 = vadd.f32 %v937, 1e-05
        %v940 = vrsqrt.pop %v939
        %v941 = vmul.f32 %v940, %v939
        %v942 = vmul.f32 %v941, %v940
        %v943 = vmul.f32 0.5, %v942
        %v944 = vsub.f32 1.5, %v943
        %v945 = vmul.f32 %v940, %v944
        %vm946 = vweird.f32 %v939
        %vm947 = vweird.f32 %v940
        %vm948 = vmor %vm946, %vm947
        %v949 = vsel %vm948, %v940, %v945
        %v950 = vmul.f32 %v938, %v949
        %951 = vst [vmem:[#allocation4] sm:$0x1] %v950
        %v952 = vld [vmem:[%s3] sm:$0x1]
        %v953 = vmul.f32 %v932, %v950
        %v954 = vsub.f32 %v952, %v953
        %955 = vst [vmem:[#allocation5] sm:$0x1] %v954
      $region48: #{dcgan_discriminator.5} parent=35 // pred_fallthru
        _
      // Predicated region
      $region49: #{dcgan_discriminator.5} parent=35 // pred_check
        %p956 = pneg %p926
      $region50: #{dcgan_discriminator.5} parent=35 // pred_check_branch
        %958 = sbr.rel (%p956) target = $region52
      $region51: #{dcgan_discriminator.5} parent=35 // pred_region
        %v959 = vld [vmem:[#allocation4] sm:$0x1]
        %v961 = vperm.slane %v959, 0
        %v963 = vmul.f32 %v548, %v961
        %v964 = vmul.f32 %v550, %v961
        %v965 = vmul.f32 %v553, %v961
        %v966 = vmul.f32 %v555, %v961
        %v967 = vmul.f32 %v558, %v961
        %v968 = vmul.f32 %v560, %v961
        %v969 = vmul.f32 %v563, %v961
        %v970 = vmul.f32 %v565, %v961
        %v971 = vmul.f32 %v568, %v961
        %v972 = vmul.f32 %v570, %v961
        %v973 = vmul.f32 %v573, %v961
        %v974 = vmul.f32 %v575, %v961
        %v975 = vmul.f32 %v578, %v961
        %v976 = vmul.f32 %v580, %v961
        %v977 = vmul.f32 %v583, %v961
        %v978 = vmul.f32 %v585, %v961
        %v979 = vmul.f32 %v588, %v961
        %v980 = vmul.f32 %v590, %v961
        %v981 = vmul.f32 %v593, %v961
        %v982 = vmul.f32 %v595, %v961
        %v983 = vmul.f32 %v598, %v961
        %v984 = vmul.f32 %v600, %v961
        %v985 = vmul.f32 %v603, %v961
        %v986 = vmul.f32 %v605, %v961
        %v987 = vmul.f32 %v608, %v961
        %v988 = vmul.f32 %v610, %v961
        %v989 = vmul.f32 %v613, %v961
        %v990 = vmul.f32 %v615, %v961
        %v991 = vmul.f32 %v618, %v961
        %v992 = vmul.f32 %v620, %v961
        %v993 = vmul.f32 %v623, %v961
        %v994 = vmul.f32 %v625, %v961
        %v995 = vmul.f32 %v628, %v961
        %v996 = vmul.f32 %v630, %v961
        %v997 = vmul.f32 %v633, %v961
        %v998 = vmul.f32 %v635, %v961
        %v999 = vmul.f32 %v638, %v961
        %v1000 = vmul.f32 %v640, %v961
        %v1001 = vmul.f32 %v643, %v961
        %v1002 = vmul.f32 %v645, %v961
        %v1003 = vmul.f32 %v648, %v961
        %v1004 = vmul.f32 %v650, %v961
        %v1005 = vmul.f32 %v653, %v961
        %v1006 = vmul.f32 %v655, %v961
        %v1007 = vmul.f32 %v658, %v961
        %v1008 = vmul.f32 %v660, %v961
        %v1009 = vmul.f32 %v663, %v961
        %v1010 = vmul.f32 %v665, %v961
        %v1011 = vmul.f32 %v668, %v961
        %v1012 = vmul.f32 %v670, %v961
        %v1013 = vmul.f32 %v673, %v961
        %v1014 = vmul.f32 %v675, %v961
        %v1015 = vmul.f32 %v678, %v961
        %v1016 = vmul.f32 %v680, %v961
        %v1017 = vmul.f32 %v683, %v961
        %v1018 = vmul.f32 %v685, %v961
        %v1019 = vmul.f32 %v688, %v961
        %v1020 = vmul.f32 %v690, %v961
        %v1021 = vmul.f32 %v693, %v961
        %v1022 = vmul.f32 %v695, %v961
        %v1023 = vmul.f32 %v698, %v961
        %v1024 = vmul.f32 %v700, %v961
        %v1025 = vmul.f32 %v703, %v961
        %v1026 = vmul.f32 %v705, %v961
        %v1027 = vld [vmem:[#allocation5] sm:$0x1]
        %v1029 = vperm.slane %v1027, 0
        %v1031 = vadd.f32 %v963, %v1029
        %v1032 = vadd.f32 %v964, %v1029
        %v1033 = vadd.f32 %v965, %v1029
        %v1034 = vadd.f32 %v966, %v1029
        %v1035 = vadd.f32 %v967, %v1029
        %v1036 = vadd.f32 %v968, %v1029
        %v1037 = vadd.f32 %v969, %v1029
        %v1038 = vadd.f32 %v970, %v1029
        %v1039 = vadd.f32 %v971, %v1029
        %v1040 = vadd.f32 %v972, %v1029
        %v1041 = vadd.f32 %v973, %v1029
        %v1042 = vadd.f32 %v974, %v1029
        %v1043 = vadd.f32 %v975, %v1029
        %v1044 = vadd.f32 %v976, %v1029
        %v1045 = vadd.f32 %v977, %v1029
        %v1046 = vadd.f32 %v978, %v1029
        %v1047 = vadd.f32 %v979, %v1029
        %v1048 = vadd.f32 %v980, %v1029
        %v1049 = vadd.f32 %v981, %v1029
        %v1050 = vadd.f32 %v982, %v1029
        %v1051 = vadd.f32 %v983, %v1029
        %v1052 = vadd.f32 %v984, %v1029
        %v1053 = vadd.f32 %v985, %v1029
        %v1054 = vadd.f32 %v986, %v1029
        %v1055 = vadd.f32 %v987, %v1029
        %v1056 = vadd.f32 %v988, %v1029
        %v1057 = vadd.f32 %v989, %v1029
        %v1058 = vadd.f32 %v990, %v1029
        %v1059 = vadd.f32 %v991, %v1029
        %v1060 = vadd.f32 %v992, %v1029
        %v1061 = vadd.f32 %v993, %v1029
        %v1062 = vadd.f32 %v994, %v1029
        %v1063 = vadd.f32 %v995, %v1029
        %v1064 = vadd.f32 %v996, %v1029
        %v1065 = vadd.f32 %v997, %v1029
        %v1066 = vadd.f32 %v998, %v1029
        %v1067 = vadd.f32 %v999, %v1029
        %v1068 = vadd.f32 %v1000, %v1029
        %v1069 = vadd.f32 %v1001, %v1029
        %v1070 = vadd.f32 %v1002, %v1029
        %v1071 = vadd.f32 %v1003, %v1029
        %v1072 = vadd.f32 %v1004, %v1029
        %v1073 = vadd.f32 %v1005, %v1029
        %v1074 = vadd.f32 %v1006, %v1029
        %v1075 = vadd.f32 %v1007, %v1029
        %v1076 = vadd.f32 %v1008, %v1029
        %v1077 = vadd.f32 %v1009, %v1029
        %v1078 = vadd.f32 %v1010, %v1029
        %v1079 = vadd.f32 %v1011, %v1029
        %v1080 = vadd.f32 %v1012, %v1029
        %v1081 = vadd.f32 %v1013, %v1029
        %v1082 = vadd.f32 %v1014, %v1029
        %v1083 = vadd.f32 %v1015, %v1029
        %v1084 = vadd.f32 %v1016, %v1029
        %v1085 = vadd.f32 %v1017, %v1029
        %v1086 = vadd.f32 %v1018, %v1029
        %v1087 = vadd.f32 %v1019, %v1029
        %v1088 = vadd.f32 %v1020, %v1029
        %v1089 = vadd.f32 %v1021, %v1029
        %v1090 = vadd.f32 %v1022, %v1029
        %v1091 = vadd.f32 %v1023, %v1029
        %v1092 = vadd.f32 %v1024, %v1029
        %v1093 = vadd.f32 %v1025, %v1029
        %v1094 = vadd.f32 %v1026, %v1029
        %vm1095 = vcmp.gt.f32.partialorder %v1031, 0.0
        %vm1096 = vcmp.gt.f32.partialorder %v1032, 0.0
        %vm1097 = vcmp.gt.f32.partialorder %v1033, 0.0
        %vm1098 = vcmp.gt.f32.partialorder %v1034, 0.0
        %vm1099 = vcmp.gt.f32.partialorder %v1035, 0.0
        %vm1100 = vcmp.gt.f32.partialorder %v1036, 0.0
        %vm1101 = vcmp.gt.f32.partialorder %v1037, 0.0
        %vm1102 = vcmp.gt.f32.partialorder %v1038, 0.0
        %vm1103 = vcmp.gt.f32.partialorder %v1039, 0.0
        %vm1104 = vcmp.gt.f32.partialorder %v1040, 0.0
        %vm1105 = vcmp.gt.f32.partialorder %v1041, 0.0
        %vm1106 = vcmp.gt.f32.partialorder %v1042, 0.0
        %vm1107 = vcmp.gt.f32.partialorder %v1043, 0.0
        %vm1108 = vcmp.gt.f32.partialorder %v1044, 0.0
        %vm1109 = vcmp.gt.f32.partialorder %v1045, 0.0
        %vm1110 = vcmp.gt.f32.partialorder %v1046, 0.0
        %vm1111 = vcmp.gt.f32.partialorder %v1047, 0.0
        %vm1112 = vcmp.gt.f32.partialorder %v1048, 0.0
        %vm1113 = vcmp.gt.f32.partialorder %v1049, 0.0
        %vm1114 = vcmp.gt.f32.partialorder %v1050, 0.0
        %vm1115 = vcmp.gt.f32.partialorder %v1051, 0.0
        %vm1116 = vcmp.gt.f32.partialorder %v1052, 0.0
        %vm1117 = vcmp.gt.f32.partialorder %v1053, 0.0
        %vm1118 = vcmp.gt.f32.partialorder %v1054, 0.0
        %vm1119 = vcmp.gt.f32.partialorder %v1055, 0.0
        %vm1120 = vcmp.gt.f32.partialorder %v1056, 0.0
        %vm1121 = vcmp.gt.f32.partialorder %v1057, 0.0
        %vm1122 = vcmp.gt.f32.partialorder %v1058, 0.0
        %vm1123 = vcmp.gt.f32.partialorder %v1059, 0.0
        %vm1124 = vcmp.gt.f32.partialorder %v1060, 0.0
        %vm1125 = vcmp.gt.f32.partialorder %v1061, 0.0
        %vm1126 = vcmp.gt.f32.partialorder %v1062, 0.0
        %vm1127 = vcmp.gt.f32.partialorder %v1063, 0.0
        %vm1128 = vcmp.gt.f32.partialorder %v1064, 0.0
        %vm1129 = vcmp.gt.f32.partialorder %v1065, 0.0
        %vm1130 = vcmp.gt.f32.partialorder %v1066, 0.0
        %vm1131 = vcmp.gt.f32.partialorder %v1067, 0.0
        %vm1132 = vcmp.gt.f32.partialorder %v1068, 0.0
        %vm1133 = vcmp.gt.f32.partialorder %v1069, 0.0
        %vm1134 = vcmp.gt.f32.partialorder %v1070, 0.0
        %vm1135 = vcmp.gt.f32.partialorder %v1071, 0.0
        %vm1136 = vcmp.gt.f32.partialorder %v1072, 0.0
        %vm1137 = vcmp.gt.f32.partialorder %v1073, 0.0
        %vm1138 = vcmp.gt.f32.partialorder %v1074, 0.0
        %vm1139 = vcmp.gt.f32.partialorder %v1075, 0.0
        %vm1140 = vcmp.gt.f32.partialorder %v1076, 0.0
        %vm1141 = vcmp.gt.f32.partialorder %v1077, 0.0
        %vm1142 = vcmp.gt.f32.partialorder %v1078, 0.0
        %vm1143 = vcmp.gt.f32.partialorder %v1079, 0.0
        %vm1144 = vcmp.gt.f32.partialorder %v1080, 0.0
        %vm1145 = vcmp.gt.f32.partialorder %v1081, 0.0
        %vm1146 = vcmp.gt.f32.partialorder %v1082, 0.0
        %vm1147 = vcmp.gt.f32.partialorder %v1083, 0.0
        %vm1148 = vcmp.gt.f32.partialorder %v1084, 0.0
        %vm1149 = vcmp.gt.f32.partialorder %v1085, 0.0
        %vm1150 = vcmp.gt.f32.partialorder %v1086, 0.0
        %vm1151 = vcmp.gt.f32.partialorder %v1087, 0.0
        %vm1152 = vcmp.gt.f32.partialorder %v1088, 0.0
        %vm1153 = vcmp.gt.f32.partialorder %v1089, 0.0
        %vm1154 = vcmp.gt.f32.partialorder %v1090, 0.0
        %vm1155 = vcmp.gt.f32.partialorder %v1091, 0.0
        %vm1156 = vcmp.gt.f32.partialorder %v1092, 0.0
        %vm1157 = vcmp.gt.f32.partialorder %v1093, 0.0
        %vm1158 = vcmp.gt.f32.partialorder %v1094, 0.0
        %v1159 = vmul.f32 %v1031, 0.2
        %v1160 = vmul.f32 %v1032, 0.2
        %v1161 = vmul.f32 %v1033, 0.2
        %v1162 = vmul.f32 %v1034, 0.2
        %v1163 = vmul.f32 %v1035, 0.2
        %v1164 = vmul.f32 %v1036, 0.2
        %v1165 = vmul.f32 %v1037, 0.2
        %v1166 = vmul.f32 %v1038, 0.2
        %v1167 = vmul.f32 %v1039, 0.2
        %v1168 = vmul.f32 %v1040, 0.2
        %v1169 = vmul.f32 %v1041, 0.2
        %v1170 = vmul.f32 %v1042, 0.2
        %v1171 = vmul.f32 %v1043, 0.2
        %v1172 = vmul.f32 %v1044, 0.2
        %v1173 = vmul.f32 %v1045, 0.2
        %v1174 = vmul.f32 %v1046, 0.2
        %v1175 = vmul.f32 %v1047, 0.2
        %v1176 = vmul.f32 %v1048, 0.2
        %v1177 = vmul.f32 %v1049, 0.2
        %v1178 = vmul.f32 %v1050, 0.2
        %v1179 = vmul.f32 %v1051, 0.2
        %v1180 = vmul.f32 %v1052, 0.2
        %v1181 = vmul.f32 %v1053, 0.2
        %v1182 = vmul.f32 %v1054, 0.2
        %v1183 = vmul.f32 %v1055, 0.2
        %v1184 = vmul.f32 %v1056, 0.2
        %v1185 = vmul.f32 %v1057, 0.2
        %v1186 = vmul.f32 %v1058, 0.2
        %v1187 = vmul.f32 %v1059, 0.2
        %v1188 = vmul.f32 %v1060, 0.2
        %v1189 = vmul.f32 %v1061, 0.2
        %v1190 = vmul.f32 %v1062, 0.2
        %v1191 = vmul.f32 %v1063, 0.2
        %v1192 = vmul.f32 %v1064, 0.2
        %v1193 = vmul.f32 %v1065, 0.2
        %v1194 = vmul.f32 %v1066, 0.2
        %v1195 = vmul.f32 %v1067, 0.2
        %v1196 = vmul.f32 %v1068, 0.2
        %v1197 = vmul.f32 %v1069, 0.2
        %v1198 = vmul.f32 %v1070, 0.2
        %v1199 = vmul.f32 %v1071, 0.2
        %v1200 = vmul.f32 %v1072, 0.2
        %v1201 = vmul.f32 %v1073, 0.2
        %v1202 = vmul.f32 %v1074, 0.2
        %v1203 = vmul.f32 %v1075, 0.2
        %v1204 = vmul.f32 %v1076, 0.2
        %v1205 = vmul.f32 %v1077, 0.2
        %v1206 = vmul.f32 %v1078, 0.2
        %v1207 = vmul.f32 %v1079, 0.2
        %v1208 = vmul.f32 %v1080, 0.2
        %v1209 = vmul.f32 %v1081, 0.2
        %v1210 = vmul.f32 %v1082, 0.2
        %v1211 = vmul.f32 %v1083, 0.2
        %v1212 = vmul.f32 %v1084, 0.2
        %v1213 = vmul.f32 %v1085, 0.2
        %v1214 = vmul.f32 %v1086, 0.2
        %v1215 = vmul.f32 %v1087, 0.2
        %v1216 = vmul.f32 %v1088, 0.2
        %v1217 = vmul.f32 %v1089, 0.2
        %v1218 = vmul.f32 %v1090, 0.2
        %v1219 = vmul.f32 %v1091, 0.2
        %v1220 = vmul.f32 %v1092, 0.2
        %v1221 = vmul.f32 %v1093, 0.2
        %v1222 = vmul.f32 %v1094, 0.2
        %v1223 = vsel %vm1095, %v1031, %v1159
        %v1224 = vsel %vm1096, %v1032, %v1160
        %v1225 = vsel %vm1097, %v1033, %v1161
        %v1226 = vsel %vm1098, %v1034, %v1162
        %v1227 = vsel %vm1099, %v1035, %v1163
        %v1228 = vsel %vm1100, %v1036, %v1164
        %v1229 = vsel %vm1101, %v1037, %v1165
        %v1230 = vsel %vm1102, %v1038, %v1166
        %v1231 = vsel %vm1103, %v1039, %v1167
        %v1232 = vsel %vm1104, %v1040, %v1168
        %v1233 = vsel %vm1105, %v1041, %v1169
        %v1234 = vsel %vm1106, %v1042, %v1170
        %v1235 = vsel %vm1107, %v1043, %v1171
        %v1236 = vsel %vm1108, %v1044, %v1172
        %v1237 = vsel %vm1109, %v1045, %v1173
        %v1238 = vsel %vm1110, %v1046, %v1174
        %v1239 = vsel %vm1111, %v1047, %v1175
        %v1240 = vsel %vm1112, %v1048, %v1176
        %v1241 = vsel %vm1113, %v1049, %v1177
        %v1242 = vsel %vm1114, %v1050, %v1178
        %v1243 = vsel %vm1115, %v1051, %v1179
        %v1244 = vsel %vm1116, %v1052, %v1180
        %v1245 = vsel %vm1117, %v1053, %v1181
        %v1246 = vsel %vm1118, %v1054, %v1182
        %v1247 = vsel %vm1119, %v1055, %v1183
        %v1248 = vsel %vm1120, %v1056, %v1184
        %v1249 = vsel %vm1121, %v1057, %v1185
        %v1250 = vsel %vm1122, %v1058, %v1186
        %v1251 = vsel %vm1123, %v1059, %v1187
        %v1252 = vsel %vm1124, %v1060, %v1188
        %v1253 = vsel %vm1125, %v1061, %v1189
        %v1254 = vsel %vm1126, %v1062, %v1190
        %v1255 = vsel %vm1127, %v1063, %v1191
        %v1256 = vsel %vm1128, %v1064, %v1192
        %v1257 = vsel %vm1129, %v1065, %v1193
        %v1258 = vsel %vm1130, %v1066, %v1194
        %v1259 = vsel %vm1131, %v1067, %v1195
        %v1260 = vsel %vm1132, %v1068, %v1196
        %v1261 = vsel %vm1133, %v1069, %v1197
        %v1262 = vsel %vm1134, %v1070, %v1198
        %v1263 = vsel %vm1135, %v1071, %v1199
        %v1264 = vsel %vm1136, %v1072, %v1200
        %v1265 = vsel %vm1137, %v1073, %v1201
        %v1266 = vsel %vm1138, %v1074, %v1202
        %v1267 = vsel %vm1139, %v1075, %v1203
        %v1268 = vsel %vm1140, %v1076, %v1204
        %v1269 = vsel %vm1141, %v1077, %v1205
        %v1270 = vsel %vm1142, %v1078, %v1206
        %v1271 = vsel %vm1143, %v1079, %v1207
        %v1272 = vsel %vm1144, %v1080, %v1208
        %v1273 = vsel %vm1145, %v1081, %v1209
        %v1274 = vsel %vm1146, %v1082, %v1210
        %v1275 = vsel %vm1147, %v1083, %v1211
        %v1276 = vsel %vm1148, %v1084, %v1212
        %v1277 = vsel %vm1149, %v1085, %v1213
        %v1278 = vsel %vm1150, %v1086, %v1214
        %v1279 = vsel %vm1151, %v1087, %v1215
        %v1280 = vsel %vm1152, %v1088, %v1216
        %v1281 = vsel %vm1153, %v1089, %v1217
        %v1282 = vsel %vm1154, %v1090, %v1218
        %v1283 = vsel %vm1155, %v1091, %v1219
        %v1284 = vsel %vm1156, %v1092, %v1220
        %v1285 = vsel %vm1157, %v1093, %v1221
        %v1286 = vsel %vm1158, %v1094, %v1222
        %v1287 = vpack.c.bf16 %v1223, %v1223
        %v1288 = vpack.c.bf16 %v1224, %v1224
        %v1289 = vpack.c.bf16 %v1225, %v1225
        %v1290 = vpack.c.bf16 %v1226, %v1226
        %v1291 = vpack.c.bf16 %v1227, %v1227
        %v1292 = vpack.c.bf16 %v1228, %v1228
        %v1293 = vpack.c.bf16 %v1229, %v1229
        %v1294 = vpack.c.bf16 %v1230, %v1230
        %v1295 = vpack.c.bf16 %v1231, %v1231
        %v1296 = vpack.c.bf16 %v1232, %v1232
        %v1297 = vpack.c.bf16 %v1233, %v1233
        %v1298 = vpack.c.bf16 %v1234, %v1234
        %v1299 = vpack.c.bf16 %v1235, %v1235
        %v1300 = vpack.c.bf16 %v1236, %v1236
        %v1301 = vpack.c.bf16 %v1237, %v1237
        %v1302 = vpack.c.bf16 %v1238, %v1238
        %v1303 = vpack.c.bf16 %v1239, %v1239
        %v1304 = vpack.c.bf16 %v1240, %v1240
        %v1305 = vpack.c.bf16 %v1241, %v1241
        %v1306 = vpack.c.bf16 %v1242, %v1242
        %v1307 = vpack.c.bf16 %v1243, %v1243
        %v1308 = vpack.c.bf16 %v1244, %v1244
        %v1309 = vpack.c.bf16 %v1245, %v1245
        %v1310 = vpack.c.bf16 %v1246, %v1246
        %v1311 = vpack.c.bf16 %v1247, %v1247
        %v1312 = vpack.c.bf16 %v1248, %v1248
        %v1313 = vpack.c.bf16 %v1249, %v1249
        %v1314 = vpack.c.bf16 %v1250, %v1250
        %v1315 = vpack.c.bf16 %v1251, %v1251
        %v1316 = vpack.c.bf16 %v1252, %v1252
        %v1317 = vpack.c.bf16 %v1253, %v1253
        %v1318 = vpack.c.bf16 %v1254, %v1254
        %v1319 = vpack.c.bf16 %v1255, %v1255
        %v1320 = vpack.c.bf16 %v1256, %v1256
        %v1321 = vpack.c.bf16 %v1257, %v1257
        %v1322 = vpack.c.bf16 %v1258, %v1258
        %v1323 = vpack.c.bf16 %v1259, %v1259
        %v1324 = vpack.c.bf16 %v1260, %v1260
        %v1325 = vpack.c.bf16 %v1261, %v1261
        %v1326 = vpack.c.bf16 %v1262, %v1262
        %v1327 = vpack.c.bf16 %v1263, %v1263
        %v1328 = vpack.c.bf16 %v1264, %v1264
        %v1329 = vpack.c.bf16 %v1265, %v1265
        %v1330 = vpack.c.bf16 %v1266, %v1266
        %v1331 = vpack.c.bf16 %v1267, %v1267
        %v1332 = vpack.c.bf16 %v1268, %v1268
        %v1333 = vpack.c.bf16 %v1269, %v1269
        %v1334 = vpack.c.bf16 %v1270, %v1270
        %v1335 = vpack.c.bf16 %v1271, %v1271
        %v1336 = vpack.c.bf16 %v1272, %v1272
        %v1337 = vpack.c.bf16 %v1273, %v1273
        %v1338 = vpack.c.bf16 %v1274, %v1274
        %v1339 = vpack.c.bf16 %v1275, %v1275
        %v1340 = vpack.c.bf16 %v1276, %v1276
        %v1341 = vpack.c.bf16 %v1277, %v1277
        %v1342 = vpack.c.bf16 %v1278, %v1278
        %v1343 = vpack.c.bf16 %v1279, %v1279
        %v1344 = vpack.c.bf16 %v1280, %v1280
        %v1345 = vpack.c.bf16 %v1281, %v1281
        %v1346 = vpack.c.bf16 %v1282, %v1282
        %v1347 = vpack.c.bf16 %v1283, %v1283
        %v1348 = vpack.c.bf16 %v1284, %v1284
        %v1349 = vpack.c.bf16 %v1285, %v1285
        %v1350 = vpack.c.bf16 %v1286, %v1286
        %1351 = vst [vmem:[%s215] sm:$0xf] %v1287
        %1352 = vst [vmem:[%s215 + $0x4] sm:$0xf] %v1288
        %1353 = vst [vmem:[%s215 + $0x8] sm:$0xf] %v1289
        %1354 = vst [vmem:[%s215 + $0xc] sm:$0xf] %v1290
        %1355 = vst [vmem:[%s215 + $0x10] sm:$0xf] %v1291
        %1356 = vst [vmem:[%s215 + $0x14] sm:$0xf] %v1292
        %1357 = vst [vmem:[%s215 + $0x18] sm:$0xf] %v1293
        %1358 = vst [vmem:[%s215 + $0x1c] sm:$0xf] %v1294
        %1359 = vst [vmem:[%s215 + $0x20] sm:$0xf] %v1295
        %1360 = vst [vmem:[%s215 + $0x24] sm:$0xf] %v1296
        %1361 = vst [vmem:[%s215 + $0x28] sm:$0xf] %v1297
        %1362 = vst [vmem:[%s215 + $0x2c] sm:$0xf] %v1298
        %1363 = vst [vmem:[%s215 + $0x30] sm:$0xf] %v1299
        %1364 = vst [vmem:[%s215 + $0x34] sm:$0xf] %v1300
        %1365 = vst [vmem:[%s215 + $0x38] sm:$0xf] %v1301
        %1366 = vst [vmem:[%s215 + $0x3c] sm:$0xf] %v1302
        %1367 = vst [vmem:[%s215 + $0x40] sm:$0xf] %v1303
        %1368 = vst [vmem:[%s215 + $0x44] sm:$0xf] %v1304
        %1369 = vst [vmem:[%s215 + $0x48] sm:$0xf] %v1305
        %1370 = vst [vmem:[%s215 + $0x4c] sm:$0xf] %v1306
        %1371 = vst [vmem:[%s215 + $0x50] sm:$0xf] %v1307
        %1372 = vst [vmem:[%s215 + $0x54] sm:$0xf] %v1308
        %1373 = vst [vmem:[%s215 + $0x58] sm:$0xf] %v1309
        %1374 = vst [vmem:[%s215 + $0x5c] sm:$0xf] %v1310
        %1375 = vst [vmem:[%s215 + $0x60] sm:$0xf] %v1311
        %1376 = vst [vmem:[%s215 + $0x64] sm:$0xf] %v1312
        %1377 = vst [vmem:[%s215 + $0x68] sm:$0xf] %v1313
        %1378 = vst [vmem:[%s215 + $0x6c] sm:$0xf] %v1314
        %1379 = vst [vmem:[%s215 + $0x70] sm:$0xf] %v1315
        %1380 = vst [vmem:[%s215 + $0x74] sm:$0xf] %v1316
        %1381 = vst [vmem:[%s215 + $0x78] sm:$0xf] %v1317
        %1382 = vst [vmem:[%s215 + $0x7c] sm:$0xf] %v1318
        %1383 = vst [vmem:[%s215 + $0x80] sm:$0xf] %v1319
        %1384 = vst [vmem:[%s215 + $0x84] sm:$0xf] %v1320
        %1385 = vst [vmem:[%s215 + $0x88] sm:$0xf] %v1321
        %1386 = vst [vmem:[%s215 + $0x8c] sm:$0xf] %v1322
        %1387 = vst [vmem:[%s215 + $0x90] sm:$0xf] %v1323
        %1388 = vst [vmem:[%s215 + $0x94] sm:$0xf] %v1324
        %1389 = vst [vmem:[%s215 + $0x98] sm:$0xf] %v1325
        %1390 = vst [vmem:[%s215 + $0x9c] sm:$0xf] %v1326
        %1391 = vst [vmem:[%s215 + $0xa0] sm:$0xf] %v1327
        %1392 = vst [vmem:[%s215 + $0xa4] sm:$0xf] %v1328
        %1393 = vst [vmem:[%s215 + $0xa8] sm:$0xf] %v1329
        %1394 = vst [vmem:[%s215 + $0xac] sm:$0xf] %v1330
        %1395 = vst [vmem:[%s215 + $0xb0] sm:$0xf] %v1331
        %1396 = vst [vmem:[%s215 + $0xb4] sm:$0xf] %v1332
        %1397 = vst [vmem:[%s215 + $0xb8] sm:$0xf] %v1333
        %1398 = vst [vmem:[%s215 + $0xbc] sm:$0xf] %v1334
        %1399 = vst [vmem:[%s215 + $0xc0] sm:$0xf] %v1335
        %1400 = vst [vmem:[%s215 + $0xc4] sm:$0xf] %v1336
        %1401 = vst [vmem:[%s215 + $0xc8] sm:$0xf] %v1337
        %1402 = vst [vmem:[%s215 + $0xcc] sm:$0xf] %v1338
        %1403 = vst [vmem:[%s215 + $0xd0] sm:$0xf] %v1339
        %1404 = vst [vmem:[%s215 + $0xd4] sm:$0xf] %v1340
        %1405 = vst [vmem:[%s215 + $0xd8] sm:$0xf] %v1341
        %1406 = vst [vmem:[%s215 + $0xdc] sm:$0xf] %v1342
        %1407 = vst [vmem:[%s215 + $0xe0] sm:$0xf] %v1343
        %1408 = vst [vmem:[%s215 + $0xe4] sm:$0xf] %v1344
        %1409 = vst [vmem:[%s215 + $0xe8] sm:$0xf] %v1345
        %1410 = vst [vmem:[%s215 + $0xec] sm:$0xf] %v1346
        %1411 = vst [vmem:[%s215 + $0xf0] sm:$0xf] %v1347
        %1412 = vst [vmem:[%s215 + $0xf4] sm:$0xf] %v1348
        %1413 = vst [vmem:[%s215 + $0xf8] sm:$0xf] %v1349
        %1414 = vst [vmem:[%s215 + $0xfc] sm:$0xf] %v1350
      $region52: #{dcgan_discriminator.5} parent=35 // pred_fallthru
        _
      %s1415 = smul.u32 %s19, %s20
      %s1416 = smul.u32 64, %s1415
      %p1417 = scmp.lt.s32.totalorder %s1416, 255
      %s1418 = scalar_select %p1417, %s1416, 255
      %s1419 = smul.addr %s1418, 4
      %s1420 = scalar_lea.vmem %s4, %s1419
      // Predicated region
      $region53: #{dcgan_discriminator.5} parent=35 // pred_check
        %p1421 = pneg %p136
      $region54: #{dcgan_discriminator.5} parent=35 // pred_check_branch
        %1423 = sbr.rel (%p1421) target = $region56
      $region55: #{dcgan_discriminator.5} parent=35 // pred_region
        %s1424 = smul.u32 %s19, %s20
        %s1425 = smul.u32 64, %s1424
      $region56: #{dcgan_discriminator.5} parent=35 // pred_fallthru
        _
    $region36: #{dcgan_discriminator.5} parent=5 // pred_fallthru
      _
    %p1426 = scmp.le.s32.totalorder 2, %s10
    // Predicated region
    $region57: #{dcgan_discriminator.5} parent=5 // pred_check
      %p1427 = pneg %p1426
    $region58: #{dcgan_discriminator.5} parent=5 // pred_check_branch
      %1429 = sbr.rel (%p1427) target = $region60
    $region59: #{dcgan_discriminator.5} parent=5 // pred_region
      %s1430 = ssub.s32 %s10, 2
      // Predicated region
      $region61: #{dcgan_discriminator.5} parent=59 // pred_check
        %p1431 = pneg %p142
      $region62: #{dcgan_discriminator.5} parent=59 // pred_check_branch
        %1433 = sbr.rel (%p1431) target = $region64
      $region63: #{dcgan_discriminator.5} parent=59 // pred_region
        %s1434 = smul.u32 %s21, %s22
        %s1435 = smul.u32 64, %s1434
        %p1436 = scmp.lt.s32.totalorder %s1435, 255
        %s1437 = scalar_select %p1436, %s1435, 255
        %s1438 = smul.addr %s1437, 4
        %s1439 = scalar_lea.vmem %s4, %s1438
      $region64: #{dcgan_discriminator.5} parent=59 // pred_fallthru
        _
    $region60: #{dcgan_discriminator.5} parent=5 // pred_fallthru
      _
  $region6: #{dcgan_discriminator.5} parent=0 // loop_footer
    %s14 = sadd.s32 1, %s10
  $region7: #{dcgan_discriminator.5} parent=0 // loop_footer_branch
    %9 = sbr.rel target = $region3
  $region8: #{dcgan_discriminator.5} parent=0 // loop_exit
    _

// kernel: dcgan_discriminator.6
$region0: #{dcgan_discriminator.6}
  #allocation0 [shape = 'u32[]', space=smem, size = 0x4, offset = 0x4, fixed_abs, tag = 'smem constant byte address 0x4 - core index']
  #allocation1 [shape = 'u32[72,128]{1,0:T(1,128)}', space=vmem, size = 0x9000, scoped, tag = 'internal scratch']
  #allocation2 [shape = 'f32[1,128]{1,0:T(1,128)}', space=vmem, size = 0x200, scoped, tag = 'scratch operand']
  #allocation3 [shape = 'f32[1,128]{1,0:T(1,128)}', space=vmem, size = 0x200, scoped, tag = 'scratch operand']
  #allocation4 [shape = 'f32[1,128]{1,0:T(1,128)}', space=vmem, size = 0x200, scoped, tag = 'scratch operand']
  #allocation5 [shape = 'f32[1,128]{1,0:T(1,128)}', space=vmem, size = 0x200, scoped, tag = 'scratch operand']
  %s0 = inlined_call_operand.vmem [shape: bf16[512,128], index: 0, kind: input, shape index: {}]
  %s1 = inlined_call_operand.vmem [shape: bf16[128,128], index: 1, kind: input, shape index: {}]
  %s2 = inlined_call_operand.vmem [shape: f32[1,128], index: 2, kind: input, shape index: {}]
  %s3 = inlined_call_operand.vmem [shape: f32[1,128], index: 3, kind: input, shape index: {}]
  %s4 = inlined_call_operand.vmem [shape: bf16[512,128], index: 4, kind: output, shape index: {}]
  %s5 = sld [smem:[#allocation0]]
  $region65: #{dcgan_discriminator.6} parent=0
    _
  %s7 = ssub.s32 1, %s5
  %s8 = scalar_select 0, %s7, %s5
  loop: start=0, step=1, limit=4
  $region2: #{dcgan_discriminator.6} parent=0 // loop_pre_header
    _
  $region3: #{dcgan_discriminator.6} parent=0 // loop_header
    %s10 = sphi 0, %s14
    %p11 = scmp.ge.s32.totalorder %s10, 4
    %s17 = sphi 0, %s29
    %s18 = sphi 0, %s25
    %s19 = sphi 0, %s17
    %s20 = sphi 0, %s18
    %s21 = sphi 0, %s19
    %s22 = sphi 0, %s20
    %s32 = sphi 0, %s34
    %s35 = sphi 0, %s32
    %s36 = sphi 0, %s35
    %s52 = sphi 0, %s36
    %s56 = sphi 0, %s56
    %s58 = sphi 0, %s56
    %s59 = sphi 0, %s58
    %s73 = sphi 0, %s59
    %s77 = sphi 0, %s77
    %s79 = sphi 0, %s77
    %s80 = sphi 0, %s79
    %s94 = sphi 0, %s80
    %s98 = sphi 0, %s98
    %s100 = sphi 0, %s98
    %s101 = sphi 0, %s100
    %s115 = sphi 0, %s101
    %s123 = sphi 0, %s125
    %s126 = sphi 0, %s123
    %s127 = sphi 0, %s126
    %s143 = sphi 0, %s127
  $region4: #{dcgan_discriminator.6} parent=0 // loop_header_branch
    %13 = sbr.rel (%p11) target = $region8
  $region5: #{dcgan_discriminator.6} parent=0 // loop_body
    %s15 = ssub.s32 %s10, 1
    %s16 = ssub.s32 %s10, 2
    %s23 = sadd.s32 1, %s18
    %p24 = scmp.ge.s32.totalorder %s23, 1
    %s25 = scalar_select %p24, 0, %s23
    %s26 = sadd.s32 1, %s17
    %s27 = scalar_select %p24, %s26, %s17
    %p28 = scmp.ge.s32.totalorder %s27, 2
    %s29 = scalar_select %p28, 0, %s27
    %s30 = ssub.s32 %s18, %s25
    %p31 = scmp.eq.s32.totalorder %s30, 0
    %s33 = sadd.s32 %s32, 1
    %s34 = scalar_select %p31, %s32, %s33
    %p37 = pneg %p31
    %p38 = scmp.eq.s32.totalorder %s10, 1
    %p39 = por %p37, %p38
    %p40 = scmp.ne.s32.totalorder %s32, %s35
    %p41 = scmp.eq.s32.totalorder %s10, 0
    %p42 = por %p40, %p41
    %p43 = scmp.ne.s32.totalorder %s32, %s35
    %p44 = scmp.eq.s32.totalorder %s15, 1
    %p45 = por %p43, %p44
    %p46 = scmp.ne.s32.totalorder %s35, %s36
    %p47 = scmp.eq.s32.totalorder %s15, 0
    %p48 = por %p46, %p47
    %p49 = scmp.ne.s32.totalorder %s35, %s36
    %p50 = scmp.eq.s32.totalorder %s16, 1
    %p51 = por %p49, %p50
    %p53 = scmp.ne.s32.totalorder %s36, %s52
    %p54 = scmp.eq.s32.totalorder %s16, 0
    %p55 = por %p53, %p54
    %s57 = sadd.s32 %s56, 1
    %p60 = scmp.eq.s32.totalorder %s10, 1
    %p61 = scmp.ne.s32.totalorder %s56, %s58
    %p62 = scmp.eq.s32.totalorder %s10, 0
    %p63 = por %p61, %p62
    %p64 = scmp.ne.s32.totalorder %s56, %s58
    %p65 = scmp.eq.s32.totalorder %s15, 1
    %p66 = por %p64, %p65
    %p67 = scmp.ne.s32.totalorder %s58, %s59
    %p68 = scmp.eq.s32.totalorder %s15, 0
    %p69 = por %p67, %p68
    %p70 = scmp.ne.s32.totalorder %s58, %s59
    %p71 = scmp.eq.s32.totalorder %s16, 1
    %p72 = por %p70, %p71
    %p74 = scmp.ne.s32.totalorder %s59, %s73
    %p75 = scmp.eq.s32.totalorder %s16, 0
    %p76 = por %p74, %p75
    %s78 = sadd.s32 %s77, 1
    %p81 = scmp.eq.s32.totalorder %s10, 1
    %p82 = scmp.ne.s32.totalorder %s77, %s79
    %p83 = scmp.eq.s32.totalorder %s10, 0
    %p84 = por %p82, %p83
    %p85 = scmp.ne.s32.totalorder %s77, %s79
    %p86 = scmp.eq.s32.totalorder %s15, 1
    %p87 = por %p85, %p86
    %p88 = scmp.ne.s32.totalorder %s79, %s80
    %p89 = scmp.eq.s32.totalorder %s15, 0
    %p90 = por %p88, %p89
    %p91 = scmp.ne.s32.totalorder %s79, %s80
    %p92 = scmp.eq.s32.totalorder %s16, 1
    %p93 = por %p91, %p92
    %p95 = scmp.ne.s32.totalorder %s80, %s94
    %p96 = scmp.eq.s32.totalorder %s16, 0
    %p97 = por %p95, %p96
    %s99 = sadd.s32 %s98, 1
    %p102 = scmp.eq.s32.totalorder %s10, 1
    %p103 = scmp.ne.s32.totalorder %s98, %s100
    %p104 = scmp.eq.s32.totalorder %s10, 0
    %p105 = por %p103, %p104
    %p106 = scmp.ne.s32.totalorder %s98, %s100
    %p107 = scmp.eq.s32.totalorder %s15, 1
    %p108 = por %p106, %p107
    %p109 = scmp.ne.s32.totalorder %s100, %s101
    %p110 = scmp.eq.s32.totalorder %s15, 0
    %p111 = por %p109, %p110
    %p112 = scmp.ne.s32.totalorder %s100, %s101
    %p113 = scmp.eq.s32.totalorder %s16, 1
    %p114 = por %p112, %p113
    %p116 = scmp.ne.s32.totalorder %s101, %s115
    %p117 = scmp.eq.s32.totalorder %s16, 0
    %p118 = por %p116, %p117
    %s119 = smul.u32 %s17, %s18
    %s120 = smul.u32 %s29, %s25
    %s121 = ssub.s32 %s119, %s120
    %p122 = scmp.eq.s32.totalorder %s121, 0
    %s124 = sadd.s32 %s123, 1
    %s125 = scalar_select %p122, %s123, %s124
    %p128 = pneg %p122
    %p129 = scmp.eq.s32.totalorder %s10, 1
    %p130 = por %p128, %p129
    %p131 = scmp.ne.s32.totalorder %s123, %s126
    %p132 = scmp.eq.s32.totalorder %s10, 0
    %p133 = por %p131, %p132
    %p134 = scmp.ne.s32.totalorder %s123, %s126
    %p135 = scmp.eq.s32.totalorder %s15, 1
    %p136 = por %p134, %p135
    %p137 = scmp.ne.s32.totalorder %s126, %s127
    %p138 = scmp.eq.s32.totalorder %s15, 0
    %p139 = por %p137, %p138
    %p140 = scmp.ne.s32.totalorder %s126, %s127
    %p141 = scmp.eq.s32.totalorder %s16, 1
    %p142 = por %p140, %p141
    %p144 = scmp.ne.s32.totalorder %s127, %s143
    %p145 = scmp.eq.s32.totalorder %s16, 0
    %p146 = por %p144, %p145
    %p147 = scmp.le.s32.totalorder 1, %s10
    %p148 = scmp.lt.s32.totalorder %s10, 3
    %p149 = pnand %p147, %p148
    %p150 = pneg %p149
    // Predicated region
    $region9: #{dcgan_discriminator.6} parent=5 // pred_check
      _
    $region10: #{dcgan_discriminator.6} parent=5 // pred_check_branch
      %152 = sbr.rel (%p149) target = $region12
    $region11: #{dcgan_discriminator.6} parent=5 // pred_region
      %s153 = ssub.s32 %s10, 1
      // Predicated region
      $region13: #{dcgan_discriminator.6} parent=11 // pred_check
        %p154 = pneg %p48
      $region14: #{dcgan_discriminator.6} parent=11 // pred_check_branch
        %156 = sbr.rel (%p154) target = $region16
      $region15: #{dcgan_discriminator.6} parent=11 // pred_region
        %s157 = smul.u32 64, %s20
        %p158 = scmp.lt.s32.totalorder %s157, 63
        %s159 = scalar_select %p158, %s157, 63
        %s160 = smul.addr %s159, 4
        %s161 = scalar_lea.vmem %s0, %s160
        %s162 = smul.u32 64, %s20
      $region16: #{dcgan_discriminator.6} parent=11 // pred_fallthru
        _
      // Predicated region
      $region17: #{dcgan_discriminator.6} parent=11 // pred_check
        %p163 = pneg %p69
      $region18: #{dcgan_discriminator.6} parent=11 // pred_check_branch
        %165 = sbr.rel (%p163) target = $region20
      $region19: #{dcgan_discriminator.6} parent=11 // pred_region
        _
      $region20: #{dcgan_discriminator.6} parent=11 // pred_fallthru
        _
      // Predicated region
      $region21: #{dcgan_discriminator.6} parent=11 // pred_check
        %p166 = pneg %p90
      $region22: #{dcgan_discriminator.6} parent=11 // pred_check_branch
        %168 = sbr.rel (%p166) target = $region24
      $region23: #{dcgan_discriminator.6} parent=11 // pred_region
        _
      $region24: #{dcgan_discriminator.6} parent=11 // pred_fallthru
        _
      // Predicated region
      $region25: #{dcgan_discriminator.6} parent=11 // pred_check
        %p169 = pneg %p111
      $region26: #{dcgan_discriminator.6} parent=11 // pred_check_branch
        %171 = sbr.rel (%p169) target = $region28
      $region27: #{dcgan_discriminator.6} parent=11 // pred_region
        _
      $region28: #{dcgan_discriminator.6} parent=11 // pred_fallthru
        _
    $region12: #{dcgan_discriminator.6} parent=5 // pred_fallthru
      _
    %p172 = scmp.lt.s32.totalorder %s10, 2
    // Predicated region
    $region29: #{dcgan_discriminator.6} parent=5 // pred_check
      %p173 = pneg %p172
    $region30: #{dcgan_discriminator.6} parent=5 // pred_check_branch
      %175 = sbr.rel (%p173) target = $region32
    $region31: #{dcgan_discriminator.6} parent=5 // pred_region
      _
    $region32: #{dcgan_discriminator.6} parent=5 // pred_fallthru
      _
    %p176 = scmp.le.s32.totalorder 1, %s10
    %p177 = scmp.lt.s32.totalorder %s10, 3
    %p178 = pnand %p176, %p177
    %p179 = pneg %p178
    // Predicated region
    $region33: #{dcgan_discriminator.6} parent=5 // pred_check
      _
    $region34: #{dcgan_discriminator.6} parent=5 // pred_check_branch
      %181 = sbr.rel (%p178) target = $region36
    $region35: #{dcgan_discriminator.6} parent=5 // pred_region
      %s182 = ssub.s32 %s10, 1
      %s183 = smul.u32 64, %s20
      %p184 = scmp.lt.s32.totalorder %s183, 63
      %s185 = scalar_select %p184, %s183, 63
      %s186 = smul.addr %s185, 4
      %s187 = scalar_lea.vmem %s0, %s186
      %p188 = pneg %p48
      %p189 = pneg %p45
      %p190 = pneg %p69
      %p191 = pneg %p66
      %p192 = pneg %p90
      %p193 = pneg %p87
      %p194 = pneg %p111
      %p195 = pneg %p108
      %p196 = pneg %p139
      %p197 = pneg %p136
      %s198 = smul.u32 %s19, %s20
      %s199 = smul.u32 64, %s198
      %p200 = scmp.lt.s32.totalorder %s199, 63
      %s201 = scalar_select %p200, %s199, 63
      %s202 = smul.addr %s201, 4
      %s203 = scalar_lea.vmem %s4, %s202
      %s204 = smul.u32 64, %s20
      %p205 = scmp.lt.s32.totalorder %s204, 63
      %s206 = scalar_select %p205, %s204, 63
      %s207 = smul.addr %s206, 4
      %s208 = scalar_lea.vmem %s0, %s207
      %s209 = smul.u32 64, %s20
      %s210 = smul.u32 %s19, %s20
      %s211 = smul.u32 64, %s210
      %p212 = scmp.lt.s32.totalorder %s211, 63
      %s213 = scalar_select %p212, %s211, 63
      %s214 = smul.addr %s213, 4
      %s215 = scalar_lea.vmem %s4, %s214
      %s216 = smul.u32 %s19, %s20
      %s217 = smul.u32 64, %s216
      %v218 = vld [vmem:[%s208] sm:$0xf]
      %v219 = vld [vmem:[%s208 + $0x4] sm:$0xf]
      %v220 = vld [vmem:[%s208 + $0x8] sm:$0xf]
      %v221 = vld [vmem:[%s208 + $0xc] sm:$0xf]
      %v222 = vld [vmem:[%s208 + $0x10] sm:$0xf]
      %v223 = vld [vmem:[%s208 + $0x14] sm:$0xf]
      %v224 = vld [vmem:[%s208 + $0x18] sm:$0xf]
      %v225 = vld [vmem:[%s208 + $0x1c] sm:$0xf]
      %v226 = vld [vmem:[%s208 + $0x20] sm:$0xf]
      %v227 = vld [vmem:[%s208 + $0x24] sm:$0xf]
      %v228 = vld [vmem:[%s208 + $0x28] sm:$0xf]
      %v229 = vld [vmem:[%s208 + $0x2c] sm:$0xf]
      %v230 = vld [vmem:[%s208 + $0x30] sm:$0xf]
      %v231 = vld [vmem:[%s208 + $0x34] sm:$0xf]
      %v232 = vld [vmem:[%s208 + $0x38] sm:$0xf]
      %v233 = vld [vmem:[%s208 + $0x3c] sm:$0xf]
      %v234 = vld [vmem:[%s208 + $0x40] sm:$0xf]
      %v235 = vld [vmem:[%s208 + $0x44] sm:$0xf]
      %v236 = vld [vmem:[%s208 + $0x48] sm:$0xf]
      %v237 = vld [vmem:[%s208 + $0x4c] sm:$0xf]
      %v238 = vld [vmem:[%s208 + $0x50] sm:$0xf]
      %v239 = vld [vmem:[%s208 + $0x54] sm:$0xf]
      %v240 = vld [vmem:[%s208 + $0x58] sm:$0xf]
      %v241 = vld [vmem:[%s208 + $0x5c] sm:$0xf]
      %v242 = vld [vmem:[%s208 + $0x60] sm:$0xf]
      %v243 = vld [vmem:[%s208 + $0x64] sm:$0xf]
      %v244 = vld [vmem:[%s208 + $0x68] sm:$0xf]
      %v245 = vld [vmem:[%s208 + $0x6c] sm:$0xf]
      %v246 = vld [vmem:[%s208 + $0x70] sm:$0xf]
      %v247 = vld [vmem:[%s208 + $0x74] sm:$0xf]
      %v248 = vld [vmem:[%s208 + $0x78] sm:$0xf]
      %v249 = vld [vmem:[%s208 + $0x7c] sm:$0xf]
      %v250 = vld [vmem:[%s208 + $0x80] sm:$0xf]
      %v251 = vld [vmem:[%s208 + $0x84] sm:$0xf]
      %v252 = vld [vmem:[%s208 + $0x88] sm:$0xf]
      %v253 = vld [vmem:[%s208 + $0x8c] sm:$0xf]
      %v254 = vld [vmem:[%s208 + $0x90] sm:$0xf]
      %v255 = vld [vmem:[%s208 + $0x94] sm:$0xf]
      %v256 = vld [vmem:[%s208 + $0x98] sm:$0xf]
      %v257 = vld [vmem:[%s208 + $0x9c] sm:$0xf]
      %v258 = vld [vmem:[%s208 + $0xa0] sm:$0xf]
      %v259 = vld [vmem:[%s208 + $0xa4] sm:$0xf]
      %v260 = vld [vmem:[%s208 + $0xa8] sm:$0xf]
      %v261 = vld [vmem:[%s208 + $0xac] sm:$0xf]
      %v262 = vld [vmem:[%s208 + $0xb0] sm:$0xf]
      %v263 = vld [vmem:[%s208 + $0xb4] sm:$0xf]
      %v264 = vld [vmem:[%s208 + $0xb8] sm:$0xf]
      %v265 = vld [vmem:[%s208 + $0xbc] sm:$0xf]
      %v266 = vld [vmem:[%s208 + $0xc0] sm:$0xf]
      %v267 = vld [vmem:[%s208 + $0xc4] sm:$0xf]
      %v268 = vld [vmem:[%s208 + $0xc8] sm:$0xf]
      %v269 = vld [vmem:[%s208 + $0xcc] sm:$0xf]
      %v270 = vld [vmem:[%s208 + $0xd0] sm:$0xf]
      %v271 = vld [vmem:[%s208 + $0xd4] sm:$0xf]
      %v272 = vld [vmem:[%s208 + $0xd8] sm:$0xf]
      %v273 = vld [vmem:[%s208 + $0xdc] sm:$0xf]
      %v274 = vld [vmem:[%s208 + $0xe0] sm:$0xf]
      %v275 = vld [vmem:[%s208 + $0xe4] sm:$0xf]
      %v276 = vld [vmem:[%s208 + $0xe8] sm:$0xf]
      %v277 = vld [vmem:[%s208 + $0xec] sm:$0xf]
      %v278 = vld [vmem:[%s208 + $0xf0] sm:$0xf]
      %v279 = vld [vmem:[%s208 + $0xf4] sm:$0xf]
      %v280 = vld [vmem:[%s208 + $0xf8] sm:$0xf]
      %v281 = vld [vmem:[%s208 + $0xfc] sm:$0xf]
      %v282 = vld [vmem:[%s1] sm:$0xf]
      %v283 = vld [vmem:[%s1 + $0x4] sm:$0xf]
      %v284 = vld [vmem:[%s1 + $0x8] sm:$0xf]
      %v285 = vld [vmem:[%s1 + $0xc] sm:$0xf]
      %v286 = vld [vmem:[%s1 + $0x10] sm:$0xf]
      %v287 = vld [vmem:[%s1 + $0x14] sm:$0xf]
      %v288 = vld [vmem:[%s1 + $0x18] sm:$0xf]
      %v289 = vld [vmem:[%s1 + $0x1c] sm:$0xf]
      %v290 = vld [vmem:[%s1 + $0x20] sm:$0xf]
      %v291 = vld [vmem:[%s1 + $0x24] sm:$0xf]
      %v292 = vld [vmem:[%s1 + $0x28] sm:$0xf]
      %v293 = vld [vmem:[%s1 + $0x2c] sm:$0xf]
      %v294 = vld [vmem:[%s1 + $0x30] sm:$0xf]
      %v295 = vld [vmem:[%s1 + $0x34] sm:$0xf]
      %v296 = vld [vmem:[%s1 + $0x38] sm:$0xf]
      %v297 = vld [vmem:[%s1 + $0x3c] sm:$0xf]
      %v362 = vunpack.c.l.b16 %v218
      %v363 = vunpack.c.l.b16 %v219
      %v364 = vunpack.c.l.b16 %v220
      %v365 = vunpack.c.l.b16 %v221
      %v366 = vunpack.c.l.b16 %v222
      %v367 = vunpack.c.l.b16 %v223
      %v368 = vunpack.c.l.b16 %v224
      %v369 = vunpack.c.l.b16 %v225
      %v370 = vunpack.c.l.b16 %v226
      %v371 = vunpack.c.l.b16 %v227
      %v372 = vunpack.c.l.b16 %v228
      %v373 = vunpack.c.l.b16 %v229
      %v374 = vunpack.c.l.b16 %v230
      %v375 = vunpack.c.l.b16 %v231
      %v376 = vunpack.c.l.b16 %v232
      %v377 = vunpack.c.l.b16 %v233
      %v378 = vunpack.c.l.b16 %v234
      %v379 = vunpack.c.l.b16 %v235
      %v380 = vunpack.c.l.b16 %v236
      %v381 = vunpack.c.l.b16 %v237
      %v382 = vunpack.c.l.b16 %v238
      %v383 = vunpack.c.l.b16 %v239
      %v384 = vunpack.c.l.b16 %v240
      %v385 = vunpack.c.l.b16 %v241
      %v386 = vunpack.c.l.b16 %v242
      %v387 = vunpack.c.l.b16 %v243
      %v388 = vunpack.c.l.b16 %v244
      %v389 = vunpack.c.l.b16 %v245
      %v390 = vunpack.c.l.b16 %v246
      %v391 = vunpack.c.l.b16 %v247
      %v392 = vunpack.c.l.b16 %v248
      %v393 = vunpack.c.l.b16 %v249
      %v394 = vunpack.c.l.b16 %v250
      %v395 = vunpack.c.l.b16 %v251
      %v396 = vunpack.c.l.b16 %v252
      %v397 = vunpack.c.l.b16 %v253
      %v398 = vunpack.c.l.b16 %v254
      %v399 = vunpack.c.l.b16 %v255
      %v400 = vunpack.c.l.b16 %v256
      %v401 = vunpack.c.l.b16 %v257
      %v402 = vunpack.c.l.b16 %v258
      %v403 = vunpack.c.l.b16 %v259
      %v404 = vunpack.c.l.b16 %v260
      %v405 = vunpack.c.l.b16 %v261
      %v406 = vunpack.c.l.b16 %v262
      %v407 = vunpack.c.l.b16 %v263
      %v408 = vunpack.c.l.b16 %v264
      %v409 = vunpack.c.l.b16 %v265
      %v410 = vunpack.c.l.b16 %v266
      %v411 = vunpack.c.l.b16 %v267
      %v412 = vunpack.c.l.b16 %v268
      %v413 = vunpack.c.l.b16 %v269
      %v414 = vunpack.c.l.b16 %v270
      %v415 = vunpack.c.l.b16 %v271
      %v416 = vunpack.c.l.b16 %v272
      %v417 = vunpack.c.l.b16 %v273
      %v418 = vunpack.c.l.b16 %v274
      %v419 = vunpack.c.l.b16 %v275
      %v420 = vunpack.c.l.b16 %v276
      %v421 = vunpack.c.l.b16 %v277
      %v422 = vunpack.c.l.b16 %v278
      %v423 = vunpack.c.l.b16 %v279
      %v424 = vunpack.c.l.b16 %v280
      %v425 = vunpack.c.l.b16 %v281
      %v426 = vpack.c.b16 %v363, %v362
      %v427 = vpack.c.b16 %v365, %v364
      %v428 = vpack.c.b16 %v367, %v366
      %v429 = vpack.c.b16 %v369, %v368
      %v430 = vpack.c.b16 %v371, %v370
      %v431 = vpack.c.b16 %v373, %v372
      %v432 = vpack.c.b16 %v375, %v374
      %v433 = vpack.c.b16 %v377, %v376
      %v434 = vpack.c.b16 %v379, %v378
      %v435 = vpack.c.b16 %v381, %v380
      %v436 = vpack.c.b16 %v383, %v382
      %v437 = vpack.c.b16 %v385, %v384
      %v438 = vpack.c.b16 %v387, %v386
      %v439 = vpack.c.b16 %v389, %v388
      %v440 = vpack.c.b16 %v391, %v390
      %v441 = vpack.c.b16 %v393, %v392
      %v442 = vpack.c.b16 %v395, %v394
      %v443 = vpack.c.b16 %v397, %v396
      %v444 = vpack.c.b16 %v399, %v398
      %v445 = vpack.c.b16 %v401, %v400
      %v446 = vpack.c.b16 %v403, %v402
      %v447 = vpack.c.b16 %v405, %v404
      %v448 = vpack.c.b16 %v407, %v406
      %v449 = vpack.c.b16 %v409, %v408
      %v450 = vpack.c.b16 %v411, %v410
      %v451 = vpack.c.b16 %v413, %v412
      %v452 = vpack.c.b16 %v415, %v414
      %v453 = vpack.c.b16 %v417, %v416
      %v454 = vpack.c.b16 %v419, %v418
      %v455 = vpack.c.b16 %v421, %v420
      %v456 = vpack.c.b16 %v423, %v422
      %v457 = vpack.c.b16 %v425, %v424
      %v506 = vunpack.c.l.b16 %v282
      %v507 = vunpack.c.l.b16 %v283
      %v508 = vunpack.c.l.b16 %v284
      %v509 = vunpack.c.l.b16 %v285
      %v510 = vunpack.c.l.b16 %v286
      %v511 = vunpack.c.l.b16 %v287
      %v512 = vunpack.c.l.b16 %v288
      %v513 = vunpack.c.l.b16 %v289
      %v514 = vunpack.c.l.b16 %v290
      %v515 = vunpack.c.l.b16 %v291
      %v516 = vunpack.c.l.b16 %v292
      %v517 = vunpack.c.l.b16 %v293
      %v518 = vunpack.c.l.b16 %v294
      %v519 = vunpack.c.l.b16 %v295
      %v520 = vunpack.c.l.b16 %v296
      %v521 = vunpack.c.l.b16 %v297
      %v522 = vpack.c.b16 %v507, %v506
      %v523 = vpack.c.b16 %v509, %v508
      %v524 = vpack.c.b16 %v511, %v510
      %v525 = vpack.c.b16 %v513, %v512
      %v526 = vpack.c.b16 %v515, %v514
      %v527 = vpack.c.b16 %v517, %v516
      %v528 = vpack.c.b16 %v519, %v518
      %v529 = vpack.c.b16 %v521, %v520
      %538 = vmatpush.bf16.msra.mxu0 %v529
      %539 = vmatpush.bf16.msra.mxu0 %v528
      %540 = vmatpush.bf16.msra.mxu0 %v527
      %541 = vmatpush.bf16.msra.mxu0 %v526
      %542 = vmatpush.bf16.msra.mxu0 %v525
      %543 = vmatpush.bf16.msra.mxu0 %v524
      %544 = vmatpush.bf16.msra.mxu0 %v523
      %545 = vmatpush.bf16.msra.mxu0 %v522
      %546 = vmatmul.bf16.gmra.mxu0 %v426
      %v547 = vpop.f32.mrf.mxu0
      %v548 = vadd.f32 0.0, %v547
      %v549 = vpop.f32.mrf.mxu0
      %v550 = vadd.f32 0.0, %v549
      %551 = vmatmul.bf16.gmra.mxu0 %v427
      %v552 = vpop.f32.mrf.mxu0
      %v553 = vadd.f32 0.0, %v552
      %v554 = vpop.f32.mrf.mxu0
      %v555 = vadd.f32 0.0, %v554
      %556 = vmatmul.bf16.gmra.mxu0 %v428
      %v557 = vpop.f32.mrf.mxu0
      %v558 = vadd.f32 0.0, %v557
      %v559 = vpop.f32.mrf.mxu0
      %v560 = vadd.f32 0.0, %v559
      %561 = vmatmul.bf16.gmra.mxu0 %v429
      %v562 = vpop.f32.mrf.mxu0
      %v563 = vadd.f32 0.0, %v562
      %v564 = vpop.f32.mrf.mxu0
      %v565 = vadd.f32 0.0, %v564
      %566 = vmatmul.bf16.gmra.mxu0 %v430
      %v567 = vpop.f32.mrf.mxu0
      %v568 = vadd.f32 0.0, %v567
      %v569 = vpop.f32.mrf.mxu0
      %v570 = vadd.f32 0.0, %v569
      %571 = vmatmul.bf16.gmra.mxu0 %v431
      %v572 = vpop.f32.mrf.mxu0
      %v573 = vadd.f32 0.0, %v572
      %v574 = vpop.f32.mrf.mxu0
      %v575 = vadd.f32 0.0, %v574
      %576 = vmatmul.bf16.gmra.mxu0 %v432
      %v577 = vpop.f32.mrf.mxu0
      %v578 = vadd.f32 0.0, %v577
      %v579 = vpop.f32.mrf.mxu0
      %v580 = vadd.f32 0.0, %v579
      %581 = vmatmul.bf16.gmra.mxu0 %v433
      %v582 = vpop.f32.mrf.mxu0
      %v583 = vadd.f32 0.0, %v582
      %v584 = vpop.f32.mrf.mxu0
      %v585 = vadd.f32 0.0, %v584
      %586 = vmatmul.bf16.gmra.mxu0 %v434
      %v587 = vpop.f32.mrf.mxu0
      %v588 = vadd.f32 0.0, %v587
      %v589 = vpop.f32.mrf.mxu0
      %v590 = vadd.f32 0.0, %v589
      %591 = vmatmul.bf16.gmra.mxu0 %v435
      %v592 = vpop.f32.mrf.mxu0
      %v593 = vadd.f32 0.0, %v592
      %v594 = vpop.f32.mrf.mxu0
      %v595 = vadd.f32 0.0, %v594
      %596 = vmatmul.bf16.gmra.mxu0 %v436
      %v597 = vpop.f32.mrf.mxu0
      %v598 = vadd.f32 0.0, %v597
      %v599 = vpop.f32.mrf.mxu0
      %v600 = vadd.f32 0.0, %v599
      %601 = vmatmul.bf16.gmra.mxu0 %v437
      %v602 = vpop.f32.mrf.mxu0
      %v603 = vadd.f32 0.0, %v602
      %v604 = vpop.f32.mrf.mxu0
      %v605 = vadd.f32 0.0, %v604
      %606 = vmatmul.bf16.gmra.mxu0 %v438
      %v607 = vpop.f32.mrf.mxu0
      %v608 = vadd.f32 0.0, %v607
      %v609 = vpop.f32.mrf.mxu0
      %v610 = vadd.f32 0.0, %v609
      %611 = vmatmul.bf16.gmra.mxu0 %v439
      %v612 = vpop.f32.mrf.mxu0
      %v613 = vadd.f32 0.0, %v612
      %v614 = vpop.f32.mrf.mxu0
      %v615 = vadd.f32 0.0, %v614
      %616 = vmatmul.bf16.gmra.mxu0 %v440
      %v617 = vpop.f32.mrf.mxu0
      %v618 = vadd.f32 0.0, %v617
      %v619 = vpop.f32.mrf.mxu0
      %v620 = vadd.f32 0.0, %v619
      %621 = vmatmul.bf16.gmra.mxu0 %v441
      %v622 = vpop.f32.mrf.mxu0
      %v623 = vadd.f32 0.0, %v622
      %v624 = vpop.f32.mrf.mxu0
      %v625 = vadd.f32 0.0, %v624
      %626 = vmatmul.bf16.gmra.mxu0 %v442
      %v627 = vpop.f32.mrf.mxu0
      %v628 = vadd.f32 0.0, %v627
      %v629 = vpop.f32.mrf.mxu0
      %v630 = vadd.f32 0.0, %v629
      %631 = vmatmul.bf16.gmra.mxu0 %v443
      %v632 = vpop.f32.mrf.mxu0
      %v633 = vadd.f32 0.0, %v632
      %v634 = vpop.f32.mrf.mxu0
      %v635 = vadd.f32 0.0, %v634
      %636 = vmatmul.bf16.gmra.mxu0 %v444
      %v637 = vpop.f32.mrf.mxu0
      %v638 = vadd.f32 0.0, %v637
      %v639 = vpop.f32.mrf.mxu0
      %v640 = vadd.f32 0.0, %v639
      %641 = vmatmul.bf16.gmra.mxu0 %v445
      %v642 = vpop.f32.mrf.mxu0
      %v643 = vadd.f32 0.0, %v642
      %v644 = vpop.f32.mrf.mxu0
      %v645 = vadd.f32 0.0, %v644
      %646 = vmatmul.bf16.gmra.mxu0 %v446
      %v647 = vpop.f32.mrf.mxu0
      %v648 = vadd.f32 0.0, %v647
      %v649 = vpop.f32.mrf.mxu0
      %v650 = vadd.f32 0.0, %v649
      %651 = vmatmul.bf16.gmra.mxu0 %v447
      %v652 = vpop.f32.mrf.mxu0
      %v653 = vadd.f32 0.0, %v652
      %v654 = vpop.f32.mrf.mxu0
      %v655 = vadd.f32 0.0, %v654
      %656 = vmatmul.bf16.gmra.mxu0 %v448
      %v657 = vpop.f32.mrf.mxu0
      %v658 = vadd.f32 0.0, %v657
      %v659 = vpop.f32.mrf.mxu0
      %v660 = vadd.f32 0.0, %v659
      %661 = vmatmul.bf16.gmra.mxu0 %v449
      %v662 = vpop.f32.mrf.mxu0
      %v663 = vadd.f32 0.0, %v662
      %v664 = vpop.f32.mrf.mxu0
      %v665 = vadd.f32 0.0, %v664
      %666 = vmatmul.bf16.gmra.mxu0 %v450
      %v667 = vpop.f32.mrf.mxu0
      %v668 = vadd.f32 0.0, %v667
      %v669 = vpop.f32.mrf.mxu0
      %v670 = vadd.f32 0.0, %v669
      %671 = vmatmul.bf16.gmra.mxu0 %v451
      %v672 = vpop.f32.mrf.mxu0
      %v673 = vadd.f32 0.0, %v672
      %v674 = vpop.f32.mrf.mxu0
      %v675 = vadd.f32 0.0, %v674
      %676 = vmatmul.bf16.gmra.mxu0 %v452
      %v677 = vpop.f32.mrf.mxu0
      %v678 = vadd.f32 0.0, %v677
      %v679 = vpop.f32.mrf.mxu0
      %v680 = vadd.f32 0.0, %v679
      %681 = vmatmul.bf16.gmra.mxu0 %v453
      %v682 = vpop.f32.mrf.mxu0
      %v683 = vadd.f32 0.0, %v682
      %v684 = vpop.f32.mrf.mxu0
      %v685 = vadd.f32 0.0, %v684
      %686 = vmatmul.bf16.gmra.mxu0 %v454
      %v687 = vpop.f32.mrf.mxu0
      %v688 = vadd.f32 0.0, %v687
      %v689 = vpop.f32.mrf.mxu0
      %v690 = vadd.f32 0.0, %v689
      %691 = vmatmul.bf16.gmra.mxu0 %v455
      %v692 = vpop.f32.mrf.mxu0
      %v693 = vadd.f32 0.0, %v692
      %v694 = vpop.f32.mrf.mxu0
      %v695 = vadd.f32 0.0, %v694
      %696 = vmatmul.bf16.gmra.mxu0 %v456
      %v697 = vpop.f32.mrf.mxu0
      %v698 = vadd.f32 0.0, %v697
      %v699 = vpop.f32.mrf.mxu0
      %v700 = vadd.f32 0.0, %v699
      %701 = vmatmul.bf16.gmra.mxu0 %v457
      %v702 = vpop.f32.mrf.mxu0
      %v703 = vadd.f32 0.0, %v702
      %v704 = vpop.f32.mrf.mxu0
      %v705 = vadd.f32 0.0, %v704
      %706 = vdwg.mxu0
      %p707 = scmp.eq.s32.totalorder %s19, 0
      %p708 = scmp.eq.s32.totalorder %s20, 0
      %p709 = pnand %p707, %p708
      %p710 = pneg %p709
      // Predicated region
      $region37: #{dcgan_discriminator.6} parent=35 // pred_check
        _
      $region38: #{dcgan_discriminator.6} parent=35 // pred_check_branch
        %712 = sbr.rel (%p709) target = $region40
      $region39: #{dcgan_discriminator.6} parent=35 // pred_region
        %713 = vst [vmem:[#allocation2] sm:$0x1] 0.0
        %714 = vst [vmem:[#allocation3] sm:$0x1] 0.0
      $region40: #{dcgan_discriminator.6} parent=35 // pred_fallthru
        _
      // Predicated region
      $region41: #{dcgan_discriminator.6} parent=35 // pred_check
        %p715 = pneg %p707
      $region42: #{dcgan_discriminator.6} parent=35 // pred_check_branch
        %717 = sbr.rel (%p715) target = $region44
      $region43: #{dcgan_discriminator.6} parent=35 // pred_region
        %v718 = vld [vmem:[#allocation2] sm:$0x1]
        %v719 = vadd.f32 %v548, %v550
        %v720 = vadd.f32 %v719, %v553
        %v721 = vadd.f32 %v720, %v555
        %v722 = vadd.f32 %v721, %v558
        %v723 = vadd.f32 %v722, %v560
        %v724 = vadd.f32 %v723, %v563
        %v725 = vadd.f32 %v724, %v565
        %v726 = vadd.f32 %v725, %v568
        %v727 = vadd.f32 %v726, %v570
        %v728 = vadd.f32 %v727, %v573
        %v729 = vadd.f32 %v728, %v575
        %v730 = vadd.f32 %v729, %v578
        %v731 = vadd.f32 %v730, %v580
        %v732 = vadd.f32 %v731, %v583
        %v733 = vadd.f32 %v732, %v585
        %v734 = vadd.f32 %v733, %v588
        %v735 = vadd.f32 %v734, %v590
        %v736 = vadd.f32 %v735, %v593
        %v737 = vadd.f32 %v736, %v595
        %v738 = vadd.f32 %v737, %v598
        %v739 = vadd.f32 %v738, %v600
        %v740 = vadd.f32 %v739, %v603
        %v741 = vadd.f32 %v740, %v605
        %v742 = vadd.f32 %v741, %v608
        %v743 = vadd.f32 %v742, %v610
        %v744 = vadd.f32 %v743, %v613
        %v745 = vadd.f32 %v744, %v615
        %v746 = vadd.f32 %v745, %v618
        %v747 = vadd.f32 %v746, %v620
        %v748 = vadd.f32 %v747, %v623
        %v749 = vadd.f32 %v748, %v625
        %v750 = vadd.f32 %v749, %v628
        %v751 = vadd.f32 %v750, %v630
        %v752 = vadd.f32 %v751, %v633
        %v753 = vadd.f32 %v752, %v635
        %v754 = vadd.f32 %v753, %v638
        %v755 = vadd.f32 %v754, %v640
        %v756 = vadd.f32 %v755, %v643
        %v757 = vadd.f32 %v756, %v645
        %v758 = vadd.f32 %v757, %v648
        %v759 = vadd.f32 %v758, %v650
        %v760 = vadd.f32 %v759, %v653
        %v761 = vadd.f32 %v760, %v655
        %v762 = vadd.f32 %v761, %v658
        %v763 = vadd.f32 %v762, %v660
        %v764 = vadd.f32 %v763, %v663
        %v765 = vadd.f32 %v764, %v665
        %v766 = vadd.f32 %v765, %v668
        %v767 = vadd.f32 %v766, %v670
        %v768 = vadd.f32 %v767, %v673
        %v769 = vadd.f32 %v768, %v675
        %v770 = vadd.f32 %v769, %v678
        %v771 = vadd.f32 %v770, %v680
        %v772 = vadd.f32 %v771, %v683
        %v773 = vadd.f32 %v772, %v685
        %v774 = vadd.f32 %v773, %v688
        %v775 = vadd.f32 %v774, %v690
        %v776 = vadd.f32 %v775, %v693
        %v777 = vadd.f32 %v776, %v695
        %v778 = vadd.f32 %v777, %v698
        %v779 = vadd.f32 %v778, %v700
        %v780 = vadd.f32 %v779, %v703
        %v781 = vadd.f32 %v780, %v705
        %v782 = vrot.slane %v781, 4
        %v783 = vadd.f32 %v781, %v782
        %v784 = vrot.slane %v783, 2
        %v785 = vadd.f32 %v783, %v784
        %v786 = vrot.slane %v785, 1
        %v787 = vadd.f32 %v785, %v786
        %v788 = vadd.f32 %v718, %v787
        %789 = vst [vmem:[#allocation2] sm:$0x1] %v788
        %v790 = vld [vmem:[#allocation3] sm:$0x1]
        %v791 = vmul.f32 %v548, %v548
        %v792 = vmul.f32 %v550, %v550
        %v793 = vmul.f32 %v553, %v553
        %v794 = vmul.f32 %v555, %v555
        %v795 = vmul.f32 %v558, %v558
        %v796 = vmul.f32 %v560, %v560
        %v797 = vmul.f32 %v563, %v563
        %v798 = vmul.f32 %v565, %v565
        %v799 = vmul.f32 %v568, %v568
        %v800 = vmul.f32 %v570, %v570
        %v801 = vmul.f32 %v573, %v573
        %v802 = vmul.f32 %v575, %v575
        %v803 = vmul.f32 %v578, %v578
        %v804 = vmul.f32 %v580, %v580
        %v805 = vmul.f32 %v583, %v583
        %v806 = vmul.f32 %v585, %v585
        %v807 = vmul.f32 %v588, %v588
        %v808 = vmul.f32 %v590, %v590
        %v809 = vmul.f32 %v593, %v593
        %v810 = vmul.f32 %v595, %v595
        %v811 = vmul.f32 %v598, %v598
        %v812 = vmul.f32 %v600, %v600
        %v813 = vmul.f32 %v603, %v603
        %v814 = vmul.f32 %v605, %v605
        %v815 = vmul.f32 %v608, %v608
        %v816 = vmul.f32 %v610, %v610
        %v817 = vmul.f32 %v613, %v613
        %v818 = vmul.f32 %v615, %v615
        %v819 = vmul.f32 %v618, %v618
        %v820 = vmul.f32 %v620, %v620
        %v821 = vmul.f32 %v623, %v623
        %v822 = vmul.f32 %v625, %v625
        %v823 = vmul.f32 %v628, %v628
        %v824 = vmul.f32 %v630, %v630
        %v825 = vmul.f32 %v633, %v633
        %v826 = vmul.f32 %v635, %v635
        %v827 = vmul.f32 %v638, %v638
        %v828 = vmul.f32 %v640, %v640
        %v829 = vmul.f32 %v643, %v643
        %v830 = vmul.f32 %v645, %v645
        %v831 = vmul.f32 %v648, %v648
        %v832 = vmul.f32 %v650, %v650
        %v833 = vmul.f32 %v653, %v653
        %v834 = vmul.f32 %v655, %v655
        %v835 = vmul.f32 %v658, %v658
        %v836 = vmul.f32 %v660, %v660
        %v837 = vmul.f32 %v663, %v663
        %v838 = vmul.f32 %v665, %v665
        %v839 = vmul.f32 %v668, %v668
        %v840 = vmul.f32 %v670, %v670
        %v841 = vmul.f32 %v673, %v673
        %v842 = vmul.f32 %v675, %v675
        %v843 = vmul.f32 %v678, %v678
        %v844 = vmul.f32 %v680, %v680
        %v845 = vmul.f32 %v683, %v683
        %v846 = vmul.f32 %v685, %v685
        %v847 = vmul.f32 %v688, %v688
        %v848 = vmul.f32 %v690, %v690
        %v849 = vmul.f32 %v693, %v693
        %v850 = vmul.f32 %v695, %v695
        %v851 = vmul.f32 %v698, %v698
        %v852 = vmul.f32 %v700, %v700
        %v853 = vmul.f32 %v703, %v703
        %v854 = vmul.f32 %v705, %v705
        %v855 = vadd.f32 %v791, %v792
        %v856 = vadd.f32 %v855, %v793
        %v857 = vadd.f32 %v856, %v794
        %v858 = vadd.f32 %v857, %v795
        %v859 = vadd.f32 %v858, %v796
        %v860 = vadd.f32 %v859, %v797
        %v861 = vadd.f32 %v860, %v798
        %v862 = vadd.f32 %v861, %v799
        %v863 = vadd.f32 %v862, %v800
        %v864 = vadd.f32 %v863, %v801
        %v865 = vadd.f32 %v864, %v802
        %v866 = vadd.f32 %v865, %v803
        %v867 = vadd.f32 %v866, %v804
        %v868 = vadd.f32 %v867, %v805
        %v869 = vadd.f32 %v868, %v806
        %v870 = vadd.f32 %v869, %v807
        %v871 = vadd.f32 %v870, %v808
        %v872 = vadd.f32 %v871, %v809
        %v873 = vadd.f32 %v872, %v810
        %v874 = vadd.f32 %v873, %v811
        %v875 = vadd.f32 %v874, %v812
        %v876 = vadd.f32 %v875, %v813
        %v877 = vadd.f32 %v876, %v814
        %v878 = vadd.f32 %v877, %v815
        %v879 = vadd.f32 %v878, %v816
        %v880 = vadd.f32 %v879, %v817
        %v881 = vadd.f32 %v880, %v818
        %v882 = vadd.f32 %v881, %v819
        %v883 = vadd.f32 %v882, %v820
        %v884 = vadd.f32 %v883, %v821
        %v885 = vadd.f32 %v884, %v822
        %v886 = vadd.f32 %v885, %v823
        %v887 = vadd.f32 %v886, %v824
        %v888 = vadd.f32 %v887, %v825
        %v889 = vadd.f32 %v888, %v826
        %v890 = vadd.f32 %v889, %v827
        %v891 = vadd.f32 %v890, %v828
        %v892 = vadd.f32 %v891, %v829
        %v893 = vadd.f32 %v892, %v830
        %v894 = vadd.f32 %v893, %v831
        %v895 = vadd.f32 %v894, %v832
        %v896 = vadd.f32 %v895, %v833
        %v897 = vadd.f32 %v896, %v834
        %v898 = vadd.f32 %v897, %v835
        %v899 = vadd.f32 %v898, %v836
        %v900 = vadd.f32 %v899, %v837
        %v901 = vadd.f32 %v900, %v838
        %v902 = vadd.f32 %v901, %v839
        %v903 = vadd.f32 %v902, %v840
        %v904 = vadd.f32 %v903, %v841
        %v905 = vadd.f32 %v904, %v842
        %v906 = vadd.f32 %v905, %v843
        %v907 = vadd.f32 %v906, %v844
        %v908 = vadd.f32 %v907, %v845
        %v909 = vadd.f32 %v908, %v846
        %v910 = vadd.f32 %v909, %v847
        %v911 = vadd.f32 %v910, %v848
        %v912 = vadd.f32 %v911, %v849
        %v913 = vadd.f32 %v912, %v850
        %v914 = vadd.f32 %v913, %v851
        %v915 = vadd.f32 %v914, %v852
        %v916 = vadd.f32 %v915, %v853
        %v917 = vadd.f32 %v916, %v854
        %v918 = vrot.slane %v917, 4
        %v919 = vadd.f32 %v917, %v918
        %v920 = vrot.slane %v919, 2
        %v921 = vadd.f32 %v919, %v920
        %v922 = vrot.slane %v921, 1
        %v923 = vadd.f32 %v921, %v922
        %v924 = vadd.f32 %v790, %v923
        %925 = vst [vmem:[#allocation3] sm:$0x1] %v924
      $region44: #{dcgan_discriminator.6} parent=35 // pred_fallthru
        _
      %p926 = scmp.eq.s32.totalorder %s19, 1
      %p927 = pnand %p926, %p708
      %p928 = pneg %p927
      // Predicated region
      $region45: #{dcgan_discriminator.6} parent=35 // pred_check
        _
      $region46: #{dcgan_discriminator.6} parent=35 // pred_check_branch
        %930 = sbr.rel (%p927) target = $region48
      $region47: #{dcgan_discriminator.6} parent=35 // pred_region
        %v931 = vld [vmem:[#allocation2] sm:$0x1]
        %v932 = vmul.f32 %v931, 0.001953125
        %v933 = vld [vmem:[#allocation3] sm:$0x1]
        %v934 = vmul.f32 %v933, 0.001953125
        %v935 = vmul.f32 %v932, %v932
        %v936 = vsub.f32 %v934, %v935
        %v937 = vmax.f32 %v936, 0.0
        %v938 = vld [vmem:[%s2] sm:$0x1]
        %v939 = vadd.f32 %v937, 1e-05
        %v940 = vrsqrt.pop %v939
        %v941 = vmul.f32 %v940, %v939
        %v942 = vmul.f32 %v941, %v940
        %v943 = vmul.f32 0.5, %v942
        %v944 = vsub.f32 1.5, %v943
        %v945 = vmul.f32 %v940, %v944
        %vm946 = vweird.f32 %v939
        %vm947 = vweird.f32 %v940
        %vm948 = vmor %vm946, %vm947
        %v949 = vsel %vm948, %v940, %v945
        %v950 = vmul.f32 %v938, %v949
        %951 = vst [vmem:[#allocation4] sm:$0x1] %v950
        %v952 = vld [vmem:[%s3] sm:$0x1]
        %v953 = vmul.f32 %v932, %v950
        %v954 = vsub.f32 %v952, %v953
        %955 = vst [vmem:[#allocation5] sm:$0x1] %v954
      $region48: #{dcgan_discriminator.6} parent=35 // pred_fallthru
        _
      // Predicated region
      $region49: #{dcgan_discriminator.6} parent=35 // pred_check
        %p956 = pneg %p926
      $region50: #{dcgan_discriminator.6} parent=35 // pred_check_branch
        %958 = sbr.rel (%p956) target = $region52
      $region51: #{dcgan_discriminator.6} parent=35 // pred_region
        %v959 = vld [vmem:[#allocation4] sm:$0x1]
        %v961 = vperm.slane %v959, 0
        %v963 = vmul.f32 %v548, %v961
        %v964 = vmul.f32 %v550, %v961
        %v965 = vmul.f32 %v553, %v961
        %v966 = vmul.f32 %v555, %v961
        %v967 = vmul.f32 %v558, %v961
        %v968 = vmul.f32 %v560, %v961
        %v969 = vmul.f32 %v563, %v961
        %v970 = vmul.f32 %v565, %v961
        %v971 = vmul.f32 %v568, %v961
        %v972 = vmul.f32 %v570, %v961
        %v973 = vmul.f32 %v573, %v961
        %v974 = vmul.f32 %v575, %v961
        %v975 = vmul.f32 %v578, %v961
        %v976 = vmul.f32 %v580, %v961
        %v977 = vmul.f32 %v583, %v961
        %v978 = vmul.f32 %v585, %v961
        %v979 = vmul.f32 %v588, %v961
        %v980 = vmul.f32 %v590, %v961
        %v981 = vmul.f32 %v593, %v961
        %v982 = vmul.f32 %v595, %v961
        %v983 = vmul.f32 %v598, %v961
        %v984 = vmul.f32 %v600, %v961
        %v985 = vmul.f32 %v603, %v961
        %v986 = vmul.f32 %v605, %v961
        %v987 = vmul.f32 %v608, %v961
        %v988 = vmul.f32 %v610, %v961
        %v989 = vmul.f32 %v613, %v961
        %v990 = vmul.f32 %v615, %v961
        %v991 = vmul.f32 %v618, %v961
        %v992 = vmul.f32 %v620, %v961
        %v993 = vmul.f32 %v623, %v961
        %v994 = vmul.f32 %v625, %v961
        %v995 = vmul.f32 %v628, %v961
        %v996 = vmul.f32 %v630, %v961
        %v997 = vmul.f32 %v633, %v961
        %v998 = vmul.f32 %v635, %v961
        %v999 = vmul.f32 %v638, %v961
        %v1000 = vmul.f32 %v640, %v961
        %v1001 = vmul.f32 %v643, %v961
        %v1002 = vmul.f32 %v645, %v961
        %v1003 = vmul.f32 %v648, %v961
        %v1004 = vmul.f32 %v650, %v961
        %v1005 = vmul.f32 %v653, %v961
        %v1006 = vmul.f32 %v655, %v961
        %v1007 = vmul.f32 %v658, %v961
        %v1008 = vmul.f32 %v660, %v961
        %v1009 = vmul.f32 %v663, %v961
        %v1010 = vmul.f32 %v665, %v961
        %v1011 = vmul.f32 %v668, %v961
        %v1012 = vmul.f32 %v670, %v961
        %v1013 = vmul.f32 %v673, %v961
        %v1014 = vmul.f32 %v675, %v961
        %v1015 = vmul.f32 %v678, %v961
        %v1016 = vmul.f32 %v680, %v961
        %v1017 = vmul.f32 %v683, %v961
        %v1018 = vmul.f32 %v685, %v961
        %v1019 = vmul.f32 %v688, %v961
        %v1020 = vmul.f32 %v690, %v961
        %v1021 = vmul.f32 %v693, %v961
        %v1022 = vmul.f32 %v695, %v961
        %v1023 = vmul.f32 %v698, %v961
        %v1024 = vmul.f32 %v700, %v961
        %v1025 = vmul.f32 %v703, %v961
        %v1026 = vmul.f32 %v705, %v961
        %v1027 = vld [vmem:[#allocation5] sm:$0x1]
        %v1029 = vperm.slane %v1027, 0
        %v1031 = vadd.f32 %v963, %v1029
        %v1032 = vadd.f32 %v964, %v1029
        %v1033 = vadd.f32 %v965, %v1029
        %v1034 = vadd.f32 %v966, %v1029
        %v1035 = vadd.f32 %v967, %v1029
        %v1036 = vadd.f32 %v968, %v1029
        %v1037 = vadd.f32 %v969, %v1029
        %v1038 = vadd.f32 %v970, %v1029
        %v1039 = vadd.f32 %v971, %v1029
        %v1040 = vadd.f32 %v972, %v1029
        %v1041 = vadd.f32 %v973, %v1029
        %v1042 = vadd.f32 %v974, %v1029
        %v1043 = vadd.f32 %v975, %v1029
        %v1044 = vadd.f32 %v976, %v1029
        %v1045 = vadd.f32 %v977, %v1029
        %v1046 = vadd.f32 %v978, %v1029
        %v1047 = vadd.f32 %v979, %v1029
        %v1048 = vadd.f32 %v980, %v1029
        %v1049 = vadd.f32 %v981, %v1029
        %v1050 = vadd.f32 %v982, %v1029
        %v1051 = vadd.f32 %v983, %v1029
        %v1052 = vadd.f32 %v984, %v1029
        %v1053 = vadd.f32 %v985, %v1029
        %v1054 = vadd.f32 %v986, %v1029
        %v1055 = vadd.f32 %v987, %v1029
        %v1056 = vadd.f32 %v988, %v1029
        %v1057 = vadd.f32 %v989, %v1029
        %v1058 = vadd.f32 %v990, %v1029
        %v1059 = vadd.f32 %v991, %v1029
        %v1060 = vadd.f32 %v992, %v1029
        %v1061 = vadd.f32 %v993, %v1029
        %v1062 = vadd.f32 %v994, %v1029
        %v1063 = vadd.f32 %v995, %v1029
        %v1064 = vadd.f32 %v996, %v1029
        %v1065 = vadd.f32 %v997, %v1029
        %v1066 = vadd.f32 %v998, %v1029
        %v1067 = vadd.f32 %v999, %v1029
        %v1068 = vadd.f32 %v1000, %v1029
        %v1069 = vadd.f32 %v1001, %v1029
        %v1070 = vadd.f32 %v1002, %v1029
        %v1071 = vadd.f32 %v1003, %v1029
        %v1072 = vadd.f32 %v1004, %v1029
        %v1073 = vadd.f32 %v1005, %v1029
        %v1074 = vadd.f32 %v1006, %v1029
        %v1075 = vadd.f32 %v1007, %v1029
        %v1076 = vadd.f32 %v1008, %v1029
        %v1077 = vadd.f32 %v1009, %v1029
        %v1078 = vadd.f32 %v1010, %v1029
        %v1079 = vadd.f32 %v1011, %v1029
        %v1080 = vadd.f32 %v1012, %v1029
        %v1081 = vadd.f32 %v1013, %v1029
        %v1082 = vadd.f32 %v1014, %v1029
        %v1083 = vadd.f32 %v1015, %v1029
        %v1084 = vadd.f32 %v1016, %v1029
        %v1085 = vadd.f32 %v1017, %v1029
        %v1086 = vadd.f32 %v1018, %v1029
        %v1087 = vadd.f32 %v1019, %v1029
        %v1088 = vadd.f32 %v1020, %v1029
        %v1089 = vadd.f32 %v1021, %v1029
        %v1090 = vadd.f32 %v1022, %v1029
        %v1091 = vadd.f32 %v1023, %v1029
        %v1092 = vadd.f32 %v1024, %v1029
        %v1093 = vadd.f32 %v1025, %v1029
        %v1094 = vadd.f32 %v1026, %v1029
        %vm1095 = vcmp.gt.f32.partialorder %v1031, 0.0
        %vm1096 = vcmp.gt.f32.partialorder %v1032, 0.0
        %vm1097 = vcmp.gt.f32.partialorder %v1033, 0.0
        %vm1098 = vcmp.gt.f32.partialorder %v1034, 0.0
        %vm1099 = vcmp.gt.f32.partialorder %v1035, 0.0
        %vm1100 = vcmp.gt.f32.partialorder %v1036, 0.0
        %vm1101 = vcmp.gt.f32.partialorder %v1037, 0.0
        %vm1102 = vcmp.gt.f32.partialorder %v1038, 0.0
        %vm1103 = vcmp.gt.f32.partialorder %v1039, 0.0
        %vm1104 = vcmp.gt.f32.partialorder %v1040, 0.0
        %vm1105 = vcmp.gt.f32.partialorder %v1041, 0.0
        %vm1106 = vcmp.gt.f32.partialorder %v1042, 0.0
        %vm1107 = vcmp.gt.f32.partialorder %v1043, 0.0
        %vm1108 = vcmp.gt.f32.partialorder %v1044, 0.0
        %vm1109 = vcmp.gt.f32.partialorder %v1045, 0.0
        %vm1110 = vcmp.gt.f32.partialorder %v1046, 0.0
        %vm1111 = vcmp.gt.f32.partialorder %v1047, 0.0
        %vm1112 = vcmp.gt.f32.partialorder %v1048, 0.0
        %vm1113 = vcmp.gt.f32.partialorder %v1049, 0.0
        %vm1114 = vcmp.gt.f32.partialorder %v1050, 0.0
        %vm1115 = vcmp.gt.f32.partialorder %v1051, 0.0
        %vm1116 = vcmp.gt.f32.partialorder %v1052, 0.0
        %vm1117 = vcmp.gt.f32.partialorder %v1053, 0.0
        %vm1118 = vcmp.gt.f32.partialorder %v1054, 0.0
        %vm1119 = vcmp.gt.f32.partialorder %v1055, 0.0
        %vm1120 = vcmp.gt.f32.partialorder %v1056, 0.0
        %vm1121 = vcmp.gt.f32.partialorder %v1057, 0.0
        %vm1122 = vcmp.gt.f32.partialorder %v1058, 0.0
        %vm1123 = vcmp.gt.f32.partialorder %v1059, 0.0
        %vm1124 = vcmp.gt.f32.partialorder %v1060, 0.0
        %vm1125 = vcmp.gt.f32.partialorder %v1061, 0.0
        %vm1126 = vcmp.gt.f32.partialorder %v1062, 0.0
        %vm1127 = vcmp.gt.f32.partialorder %v1063, 0.0
        %vm1128 = vcmp.gt.f32.partialorder %v1064, 0.0
        %vm1129 = vcmp.gt.f32.partialorder %v1065, 0.0
        %vm1130 = vcmp.gt.f32.partialorder %v1066, 0.0
        %vm1131 = vcmp.gt.f32.partialorder %v1067, 0.0
        %vm1132 = vcmp.gt.f32.partialorder %v1068, 0.0
        %vm1133 = vcmp.gt.f32.partialorder %v1069, 0.0
        %vm1134 = vcmp.gt.f32.partialorder %v1070, 0.0
        %vm1135 = vcmp.gt.f32.partialorder %v1071, 0.0
        %vm1136 = vcmp.gt.f32.partialorder %v1072, 0.0
        %vm1137 = vcmp.gt.f32.partialorder %v1073, 0.0
        %vm1138 = vcmp.gt.f32.partialorder %v1074, 0.0
        %vm1139 = vcmp.gt.f32.partialorder %v1075, 0.0
        %vm1140 = vcmp.gt.f32.partialorder %v1076, 0.0
        %vm1141 = vcmp.gt.f32.partialorder %v1077, 0.0
        %vm1142 = vcmp.gt.f32.partialorder %v1078, 0.0
        %vm1143 = vcmp.gt.f32.partialorder %v1079, 0.0
        %vm1144 = vcmp.gt.f32.partialorder %v1080, 0.0
        %vm1145 = vcmp.gt.f32.partialorder %v1081, 0.0
        %vm1146 = vcmp.gt.f32.partialorder %v1082, 0.0
        %vm1147 = vcmp.gt.f32.partialorder %v1083, 0.0
        %vm1148 = vcmp.gt.f32.partialorder %v1084, 0.0
        %vm1149 = vcmp.gt.f32.partialorder %v1085, 0.0
        %vm1150 = vcmp.gt.f32.partialorder %v1086, 0.0
        %vm1151 = vcmp.gt.f32.partialorder %v1087, 0.0
        %vm1152 = vcmp.gt.f32.partialorder %v1088, 0.0
        %vm1153 = vcmp.gt.f32.partialorder %v1089, 0.0
        %vm1154 = vcmp.gt.f32.partialorder %v1090, 0.0
        %vm1155 = vcmp.gt.f32.partialorder %v1091, 0.0
        %vm1156 = vcmp.gt.f32.partialorder %v1092, 0.0
        %vm1157 = vcmp.gt.f32.partialorder %v1093, 0.0
        %vm1158 = vcmp.gt.f32.partialorder %v1094, 0.0
        %v1159 = vmul.f32 %v1031, 0.2
        %v1160 = vmul.f32 %v1032, 0.2
        %v1161 = vmul.f32 %v1033, 0.2
        %v1162 = vmul.f32 %v1034, 0.2
        %v1163 = vmul.f32 %v1035, 0.2
        %v1164 = vmul.f32 %v1036, 0.2
        %v1165 = vmul.f32 %v1037, 0.2
        %v1166 = vmul.f32 %v1038, 0.2
        %v1167 = vmul.f32 %v1039, 0.2
        %v1168 = vmul.f32 %v1040, 0.2
        %v1169 = vmul.f32 %v1041, 0.2
        %v1170 = vmul.f32 %v1042, 0.2
        %v1171 = vmul.f32 %v1043, 0.2
        %v1172 = vmul.f32 %v1044, 0.2
        %v1173 = vmul.f32 %v1045, 0.2
        %v1174 = vmul.f32 %v1046, 0.2
        %v1175 = vmul.f32 %v1047, 0.2
        %v1176 = vmul.f32 %v1048, 0.2
        %v1177 = vmul.f32 %v1049, 0.2
        %v1178 = vmul.f32 %v1050, 0.2
        %v1179 = vmul.f32 %v1051, 0.2
        %v1180 = vmul.f32 %v1052, 0.2
        %v1181 = vmul.f32 %v1053, 0.2
        %v1182 = vmul.f32 %v1054, 0.2
        %v1183 = vmul.f32 %v1055, 0.2
        %v1184 = vmul.f32 %v1056, 0.2
        %v1185 = vmul.f32 %v1057, 0.2
        %v1186 = vmul.f32 %v1058, 0.2
        %v1187 = vmul.f32 %v1059, 0.2
        %v1188 = vmul.f32 %v1060, 0.2
        %v1189 = vmul.f32 %v1061, 0.2
        %v1190 = vmul.f32 %v1062, 0.2
        %v1191 = vmul.f32 %v1063, 0.2
        %v1192 = vmul.f32 %v1064, 0.2
        %v1193 = vmul.f32 %v1065, 0.2
        %v1194 = vmul.f32 %v1066, 0.2
        %v1195 = vmul.f32 %v1067, 0.2
        %v1196 = vmul.f32 %v1068, 0.2
        %v1197 = vmul.f32 %v1069, 0.2
        %v1198 = vmul.f32 %v1070, 0.2
        %v1199 = vmul.f32 %v1071, 0.2
        %v1200 = vmul.f32 %v1072, 0.2
        %v1201 = vmul.f32 %v1073, 0.2
        %v1202 = vmul.f32 %v1074, 0.2
        %v1203 = vmul.f32 %v1075, 0.2
        %v1204 = vmul.f32 %v1076, 0.2
        %v1205 = vmul.f32 %v1077, 0.2
        %v1206 = vmul.f32 %v1078, 0.2
        %v1207 = vmul.f32 %v1079, 0.2
        %v1208 = vmul.f32 %v1080, 0.2
        %v1209 = vmul.f32 %v1081, 0.2
        %v1210 = vmul.f32 %v1082, 0.2
        %v1211 = vmul.f32 %v1083, 0.2
        %v1212 = vmul.f32 %v1084, 0.2
        %v1213 = vmul.f32 %v1085, 0.2
        %v1214 = vmul.f32 %v1086, 0.2
        %v1215 = vmul.f32 %v1087, 0.2
        %v1216 = vmul.f32 %v1088, 0.2
        %v1217 = vmul.f32 %v1089, 0.2
        %v1218 = vmul.f32 %v1090, 0.2
        %v1219 = vmul.f32 %v1091, 0.2
        %v1220 = vmul.f32 %v1092, 0.2
        %v1221 = vmul.f32 %v1093, 0.2
        %v1222 = vmul.f32 %v1094, 0.2
        %v1223 = vsel %vm1095, %v1031, %v1159
        %v1224 = vsel %vm1096, %v1032, %v1160
        %v1225 = vsel %vm1097, %v1033, %v1161
        %v1226 = vsel %vm1098, %v1034, %v1162
        %v1227 = vsel %vm1099, %v1035, %v1163
        %v1228 = vsel %vm1100, %v1036, %v1164
        %v1229 = vsel %vm1101, %v1037, %v1165
        %v1230 = vsel %vm1102, %v1038, %v1166
        %v1231 = vsel %vm1103, %v1039, %v1167
        %v1232 = vsel %vm1104, %v1040, %v1168
        %v1233 = vsel %vm1105, %v1041, %v1169
        %v1234 = vsel %vm1106, %v1042, %v1170
        %v1235 = vsel %vm1107, %v1043, %v1171
        %v1236 = vsel %vm1108, %v1044, %v1172
        %v1237 = vsel %vm1109, %v1045, %v1173
        %v1238 = vsel %vm1110, %v1046, %v1174
        %v1239 = vsel %vm1111, %v1047, %v1175
        %v1240 = vsel %vm1112, %v1048, %v1176
        %v1241 = vsel %vm1113, %v1049, %v1177
        %v1242 = vsel %vm1114, %v1050, %v1178
        %v1243 = vsel %vm1115, %v1051, %v1179
        %v1244 = vsel %vm1116, %v1052, %v1180
        %v1245 = vsel %vm1117, %v1053, %v1181
        %v1246 = vsel %vm1118, %v1054, %v1182
        %v1247 = vsel %vm1119, %v1055, %v1183
        %v1248 = vsel %vm1120, %v1056, %v1184
        %v1249 = vsel %vm1121, %v1057, %v1185
        %v1250 = vsel %vm1122, %v1058, %v1186
        %v1251 = vsel %vm1123, %v1059, %v1187
        %v1252 = vsel %vm1124, %v1060, %v1188
        %v1253 = vsel %vm1125, %v1061, %v1189
        %v1254 = vsel %vm1126, %v1062, %v1190
        %v1255 = vsel %vm1127, %v1063, %v1191
        %v1256 = vsel %vm1128, %v1064, %v1192
        %v1257 = vsel %vm1129, %v1065, %v1193
        %v1258 = vsel %vm1130, %v1066, %v1194
        %v1259 = vsel %vm1131, %v1067, %v1195
        %v1260 = vsel %vm1132, %v1068, %v1196
        %v1261 = vsel %vm1133, %v1069, %v1197
        %v1262 = vsel %vm1134, %v1070, %v1198
        %v1263 = vsel %vm1135, %v1071, %v1199
        %v1264 = vsel %vm1136, %v1072, %v1200
        %v1265 = vsel %vm1137, %v1073, %v1201
        %v1266 = vsel %vm1138, %v1074, %v1202
        %v1267 = vsel %vm1139, %v1075, %v1203
        %v1268 = vsel %vm1140, %v1076, %v1204
        %v1269 = vsel %vm1141, %v1077, %v1205
        %v1270 = vsel %vm1142, %v1078, %v1206
        %v1271 = vsel %vm1143, %v1079, %v1207
        %v1272 = vsel %vm1144, %v1080, %v1208
        %v1273 = vsel %vm1145, %v1081, %v1209
        %v1274 = vsel %vm1146, %v1082, %v1210
        %v1275 = vsel %vm1147, %v1083, %v1211
        %v1276 = vsel %vm1148, %v1084, %v1212
        %v1277 = vsel %vm1149, %v1085, %v1213
        %v1278 = vsel %vm1150, %v1086, %v1214
        %v1279 = vsel %vm1151, %v1087, %v1215
        %v1280 = vsel %vm1152, %v1088, %v1216
        %v1281 = vsel %vm1153, %v1089, %v1217
        %v1282 = vsel %vm1154, %v1090, %v1218
        %v1283 = vsel %vm1155, %v1091, %v1219
        %v1284 = vsel %vm1156, %v1092, %v1220
        %v1285 = vsel %vm1157, %v1093, %v1221
        %v1286 = vsel %vm1158, %v1094, %v1222
        %v1287 = vpack.c.bf16 %v1223, %v1223
        %v1288 = vpack.c.bf16 %v1224, %v1224
        %v1289 = vpack.c.bf16 %v1225, %v1225
        %v1290 = vpack.c.bf16 %v1226, %v1226
        %v1291 = vpack.c.bf16 %v1227, %v1227
        %v1292 = vpack.c.bf16 %v1228, %v1228
        %v1293 = vpack.c.bf16 %v1229, %v1229
        %v1294 = vpack.c.bf16 %v1230, %v1230
        %v1295 = vpack.c.bf16 %v1231, %v1231
        %v1296 = vpack.c.bf16 %v1232, %v1232
        %v1297 = vpack.c.bf16 %v1233, %v1233
        %v1298 = vpack.c.bf16 %v1234, %v1234
        %v1299 = vpack.c.bf16 %v1235, %v1235
        %v1300 = vpack.c.bf16 %v1236, %v1236
        %v1301 = vpack.c.bf16 %v1237, %v1237
        %v1302 = vpack.c.bf16 %v1238, %v1238
        %v1303 = vpack.c.bf16 %v1239, %v1239
        %v1304 = vpack.c.bf16 %v1240, %v1240
        %v1305 = vpack.c.bf16 %v1241, %v1241
        %v1306 = vpack.c.bf16 %v1242, %v1242
        %v1307 = vpack.c.bf16 %v1243, %v1243
        %v1308 = vpack.c.bf16 %v1244, %v1244
        %v1309 = vpack.c.bf16 %v1245, %v1245
        %v1310 = vpack.c.bf16 %v1246, %v1246
        %v1311 = vpack.c.bf16 %v1247, %v1247
        %v1312 = vpack.c.bf16 %v1248, %v1248
        %v1313 = vpack.c.bf16 %v1249, %v1249
        %v1314 = vpack.c.bf16 %v1250, %v1250
        %v1315 = vpack.c.bf16 %v1251, %v1251
        %v1316 = vpack.c.bf16 %v1252, %v1252
        %v1317 = vpack.c.bf16 %v1253, %v1253
        %v1318 = vpack.c.bf16 %v1254, %v1254
        %v1319 = vpack.c.bf16 %v1255, %v1255
        %v1320 = vpack.c.bf16 %v1256, %v1256
        %v1321 = vpack.c.bf16 %v1257, %v1257
        %v1322 = vpack.c.bf16 %v1258, %v1258
        %v1323 = vpack.c.bf16 %v1259, %v1259
        %v1324 = vpack.c.bf16 %v1260, %v1260
        %v1325 = vpack.c.bf16 %v1261, %v1261
        %v1326 = vpack.c.bf16 %v1262, %v1262
        %v1327 = vpack.c.bf16 %v1263, %v1263
        %v1328 = vpack.c.bf16 %v1264, %v1264
        %v1329 = vpack.c.bf16 %v1265, %v1265
        %v1330 = vpack.c.bf16 %v1266, %v1266
        %v1331 = vpack.c.bf16 %v1267, %v1267
        %v1332 = vpack.c.bf16 %v1268, %v1268
        %v1333 = vpack.c.bf16 %v1269, %v1269
        %v1334 = vpack.c.bf16 %v1270, %v1270
        %v1335 = vpack.c.bf16 %v1271, %v1271
        %v1336 = vpack.c.bf16 %v1272, %v1272
        %v1337 = vpack.c.bf16 %v1273, %v1273
        %v1338 = vpack.c.bf16 %v1274, %v1274
        %v1339 = vpack.c.bf16 %v1275, %v1275
        %v1340 = vpack.c.bf16 %v1276, %v1276
        %v1341 = vpack.c.bf16 %v1277, %v1277
        %v1342 = vpack.c.bf16 %v1278, %v1278
        %v1343 = vpack.c.bf16 %v1279, %v1279
        %v1344 = vpack.c.bf16 %v1280, %v1280
        %v1345 = vpack.c.bf16 %v1281, %v1281
        %v1346 = vpack.c.bf16 %v1282, %v1282
        %v1347 = vpack.c.bf16 %v1283, %v1283
        %v1348 = vpack.c.bf16 %v1284, %v1284
        %v1349 = vpack.c.bf16 %v1285, %v1285
        %v1350 = vpack.c.bf16 %v1286, %v1286
        %1351 = vst [vmem:[%s215] sm:$0xf] %v1287
        %1352 = vst [vmem:[%s215 + $0x4] sm:$0xf] %v1288
        %1353 = vst [vmem:[%s215 + $0x8] sm:$0xf] %v1289
        %1354 = vst [vmem:[%s215 + $0xc] sm:$0xf] %v1290
        %1355 = vst [vmem:[%s215 + $0x10] sm:$0xf] %v1291
        %1356 = vst [vmem:[%s215 + $0x14] sm:$0xf] %v1292
        %1357 = vst [vmem:[%s215 + $0x18] sm:$0xf] %v1293
        %1358 = vst [vmem:[%s215 + $0x1c] sm:$0xf] %v1294
        %1359 = vst [vmem:[%s215 + $0x20] sm:$0xf] %v1295
        %1360 = vst [vmem:[%s215 + $0x24] sm:$0xf] %v1296
        %1361 = vst [vmem:[%s215 + $0x28] sm:$0xf] %v1297
        %1362 = vst [vmem:[%s215 + $0x2c] sm:$0xf] %v1298
        %1363 = vst [vmem:[%s215 + $0x30] sm:$0xf] %v1299
        %1364 = vst [vmem:[%s215 + $0x34] sm:$0xf] %v1300
        %1365 = vst [vmem:[%s215 + $0x38] sm:$0xf] %v1301
        %1366 = vst [vmem:[%s215 + $0x3c] sm:$0xf] %v1302
        %1367 = vst [vmem:[%s215 + $0x40] sm:$0xf] %v1303
        %1368 = vst [vmem:[%s215 + $0x44] sm:$0xf] %v1304
        %1369 = vst [vmem:[%s215 + $0x48] sm:$0xf] %v1305
        %1370 = vst [vmem:[%s215 + $0x4c] sm:$0xf] %v1306
        %1371 = vst [vmem:[%s215 + $0x50] sm:$0xf] %v1307
        %1372 = vst [vmem:[%s215 + $0x54] sm:$0xf] %v1308
        %1373 = vst [vmem:[%s215 + $0x58] sm:$0xf] %v1309
        %1374 = vst [vmem:[%s215 + $0x5c] sm:$0xf] %v1310
        %1375 = vst [vmem:[%s215 + $0x60] sm:$0xf] %v1311
        %1376 = vst [vmem:[%s215 + $0x64] sm:$0xf] %v1312
        %1377 = vst [vmem:[%s215 + $0x68] sm:$0xf] %v1313
        %1378 = vst [vmem:[%s215 + $0x6c] sm:$0xf] %v1314
        %1379 = vst [vmem:[%s215 + $0x70] sm:$0xf] %v1315
        %1380 = vst [vmem:[%s215 + $0x74] sm:$0xf] %v1316
        %1381 = vst [vmem:[%s215 + $0x78] sm:$0xf] %v1317
        %1382 = vst [vmem:[%s215 + $0x7c] sm:$0xf] %v1318
        %1383 = vst [vmem:[%s215 + $0x80] sm:$0xf] %v1319
        %1384 = vst [vmem:[%s215 + $0x84] sm:$0xf] %v1320
        %1385 = vst [vmem:[%s215 + $0x88] sm:$0xf] %v1321
        %1386 = vst [vmem:[%s215 + $0x8c] sm:$0xf] %v1322
        %1387 = vst [vmem:[%s215 + $0x90] sm:$0xf] %v1323
        %1388 = vst [vmem:[%s215 + $0x94] sm:$0xf] %v1324
        %1389 = vst [vmem:[%s215 + $0x98] sm:$0xf] %v1325
        %1390 = vst [vmem:[%s215 + $0x9c] sm:$0xf] %v1326
        %1391 = vst [vmem:[%s215 + $0xa0] sm:$0xf] %v1327
        %1392 = vst [vmem:[%s215 + $0xa4] sm:$0xf] %v1328
        %1393 = vst [vmem:[%s215 + $0xa8] sm:$0xf] %v1329
        %1394 = vst [vmem:[%s215 + $0xac] sm:$0xf] %v1330
        %1395 = vst [vmem:[%s215 + $0xb0] sm:$0xf] %v1331
        %1396 = vst [vmem:[%s215 + $0xb4] sm:$0xf] %v1332
        %1397 = vst [vmem:[%s215 + $0xb8] sm:$0xf] %v1333
        %1398 = vst [vmem:[%s215 + $0xbc] sm:$0xf] %v1334
        %1399 = vst [vmem:[%s215 + $0xc0] sm:$0xf] %v1335
        %1400 = vst [vmem:[%s215 + $0xc4] sm:$0xf] %v1336
        %1401 = vst [vmem:[%s215 + $0xc8] sm:$0xf] %v1337
        %1402 = vst [vmem:[%s215 + $0xcc] sm:$0xf] %v1338
        %1403 = vst [vmem:[%s215 + $0xd0] sm:$0xf] %v1339
        %1404 = vst [vmem:[%s215 + $0xd4] sm:$0xf] %v1340
        %1405 = vst [vmem:[%s215 + $0xd8] sm:$0xf] %v1341
        %1406 = vst [vmem:[%s215 + $0xdc] sm:$0xf] %v1342
        %1407 = vst [vmem:[%s215 + $0xe0] sm:$0xf] %v1343
        %1408 = vst [vmem:[%s215 + $0xe4] sm:$0xf] %v1344
        %1409 = vst [vmem:[%s215 + $0xe8] sm:$0xf] %v1345
        %1410 = vst [vmem:[%s215 + $0xec] sm:$0xf] %v1346
        %1411 = vst [vmem:[%s215 + $0xf0] sm:$0xf] %v1347
        %1412 = vst [vmem:[%s215 + $0xf4] sm:$0xf] %v1348
        %1413 = vst [vmem:[%s215 + $0xf8] sm:$0xf] %v1349
        %1414 = vst [vmem:[%s215 + $0xfc] sm:$0xf] %v1350
      $region52: #{dcgan_discriminator.6} parent=35 // pred_fallthru
        _
      %s1415 = smul.u32 %s19, %s20
      %s1416 = smul.u32 64, %s1415
      %p1417 = scmp.lt.s32.totalorder %s1416, 63
      %s1418 = scalar_select %p1417, %s1416, 63
      %s1419 = smul.addr %s1418, 4
      %s1420 = scalar_lea.vmem %s4, %s1419
      // Predicated region
      $region53: #{dcgan_discriminator.6} parent=35 // pred_check
        %p1421 = pneg %p136
      $region54: #{dcgan_discriminator.6} parent=35 // pred_check_branch
        %1423 = sbr.rel (%p1421) target = $region56
      $region55: #{dcgan_discriminator.6} parent=35 // pred_region
        %s1424 = smul.u32 %s19, %s20
        %s1425 = smul.u32 64, %s1424
      $region56: #{dcgan_discriminator.6} parent=35 // pred_fallthru
        _
    $region36: #{dcgan_discriminator.6} parent=5 // pred_fallthru
      _
    %p1426 = scmp.le.s32.totalorder 2, %s10
    // Predicated region
    $region57: #{dcgan_discriminator.6} parent=5 // pred_check
      %p1427 = pneg %p1426
    $region58: #{dcgan_discriminator.6} parent=5 // pred_check_branch
      %1429 = sbr.rel (%p1427) target = $region60
    $region59: #{dcgan_discriminator.6} parent=5 // pred_region
      %s1430 = ssub.s32 %s10, 2
      // Predicated region
      $region61: #{dcgan_discriminator.6} parent=59 // pred_check
        %p1431 = pneg %p142
      $region62: #{dcgan_discriminator.6} parent=59 // pred_check_branch
        %1433 = sbr.rel (%p1431) target = $region64
      $region63: #{dcgan_discriminator.6} parent=59 // pred_region
        %s1434 = smul.u32 %s21, %s22
        %s1435 = smul.u32 64, %s1434
        %p1436 = scmp.lt.s32.totalorder %s1435, 63
        %s1437 = scalar_select %p1436, %s1435, 63
        %s1438 = smul.addr %s1437, 4
        %s1439 = scalar_lea.vmem %s4, %s1438
      $region64: #{dcgan_discriminator.6} parent=59 // pred_fallthru
        _
    $region60: #{dcgan_discriminator.6} parent=5 // pred_fallthru
      _
  $region6: #{dcgan_discriminator.6} parent=0 // loop_footer
    %s14 = sadd.s32 1, %s10
  $region7: #{dcgan_discriminator.6} parent=0 // loop_footer_branch
    %9 = sbr.rel target = $region3
  $region8: #{dcgan_discriminator.6} parent=0 // loop_exit
    _

// kernel: dcgan_discriminator.7
$region0: #{dcgan_discriminator.7}
  #allocation0 [shape = 'u32[]', space=smem, size = 0x4, offset = 0x4, fixed_abs, tag = 'smem constant byte address 0x4 - core index']
  #allocation1 [shape = 'u32[72,128]{1,0:T(1,128)}', space=vmem, size = 0x9000, scoped, tag = 'internal scratch']
  #allocation2 [shape = 'f32[1,128]{1,0:T(1,128)}', space=vmem, size = 0x200, scoped, tag = 'scratch operand']
  #allocation3 [shape = 'f32[1,128]{1,0:T(1,128)}', space=vmem, size = 0x200, scoped, tag = 'scratch operand']
  #allocation4 [shape = 'f32[1,128]{1,0:T(1,128)}', space=vmem, size = 0x200, scoped, tag = 'scratch operand']
  #allocation5 [shape = 'f32[1,128]{1,0:T(1,128)}', space=vmem, size = 0x200, scoped, tag = 'scratch operand']
  %s0 = inlined_call_operand.vmem [shape: bf16[128,256], index: 0, kind: input, shape index: {}]
  %s1 = inlined_call_operand.vmem [shape: bf16[256,128], index: 1, kind: input, shape index: {}]
  %s2 = inlined_call_operand.vmem [shape: f32[1,128], index: 2, kind: input, shape index: {}]
  %s3 = inlined_call_operand.vmem [shape: f32[1,128], index: 3, kind: input, shape index: {}]
  %s4 = inlined_call_operand.vmem [shape: bf16[128,128], index: 4, kind: output, shape index: {}]
  %s5 = sld [smem:[#allocation0]]
  $region65: #{dcgan_discriminator.7} parent=0
    _
  %s7 = ssub.s32 1, %s5
  %s8 = scalar_select 0, %s7, %s5
  loop: start=0, step=1, limit=4
  $region2: #{dcgan_discriminator.7} parent=0 // loop_pre_header
    _
  $region3: #{dcgan_discriminator.7} parent=0 // loop_header
    %s10 = sphi 0, %s14
    %p11 = scmp.ge.s32.totalorder %s10, 4
    %s17 = sphi 0, %s29
    %s18 = sphi 0, %s25
    %s19 = sphi 0, %s17
    %s20 = sphi 0, %s18
    %s21 = sphi 0, %s19
    %s22 = sphi 0, %s20
    %s32 = sphi 0, %s34
    %s35 = sphi 0, %s32
    %s36 = sphi 0, %s35
    %s52 = sphi 0, %s36
    %s56 = sphi 0, %s56
    %s58 = sphi 0, %s56
    %s59 = sphi 0, %s58
    %s73 = sphi 0, %s59
    %s77 = sphi 0, %s77
    %s79 = sphi 0, %s77
    %s80 = sphi 0, %s79
    %s94 = sphi 0, %s80
    %s98 = sphi 0, %s98
    %s100 = sphi 0, %s98
    %s101 = sphi 0, %s100
    %s115 = sphi 0, %s101
    %s123 = sphi 0, %s125
    %s126 = sphi 0, %s123
    %s127 = sphi 0, %s126
    %s143 = sphi 0, %s127
  $region4: #{dcgan_discriminator.7} parent=0 // loop_header_branch
    %13 = sbr.rel (%p11) target = $region8
  $region5: #{dcgan_discriminator.7} parent=0 // loop_body
    %s15 = ssub.s32 %s10, 1
    %s16 = ssub.s32 %s10, 2
    %s23 = sadd.s32 1, %s18
    %p24 = scmp.ge.s32.totalorder %s23, 1
    %s25 = scalar_select %p24, 0, %s23
    %s26 = sadd.s32 1, %s17
    %s27 = scalar_select %p24, %s26, %s17
    %p28 = scmp.ge.s32.totalorder %s27, 2
    %s29 = scalar_select %p28, 0, %s27
    %s30 = ssub.s32 %s18, %s25
    %p31 = scmp.eq.s32.totalorder %s30, 0
    %s33 = sadd.s32 %s32, 1
    %s34 = scalar_select %p31, %s32, %s33
    %p37 = pneg %p31
    %p38 = scmp.eq.s32.totalorder %s10, 1
    %p39 = por %p37, %p38
    %p40 = scmp.ne.s32.totalorder %s32, %s35
    %p41 = scmp.eq.s32.totalorder %s10, 0
    %p42 = por %p40, %p41
    %p43 = scmp.ne.s32.totalorder %s32, %s35
    %p44 = scmp.eq.s32.totalorder %s15, 1
    %p45 = por %p43, %p44
    %p46 = scmp.ne.s32.totalorder %s35, %s36
    %p47 = scmp.eq.s32.totalorder %s15, 0
    %p48 = por %p46, %p47
    %p49 = scmp.ne.s32.totalorder %s35, %s36
    %p50 = scmp.eq.s32.totalorder %s16, 1
    %p51 = por %p49, %p50
    %p53 = scmp.ne.s32.totalorder %s36, %s52
    %p54 = scmp.eq.s32.totalorder %s16, 0
    %p55 = por %p53, %p54
    %s57 = sadd.s32 %s56, 1
    %p60 = scmp.eq.s32.totalorder %s10, 1
    %p61 = scmp.ne.s32.totalorder %s56, %s58
    %p62 = scmp.eq.s32.totalorder %s10, 0
    %p63 = por %p61, %p62
    %p64 = scmp.ne.s32.totalorder %s56, %s58
    %p65 = scmp.eq.s32.totalorder %s15, 1
    %p66 = por %p64, %p65
    %p67 = scmp.ne.s32.totalorder %s58, %s59
    %p68 = scmp.eq.s32.totalorder %s15, 0
    %p69 = por %p67, %p68
    %p70 = scmp.ne.s32.totalorder %s58, %s59
    %p71 = scmp.eq.s32.totalorder %s16, 1
    %p72 = por %p70, %p71
    %p74 = scmp.ne.s32.totalorder %s59, %s73
    %p75 = scmp.eq.s32.totalorder %s16, 0
    %p76 = por %p74, %p75
    %s78 = sadd.s32 %s77, 1
    %p81 = scmp.eq.s32.totalorder %s10, 1
    %p82 = scmp.ne.s32.totalorder %s77, %s79
    %p83 = scmp.eq.s32.totalorder %s10, 0
    %p84 = por %p82, %p83
    %p85 = scmp.ne.s32.totalorder %s77, %s79
    %p86 = scmp.eq.s32.totalorder %s15, 1
    %p87 = por %p85, %p86
    %p88 = scmp.ne.s32.totalorder %s79, %s80
    %p89 = scmp.eq.s32.totalorder %s15, 0
    %p90 = por %p88, %p89
    %p91 = scmp.ne.s32.totalorder %s79, %s80
    %p92 = scmp.eq.s32.totalorder %s16, 1
    %p93 = por %p91, %p92
    %p95 = scmp.ne.s32.totalorder %s80, %s94
    %p96 = scmp.eq.s32.totalorder %s16, 0
    %p97 = por %p95, %p96
    %s99 = sadd.s32 %s98, 1
    %p102 = scmp.eq.s32.totalorder %s10, 1
    %p103 = scmp.ne.s32.totalorder %s98, %s100
    %p104 = scmp.eq.s32.totalorder %s10, 0
    %p105 = por %p103, %p104
    %p106 = scmp.ne.s32.totalorder %s98, %s100
    %p107 = scmp.eq.s32.totalorder %s15, 1
    %p108 = por %p106, %p107
    %p109 = scmp.ne.s32.totalorder %s100, %s101
    %p110 = scmp.eq.s32.totalorder %s15, 0
    %p111 = por %p109, %p110
    %p112 = scmp.ne.s32.totalorder %s100, %s101
    %p113 = scmp.eq.s32.totalorder %s16, 1
    %p114 = por %p112, %p113
    %p116 = scmp.ne.s32.totalorder %s101, %s115
    %p117 = scmp.eq.s32.totalorder %s16, 0
    %p118 = por %p116, %p117
    %s119 = smul.u32 %s17, %s18
    %s120 = smul.u32 %s29, %s25
    %s121 = ssub.s32 %s119, %s120
    %p122 = scmp.eq.s32.totalorder %s121, 0
    %s124 = sadd.s32 %s123, 1
    %s125 = scalar_select %p122, %s123, %s124
    %p128 = pneg %p122
    %p129 = scmp.eq.s32.totalorder %s10, 1
    %p130 = por %p128, %p129
    %p131 = scmp.ne.s32.totalorder %s123, %s126
    %p132 = scmp.eq.s32.totalorder %s10, 0
    %p133 = por %p131, %p132
    %p134 = scmp.ne.s32.totalorder %s123, %s126
    %p135 = scmp.eq.s32.totalorder %s15, 1
    %p136 = por %p134, %p135
    %p137 = scmp.ne.s32.totalorder %s126, %s127
    %p138 = scmp.eq.s32.totalorder %s15, 0
    %p139 = por %p137, %p138
    %p140 = scmp.ne.s32.totalorder %s126, %s127
    %p141 = scmp.eq.s32.totalorder %s16, 1
    %p142 = por %p140, %p141
    %p144 = scmp.ne.s32.totalorder %s127, %s143
    %p145 = scmp.eq.s32.totalorder %s16, 0
    %p146 = por %p144, %p145
    %p147 = scmp.le.s32.totalorder 1, %s10
    %p148 = scmp.lt.s32.totalorder %s10, 3
    %p149 = pnand %p147, %p148
    %p150 = pneg %p149
    // Predicated region
    $region9: #{dcgan_discriminator.7} parent=5 // pred_check
      _
    $region10: #{dcgan_discriminator.7} parent=5 // pred_check_branch
      %152 = sbr.rel (%p149) target = $region12
    $region11: #{dcgan_discriminator.7} parent=5 // pred_region
      %s153 = ssub.s32 %s10, 1
      // Predicated region
      $region13: #{dcgan_discriminator.7} parent=11 // pred_check
        %p154 = pneg %p48
      $region14: #{dcgan_discriminator.7} parent=11 // pred_check_branch
        %156 = sbr.rel (%p154) target = $region16
      $region15: #{dcgan_discriminator.7} parent=11 // pred_region
        %s157 = smul.u32 16, %s20
        %p158 = scmp.lt.s32.totalorder %s157, 15
        %s159 = scalar_select %p158, %s157, 15
        %s160 = smul.addr %s159, 2
        %s161 = smul.addr %s160, 4
        %s162 = scalar_lea.vmem %s0, %s161
        %s163 = smul.u32 16, %s20
      $region16: #{dcgan_discriminator.7} parent=11 // pred_fallthru
        _
      // Predicated region
      $region17: #{dcgan_discriminator.7} parent=11 // pred_check
        %p164 = pneg %p69
      $region18: #{dcgan_discriminator.7} parent=11 // pred_check_branch
        %166 = sbr.rel (%p164) target = $region20
      $region19: #{dcgan_discriminator.7} parent=11 // pred_region
        _
      $region20: #{dcgan_discriminator.7} parent=11 // pred_fallthru
        _
      // Predicated region
      $region21: #{dcgan_discriminator.7} parent=11 // pred_check
        %p167 = pneg %p90
      $region22: #{dcgan_discriminator.7} parent=11 // pred_check_branch
        %169 = sbr.rel (%p167) target = $region24
      $region23: #{dcgan_discriminator.7} parent=11 // pred_region
        _
      $region24: #{dcgan_discriminator.7} parent=11 // pred_fallthru
        _
      // Predicated region
      $region25: #{dcgan_discriminator.7} parent=11 // pred_check
        %p170 = pneg %p111
      $region26: #{dcgan_discriminator.7} parent=11 // pred_check_branch
        %172 = sbr.rel (%p170) target = $region28
      $region27: #{dcgan_discriminator.7} parent=11 // pred_region
        _
      $region28: #{dcgan_discriminator.7} parent=11 // pred_fallthru
        _
    $region12: #{dcgan_discriminator.7} parent=5 // pred_fallthru
      _
    %p173 = scmp.lt.s32.totalorder %s10, 2
    // Predicated region
    $region29: #{dcgan_discriminator.7} parent=5 // pred_check
      %p174 = pneg %p173
    $region30: #{dcgan_discriminator.7} parent=5 // pred_check_branch
      %176 = sbr.rel (%p174) target = $region32
    $region31: #{dcgan_discriminator.7} parent=5 // pred_region
      _
    $region32: #{dcgan_discriminator.7} parent=5 // pred_fallthru
      _
    %p177 = scmp.le.s32.totalorder 1, %s10
    %p178 = scmp.lt.s32.totalorder %s10, 3
    %p179 = pnand %p177, %p178
    %p180 = pneg %p179
    // Predicated region
    $region33: #{dcgan_discriminator.7} parent=5 // pred_check
      _
    $region34: #{dcgan_discriminator.7} parent=5 // pred_check_branch
      %182 = sbr.rel (%p179) target = $region36
    $region35: #{dcgan_discriminator.7} parent=5 // pred_region
      %s183 = ssub.s32 %s10, 1
      %s184 = smul.u32 16, %s20
      %p185 = scmp.lt.s32.totalorder %s184, 15
      %s186 = scalar_select %p185, %s184, 15
      %s187 = smul.addr %s186, 2
      %s188 = smul.addr %s187, 4
      %s189 = scalar_lea.vmem %s0, %s188
      %p190 = pneg %p48
      %p191 = pneg %p45
      %p192 = pneg %p69
      %p193 = pneg %p66
      %p194 = pneg %p90
      %p195 = pneg %p87
      %p196 = pneg %p111
      %p197 = pneg %p108
      %p198 = pneg %p139
      %p199 = pneg %p136
      %s200 = smul.u32 %s19, %s20
      %s201 = smul.u32 16, %s200
      %p202 = scmp.lt.s32.totalorder %s201, 15
      %s203 = scalar_select %p202, %s201, 15
      %s204 = smul.addr %s203, 4
      %s205 = scalar_lea.vmem %s4, %s204
      %s206 = smul.u32 16, %s20
      %p207 = scmp.lt.s32.totalorder %s206, 15
      %s208 = scalar_select %p207, %s206, 15
      %s209 = smul.addr %s208, 2
      %s210 = smul.addr %s209, 4
      %s211 = scalar_lea.vmem %s0, %s210
      %s212 = smul.u32 16, %s20
      %s213 = smul.u32 %s19, %s20
      %s214 = smul.u32 16, %s213
      %p215 = scmp.lt.s32.totalorder %s214, 15
      %s216 = scalar_select %p215, %s214, 15
      %s217 = smul.addr %s216, 4
      %s218 = scalar_lea.vmem %s4, %s217
      %s219 = smul.u32 %s19, %s20
      %s220 = smul.u32 16, %s219
      %v221 = vld [vmem:[%s211] sm:$0xff]
      %v222 = vld [vmem:[%s211 + $0x8] sm:$0xff]
      %v223 = vld [vmem:[%s211 + $0x10] sm:$0xff]
      %v224 = vld [vmem:[%s211 + $0x18] sm:$0xff]
      %v225 = vld [vmem:[%s211 + $0x20] sm:$0xff]
      %v226 = vld [vmem:[%s211 + $0x28] sm:$0xff]
      %v227 = vld [vmem:[%s211 + $0x30] sm:$0xff]
      %v228 = vld [vmem:[%s211 + $0x38] sm:$0xff]
      %v229 = vld [vmem:[%s211 + $0x40] sm:$0xff]
      %v230 = vld [vmem:[%s211 + $0x48] sm:$0xff]
      %v231 = vld [vmem:[%s211 + $0x50] sm:$0xff]
      %v232 = vld [vmem:[%s211 + $0x58] sm:$0xff]
      %v233 = vld [vmem:[%s211 + $0x60] sm:$0xff]
      %v234 = vld [vmem:[%s211 + $0x68] sm:$0xff]
      %v235 = vld [vmem:[%s211 + $0x70] sm:$0xff]
      %v236 = vld [vmem:[%s211 + $0x78] sm:$0xff]
      %v237 = vld [vmem:[%s1] sm:$0xf]
      %v238 = vld [vmem:[%s1 + $0x4] sm:$0xf]
      %v239 = vld [vmem:[%s1 + $0x8] sm:$0xf]
      %v240 = vld [vmem:[%s1 + $0xc] sm:$0xf]
      %v241 = vld [vmem:[%s1 + $0x10] sm:$0xf]
      %v242 = vld [vmem:[%s1 + $0x14] sm:$0xf]
      %v243 = vld [vmem:[%s1 + $0x18] sm:$0xf]
      %v244 = vld [vmem:[%s1 + $0x1c] sm:$0xf]
      %v245 = vld [vmem:[%s1 + $0x20] sm:$0xf]
      %v246 = vld [vmem:[%s1 + $0x24] sm:$0xf]
      %v247 = vld [vmem:[%s1 + $0x28] sm:$0xf]
      %v248 = vld [vmem:[%s1 + $0x2c] sm:$0xf]
      %v249 = vld [vmem:[%s1 + $0x30] sm:$0xf]
      %v250 = vld [vmem:[%s1 + $0x34] sm:$0xf]
      %v251 = vld [vmem:[%s1 + $0x38] sm:$0xf]
      %v252 = vld [vmem:[%s1 + $0x3c] sm:$0xf]
      %v253 = vld [vmem:[%s1 + $0x40] sm:$0xf]
      %v254 = vld [vmem:[%s1 + $0x44] sm:$0xf]
      %v255 = vld [vmem:[%s1 + $0x48] sm:$0xf]
      %v256 = vld [vmem:[%s1 + $0x4c] sm:$0xf]
      %v257 = vld [vmem:[%s1 + $0x50] sm:$0xf]
      %v258 = vld [vmem:[%s1 + $0x54] sm:$0xf]
      %v259 = vld [vmem:[%s1 + $0x58] sm:$0xf]
      %v260 = vld [vmem:[%s1 + $0x5c] sm:$0xf]
      %v261 = vld [vmem:[%s1 + $0x60] sm:$0xf]
      %v262 = vld [vmem:[%s1 + $0x64] sm:$0xf]
      %v263 = vld [vmem:[%s1 + $0x68] sm:$0xf]
      %v264 = vld [vmem:[%s1 + $0x6c] sm:$0xf]
      %v265 = vld [vmem:[%s1 + $0x70] sm:$0xf]
      %v266 = vld [vmem:[%s1 + $0x74] sm:$0xf]
      %v267 = vld [vmem:[%s1 + $0x78] sm:$0xf]
      %v268 = vld [vmem:[%s1 + $0x7c] sm:$0xf]
      %v285 = vunpack.c.l.b16 %v221
      %v286 = vunpack.c.h.b16 %v221
      %v287 = vunpack.c.l.b16 %v222
      %v288 = vunpack.c.h.b16 %v222
      %v289 = vunpack.c.l.b16 %v223
      %v290 = vunpack.c.h.b16 %v223
      %v291 = vunpack.c.l.b16 %v224
      %v292 = vunpack.c.h.b16 %v224
      %v293 = vunpack.c.l.b16 %v225
      %v294 = vunpack.c.h.b16 %v225
      %v295 = vunpack.c.l.b16 %v226
      %v296 = vunpack.c.h.b16 %v226
      %v297 = vunpack.c.l.b16 %v227
      %v298 = vunpack.c.h.b16 %v227
      %v299 = vunpack.c.l.b16 %v228
      %v300 = vunpack.c.h.b16 %v228
      %v301 = vunpack.c.l.b16 %v229
      %v302 = vunpack.c.h.b16 %v229
      %v303 = vunpack.c.l.b16 %v230
      %v304 = vunpack.c.h.b16 %v230
      %v305 = vunpack.c.l.b16 %v231
      %v306 = vunpack.c.h.b16 %v231
      %v307 = vunpack.c.l.b16 %v232
      %v308 = vunpack.c.h.b16 %v232
      %v309 = vunpack.c.l.b16 %v233
      %v310 = vunpack.c.h.b16 %v233
      %v311 = vunpack.c.l.b16 %v234
      %v312 = vunpack.c.h.b16 %v234
      %v313 = vunpack.c.l.b16 %v235
      %v314 = vunpack.c.h.b16 %v235
      %v315 = vunpack.c.l.b16 %v236
      %v316 = vunpack.c.h.b16 %v236
      %v317 = vpack.c.b16 %v287, %v285
      %v318 = vpack.c.b16 %v288, %v286
      %v319 = vpack.c.b16 %v291, %v289
      %v320 = vpack.c.b16 %v292, %v290
      %v321 = vpack.c.b16 %v295, %v293
      %v322 = vpack.c.b16 %v296, %v294
      %v323 = vpack.c.b16 %v299, %v297
      %v324 = vpack.c.b16 %v300, %v298
      %v325 = vpack.c.b16 %v303, %v301
      %v326 = vpack.c.b16 %v304, %v302
      %v327 = vpack.c.b16 %v307, %v305
      %v328 = vpack.c.b16 %v308, %v306
      %v329 = vpack.c.b16 %v311, %v309
      %v330 = vpack.c.b16 %v312, %v310
      %v331 = vpack.c.b16 %v315, %v313
      %v332 = vpack.c.b16 %v316, %v314
      %v381 = vunpack.c.l.b16 %v237
      %v382 = vunpack.c.l.b16 %v238
      %v383 = vunpack.c.l.b16 %v239
      %v384 = vunpack.c.l.b16 %v240
      %v385 = vunpack.c.l.b16 %v241
      %v386 = vunpack.c.l.b16 %v242
      %v387 = vunpack.c.l.b16 %v243
      %v388 = vunpack.c.l.b16 %v244
      %v389 = vunpack.c.l.b16 %v245
      %v390 = vunpack.c.l.b16 %v246
      %v391 = vunpack.c.l.b16 %v247
      %v392 = vunpack.c.l.b16 %v248
      %v393 = vunpack.c.l.b16 %v249
      %v394 = vunpack.c.l.b16 %v250
      %v395 = vunpack.c.l.b16 %v251
      %v396 = vunpack.c.l.b16 %v252
      %v397 = vunpack.c.l.b16 %v253
      %v398 = vunpack.c.l.b16 %v254
      %v399 = vunpack.c.l.b16 %v255
      %v400 = vunpack.c.l.b16 %v256
      %v401 = vunpack.c.l.b16 %v257
      %v402 = vunpack.c.l.b16 %v258
      %v403 = vunpack.c.l.b16 %v259
      %v404 = vunpack.c.l.b16 %v260
      %v405 = vunpack.c.l.b16 %v261
      %v406 = vunpack.c.l.b16 %v262
      %v407 = vunpack.c.l.b16 %v263
      %v408 = vunpack.c.l.b16 %v264
      %v409 = vunpack.c.l.b16 %v265
      %v410 = vunpack.c.l.b16 %v266
      %v411 = vunpack.c.l.b16 %v267
      %v412 = vunpack.c.l.b16 %v268
      %v413 = vpack.c.b16 %v382, %v381
      %v414 = vpack.c.b16 %v384, %v383
      %v415 = vpack.c.b16 %v386, %v385
      %v416 = vpack.c.b16 %v388, %v387
      %v417 = vpack.c.b16 %v390, %v389
      %v418 = vpack.c.b16 %v392, %v391
      %v419 = vpack.c.b16 %v394, %v393
      %v420 = vpack.c.b16 %v396, %v395
      %v421 = vpack.c.b16 %v398, %v397
      %v422 = vpack.c.b16 %v400, %v399
      %v423 = vpack.c.b16 %v402, %v401
      %v424 = vpack.c.b16 %v404, %v403
      %v425 = vpack.c.b16 %v406, %v405
      %v426 = vpack.c.b16 %v408, %v407
      %v427 = vpack.c.b16 %v410, %v409
      %v428 = vpack.c.b16 %v412, %v411
      %445 = vmatpush.bf16.msra.mxu0 %v420
      %446 = vmatpush.bf16.msra.mxu0 %v419
      %447 = vmatpush.bf16.msra.mxu0 %v418
      %448 = vmatpush.bf16.msra.mxu0 %v417
      %449 = vmatpush.bf16.msra.mxu0 %v416
      %450 = vmatpush.bf16.msra.mxu0 %v415
      %451 = vmatpush.bf16.msra.mxu0 %v414
      %452 = vmatpush.bf16.msra.mxu0 %v413
      %453 = vmatmul.bf16.gmra.mxu0 %v317
      %v454 = vpop.f32.mrf.mxu0
      %v455 = vadd.f32 0.0, %v454
      %v456 = vpop.f32.mrf.mxu0
      %v457 = vadd.f32 0.0, %v456
      %458 = vmatmul.bf16.gmra.mxu0 %v319
      %v459 = vpop.f32.mrf.mxu0
      %v460 = vadd.f32 0.0, %v459
      %v461 = vpop.f32.mrf.mxu0
      %v462 = vadd.f32 0.0, %v461
      %463 = vmatmul.bf16.gmra.mxu0 %v321
      %v464 = vpop.f32.mrf.mxu0
      %v465 = vadd.f32 0.0, %v464
      %v466 = vpop.f32.mrf.mxu0
      %v467 = vadd.f32 0.0, %v466
      %468 = vmatmul.bf16.gmra.mxu0 %v323
      %v469 = vpop.f32.mrf.mxu0
      %v470 = vadd.f32 0.0, %v469
      %v471 = vpop.f32.mrf.mxu0
      %v472 = vadd.f32 0.0, %v471
      %473 = vmatmul.bf16.gmra.mxu0 %v325
      %v474 = vpop.f32.mrf.mxu0
      %v475 = vadd.f32 0.0, %v474
      %v476 = vpop.f32.mrf.mxu0
      %v477 = vadd.f32 0.0, %v476
      %478 = vmatmul.bf16.gmra.mxu0 %v327
      %v479 = vpop.f32.mrf.mxu0
      %v480 = vadd.f32 0.0, %v479
      %v481 = vpop.f32.mrf.mxu0
      %v482 = vadd.f32 0.0, %v481
      %483 = vmatmul.bf16.gmra.mxu0 %v329
      %v484 = vpop.f32.mrf.mxu0
      %v485 = vadd.f32 0.0, %v484
      %v486 = vpop.f32.mrf.mxu0
      %v487 = vadd.f32 0.0, %v486
      %488 = vmatmul.bf16.gmra.mxu0 %v331
      %v489 = vpop.f32.mrf.mxu0
      %v490 = vadd.f32 0.0, %v489
      %v491 = vpop.f32.mrf.mxu0
      %v492 = vadd.f32 0.0, %v491
      %493 = vdwg.mxu0
      %494 = vmatpush.bf16.msra.mxu0 %v428
      %495 = vmatpush.bf16.msra.mxu0 %v427
      %496 = vmatpush.bf16.msra.mxu0 %v426
      %497 = vmatpush.bf16.msra.mxu0 %v425
      %498 = vmatpush.bf16.msra.mxu0 %v424
      %499 = vmatpush.bf16.msra.mxu0 %v423
      %500 = vmatpush.bf16.msra.mxu0 %v422
      %501 = vmatpush.bf16.msra.mxu0 %v421
      %502 = vmatmul.bf16.gmra.mxu0 %v318
      %v503 = vpop.f32.mrf.mxu0
      %v504 = vadd.f32 %v455, %v503
      %v505 = vpop.f32.mrf.mxu0
      %v506 = vadd.f32 %v457, %v505
      %507 = vmatmul.bf16.gmra.mxu0 %v320
      %v508 = vpop.f32.mrf.mxu0
      %v509 = vadd.f32 %v460, %v508
      %v510 = vpop.f32.mrf.mxu0
      %v511 = vadd.f32 %v462, %v510
      %512 = vmatmul.bf16.gmra.mxu0 %v322
      %v513 = vpop.f32.mrf.mxu0
      %v514 = vadd.f32 %v465, %v513
      %v515 = vpop.f32.mrf.mxu0
      %v516 = vadd.f32 %v467, %v515
      %517 = vmatmul.bf16.gmra.mxu0 %v324
      %v518 = vpop.f32.mrf.mxu0
      %v519 = vadd.f32 %v470, %v518
      %v520 = vpop.f32.mrf.mxu0
      %v521 = vadd.f32 %v472, %v520
      %522 = vmatmul.bf16.gmra.mxu0 %v326
      %v523 = vpop.f32.mrf.mxu0
      %v524 = vadd.f32 %v475, %v523
      %v525 = vpop.f32.mrf.mxu0
      %v526 = vadd.f32 %v477, %v525
      %527 = vmatmul.bf16.gmra.mxu0 %v328
      %v528 = vpop.f32.mrf.mxu0
      %v529 = vadd.f32 %v480, %v528
      %v530 = vpop.f32.mrf.mxu0
      %v531 = vadd.f32 %v482, %v530
      %532 = vmatmul.bf16.gmra.mxu0 %v330
      %v533 = vpop.f32.mrf.mxu0
      %v534 = vadd.f32 %v485, %v533
      %v535 = vpop.f32.mrf.mxu0
      %v536 = vadd.f32 %v487, %v535
      %537 = vmatmul.bf16.gmra.mxu0 %v332
      %v538 = vpop.f32.mrf.mxu0
      %v539 = vadd.f32 %v490, %v538
      %v540 = vpop.f32.mrf.mxu0
      %v541 = vadd.f32 %v492, %v540
      %542 = vdwg.mxu0
      %p543 = scmp.eq.s32.totalorder %s19, 0
      %p544 = scmp.eq.s32.totalorder %s20, 0
      %p545 = pnand %p543, %p544
      %p546 = pneg %p545
      // Predicated region
      $region37: #{dcgan_discriminator.7} parent=35 // pred_check
        _
      $region38: #{dcgan_discriminator.7} parent=35 // pred_check_branch
        %548 = sbr.rel (%p545) target = $region40
      $region39: #{dcgan_discriminator.7} parent=35 // pred_region
        %549 = vst [vmem:[#allocation2] sm:$0x1] 0.0
        %550 = vst [vmem:[#allocation3] sm:$0x1] 0.0
      $region40: #{dcgan_discriminator.7} parent=35 // pred_fallthru
        _
      // Predicated region
      $region41: #{dcgan_discriminator.7} parent=35 // pred_check
        %p551 = pneg %p543
      $region42: #{dcgan_discriminator.7} parent=35 // pred_check_branch
        %553 = sbr.rel (%p551) target = $region44
      $region43: #{dcgan_discriminator.7} parent=35 // pred_region
        %v554 = vld [vmem:[#allocation2] sm:$0x1]
        %v555 = vadd.f32 %v504, %v506
        %v556 = vadd.f32 %v555, %v509
        %v557 = vadd.f32 %v556, %v511
        %v558 = vadd.f32 %v557, %v514
        %v559 = vadd.f32 %v558, %v516
        %v560 = vadd.f32 %v559, %v519
        %v561 = vadd.f32 %v560, %v521
        %v562 = vadd.f32 %v561, %v524
        %v563 = vadd.f32 %v562, %v526
        %v564 = vadd.f32 %v563, %v529
        %v565 = vadd.f32 %v564, %v531
        %v566 = vadd.f32 %v565, %v534
        %v567 = vadd.f32 %v566, %v536
        %v568 = vadd.f32 %v567, %v539
        %v569 = vadd.f32 %v568, %v541
        %v570 = vrot.slane %v569, 4
        %v571 = vadd.f32 %v569, %v570
        %v572 = vrot.slane %v571, 2
        %v573 = vadd.f32 %v571, %v572
        %v574 = vrot.slane %v573, 1
        %v575 = vadd.f32 %v573, %v574
        %v576 = vadd.f32 %v554, %v575
        %577 = vst [vmem:[#allocation2] sm:$0x1] %v576
        %v578 = vld [vmem:[#allocation3] sm:$0x1]
        %v579 = vmul.f32 %v504, %v504
        %v580 = vmul.f32 %v506, %v506
        %v581 = vmul.f32 %v509, %v509
        %v582 = vmul.f32 %v511, %v511
        %v583 = vmul.f32 %v514, %v514
        %v584 = vmul.f32 %v516, %v516
        %v585 = vmul.f32 %v519, %v519
        %v586 = vmul.f32 %v521, %v521
        %v587 = vmul.f32 %v524, %v524
        %v588 = vmul.f32 %v526, %v526
        %v589 = vmul.f32 %v529, %v529
        %v590 = vmul.f32 %v531, %v531
        %v591 = vmul.f32 %v534, %v534
        %v592 = vmul.f32 %v536, %v536
        %v593 = vmul.f32 %v539, %v539
        %v594 = vmul.f32 %v541, %v541
        %v595 = vadd.f32 %v579, %v580
        %v596 = vadd.f32 %v595, %v581
        %v597 = vadd.f32 %v596, %v582
        %v598 = vadd.f32 %v597, %v583
        %v599 = vadd.f32 %v598, %v584
        %v600 = vadd.f32 %v599, %v585
        %v601 = vadd.f32 %v600, %v586
        %v602 = vadd.f32 %v601, %v587
        %v603 = vadd.f32 %v602, %v588
        %v604 = vadd.f32 %v603, %v589
        %v605 = vadd.f32 %v604, %v590
        %v606 = vadd.f32 %v605, %v591
        %v607 = vadd.f32 %v606, %v592
        %v608 = vadd.f32 %v607, %v593
        %v609 = vadd.f32 %v608, %v594
        %v610 = vrot.slane %v609, 4
        %v611 = vadd.f32 %v609, %v610
        %v612 = vrot.slane %v611, 2
        %v613 = vadd.f32 %v611, %v612
        %v614 = vrot.slane %v613, 1
        %v615 = vadd.f32 %v613, %v614
        %v616 = vadd.f32 %v578, %v615
        %617 = vst [vmem:[#allocation3] sm:$0x1] %v616
      $region44: #{dcgan_discriminator.7} parent=35 // pred_fallthru
        _
      %p618 = scmp.eq.s32.totalorder %s19, 1
      %p619 = pnand %p618, %p544
      %p620 = pneg %p619
      // Predicated region
      $region45: #{dcgan_discriminator.7} parent=35 // pred_check
        _
      $region46: #{dcgan_discriminator.7} parent=35 // pred_check_branch
        %622 = sbr.rel (%p619) target = $region48
      $region47: #{dcgan_discriminator.7} parent=35 // pred_region
        %v623 = vld [vmem:[#allocation2] sm:$0x1]
        %v624 = vmul.f32 %v623, 0.0078125
        %v625 = vld [vmem:[#allocation3] sm:$0x1]
        %v626 = vmul.f32 %v625, 0.0078125
        %v627 = vmul.f32 %v624, %v624
        %v628 = vsub.f32 %v626, %v627
        %v629 = vmax.f32 %v628, 0.0
        %v630 = vld [vmem:[%s2] sm:$0x1]
        %v631 = vadd.f32 %v629, 1e-05
        %v632 = vrsqrt.pop %v631
        %v633 = vmul.f32 %v632, %v631
        %v634 = vmul.f32 %v633, %v632
        %v635 = vmul.f32 0.5, %v634
        %v636 = vsub.f32 1.5, %v635
        %v637 = vmul.f32 %v632, %v636
        %vm638 = vweird.f32 %v631
        %vm639 = vweird.f32 %v632
        %vm640 = vmor %vm638, %vm639
        %v641 = vsel %vm640, %v632, %v637
        %v642 = vmul.f32 %v630, %v641
        %643 = vst [vmem:[#allocation4] sm:$0x1] %v642
        %v644 = vld [vmem:[%s3] sm:$0x1]
        %v645 = vmul.f32 %v624, %v642
        %v646 = vsub.f32 %v644, %v645
        %647 = vst [vmem:[#allocation5] sm:$0x1] %v646
      $region48: #{dcgan_discriminator.7} parent=35 // pred_fallthru
        _
      // Predicated region
      $region49: #{dcgan_discriminator.7} parent=35 // pred_check
        %p648 = pneg %p618
      $region50: #{dcgan_discriminator.7} parent=35 // pred_check_branch
        %650 = sbr.rel (%p648) target = $region52
      $region51: #{dcgan_discriminator.7} parent=35 // pred_region
        %v651 = vld [vmem:[#allocation4] sm:$0x1]
        %v653 = vperm.slane %v651, 0
        %v655 = vmul.f32 %v504, %v653
        %v656 = vmul.f32 %v506, %v653
        %v657 = vmul.f32 %v509, %v653
        %v658 = vmul.f32 %v511, %v653
        %v659 = vmul.f32 %v514, %v653
        %v660 = vmul.f32 %v516, %v653
        %v661 = vmul.f32 %v519, %v653
        %v662 = vmul.f32 %v521, %v653
        %v663 = vmul.f32 %v524, %v653
        %v664 = vmul.f32 %v526, %v653
        %v665 = vmul.f32 %v529, %v653
        %v666 = vmul.f32 %v531, %v653
        %v667 = vmul.f32 %v534, %v653
        %v668 = vmul.f32 %v536, %v653
        %v669 = vmul.f32 %v539, %v653
        %v670 = vmul.f32 %v541, %v653
        %v671 = vld [vmem:[#allocation5] sm:$0x1]
        %v673 = vperm.slane %v671, 0
        %v675 = vadd.f32 %v655, %v673
        %v676 = vadd.f32 %v656, %v673
        %v677 = vadd.f32 %v657, %v673
        %v678 = vadd.f32 %v658, %v673
        %v679 = vadd.f32 %v659, %v673
        %v680 = vadd.f32 %v660, %v673
        %v681 = vadd.f32 %v661, %v673
        %v682 = vadd.f32 %v662, %v673
        %v683 = vadd.f32 %v663, %v673
        %v684 = vadd.f32 %v664, %v673
        %v685 = vadd.f32 %v665, %v673
        %v686 = vadd.f32 %v666, %v673
        %v687 = vadd.f32 %v667, %v673
        %v688 = vadd.f32 %v668, %v673
        %v689 = vadd.f32 %v669, %v673
        %v690 = vadd.f32 %v670, %v673
        %vm691 = vcmp.gt.f32.partialorder %v675, 0.0
        %vm692 = vcmp.gt.f32.partialorder %v676, 0.0
        %vm693 = vcmp.gt.f32.partialorder %v677, 0.0
        %vm694 = vcmp.gt.f32.partialorder %v678, 0.0
        %vm695 = vcmp.gt.f32.partialorder %v679, 0.0
        %vm696 = vcmp.gt.f32.partialorder %v680, 0.0
        %vm697 = vcmp.gt.f32.partialorder %v681, 0.0
        %vm698 = vcmp.gt.f32.partialorder %v682, 0.0
        %vm699 = vcmp.gt.f32.partialorder %v683, 0.0
        %vm700 = vcmp.gt.f32.partialorder %v684, 0.0
        %vm701 = vcmp.gt.f32.partialorder %v685, 0.0
        %vm702 = vcmp.gt.f32.partialorder %v686, 0.0
        %vm703 = vcmp.gt.f32.partialorder %v687, 0.0
        %vm704 = vcmp.gt.f32.partialorder %v688, 0.0
        %vm705 = vcmp.gt.f32.partialorder %v689, 0.0
        %vm706 = vcmp.gt.f32.partialorder %v690, 0.0
        %v707 = vmul.f32 %v675, 0.2
        %v708 = vmul.f32 %v676, 0.2
        %v709 = vmul.f32 %v677, 0.2
        %v710 = vmul.f32 %v678, 0.2
        %v711 = vmul.f32 %v679, 0.2
        %v712 = vmul.f32 %v680, 0.2
        %v713 = vmul.f32 %v681, 0.2
        %v714 = vmul.f32 %v682, 0.2
        %v715 = vmul.f32 %v683, 0.2
        %v716 = vmul.f32 %v684, 0.2
        %v717 = vmul.f32 %v685, 0.2
        %v718 = vmul.f32 %v686, 0.2
        %v719 = vmul.f32 %v687, 0.2
        %v720 = vmul.f32 %v688, 0.2
        %v721 = vmul.f32 %v689, 0.2
        %v722 = vmul.f32 %v690, 0.2
        %v723 = vsel %vm691, %v675, %v707
        %v724 = vsel %vm692, %v676, %v708
        %v725 = vsel %vm693, %v677, %v709
        %v726 = vsel %vm694, %v678, %v710
        %v727 = vsel %vm695, %v679, %v711
        %v728 = vsel %vm696, %v680, %v712
        %v729 = vsel %vm697, %v681, %v713
        %v730 = vsel %vm698, %v682, %v714
        %v731 = vsel %vm699, %v683, %v715
        %v732 = vsel %vm700, %v684, %v716
        %v733 = vsel %vm701, %v685, %v717
        %v734 = vsel %vm702, %v686, %v718
        %v735 = vsel %vm703, %v687, %v719
        %v736 = vsel %vm704, %v688, %v720
        %v737 = vsel %vm705, %v689, %v721
        %v738 = vsel %vm706, %v690, %v722
        %v739 = vpack.c.bf16 %v723, %v723
        %v740 = vpack.c.bf16 %v724, %v724
        %v741 = vpack.c.bf16 %v725, %v725
        %v742 = vpack.c.bf16 %v726, %v726
        %v743 = vpack.c.bf16 %v727, %v727
        %v744 = vpack.c.bf16 %v728, %v728
        %v745 = vpack.c.bf16 %v729, %v729
        %v746 = vpack.c.bf16 %v730, %v730
        %v747 = vpack.c.bf16 %v731, %v731
        %v748 = vpack.c.bf16 %v732, %v732
        %v749 = vpack.c.bf16 %v733, %v733
        %v750 = vpack.c.bf16 %v734, %v734
        %v751 = vpack.c.bf16 %v735, %v735
        %v752 = vpack.c.bf16 %v736, %v736
        %v753 = vpack.c.bf16 %v737, %v737
        %v754 = vpack.c.bf16 %v738, %v738
        %755 = vst [vmem:[%s218] sm:$0xf] %v739
        %756 = vst [vmem:[%s218 + $0x4] sm:$0xf] %v740
        %757 = vst [vmem:[%s218 + $0x8] sm:$0xf] %v741
        %758 = vst [vmem:[%s218 + $0xc] sm:$0xf] %v742
        %759 = vst [vmem:[%s218 + $0x10] sm:$0xf] %v743
        %760 = vst [vmem:[%s218 + $0x14] sm:$0xf] %v744
        %761 = vst [vmem:[%s218 + $0x18] sm:$0xf] %v745
        %762 = vst [vmem:[%s218 + $0x1c] sm:$0xf] %v746
        %763 = vst [vmem:[%s218 + $0x20] sm:$0xf] %v747
        %764 = vst [vmem:[%s218 + $0x24] sm:$0xf] %v748
        %765 = vst [vmem:[%s218 + $0x28] sm:$0xf] %v749
        %766 = vst [vmem:[%s218 + $0x2c] sm:$0xf] %v750
        %767 = vst [vmem:[%s218 + $0x30] sm:$0xf] %v751
        %768 = vst [vmem:[%s218 + $0x34] sm:$0xf] %v752
        %769 = vst [vmem:[%s218 + $0x38] sm:$0xf] %v753
        %770 = vst [vmem:[%s218 + $0x3c] sm:$0xf] %v754
      $region52: #{dcgan_discriminator.7} parent=35 // pred_fallthru
        _
      %s771 = smul.u32 %s19, %s20
      %s772 = smul.u32 16, %s771
      %p773 = scmp.lt.s32.totalorder %s772, 15
      %s774 = scalar_select %p773, %s772, 15
      %s775 = smul.addr %s774, 4
      %s776 = scalar_lea.vmem %s4, %s775
      // Predicated region
      $region53: #{dcgan_discriminator.7} parent=35 // pred_check
        %p777 = pneg %p136
      $region54: #{dcgan_discriminator.7} parent=35 // pred_check_branch
        %779 = sbr.rel (%p777) target = $region56
      $region55: #{dcgan_discriminator.7} parent=35 // pred_region
        %s780 = smul.u32 %s19, %s20
        %s781 = smul.u32 16, %s780
      $region56: #{dcgan_discriminator.7} parent=35 // pred_fallthru
        _
    $region36: #{dcgan_discriminator.7} parent=5 // pred_fallthru
      _
    %p782 = scmp.le.s32.totalorder 2, %s10
    // Predicated region
    $region57: #{dcgan_discriminator.7} parent=5 // pred_check
      %p783 = pneg %p782
    $region58: #{dcgan_discriminator.7} parent=5 // pred_check_branch
      %785 = sbr.rel (%p783) target = $region60
    $region59: #{dcgan_discriminator.7} parent=5 // pred_region
      %s786 = ssub.s32 %s10, 2
      // Predicated region
      $region61: #{dcgan_discriminator.7} parent=59 // pred_check
        %p787 = pneg %p142
      $region62: #{dcgan_discriminator.7} parent=59 // pred_check_branch
        %789 = sbr.rel (%p787) target = $region64
      $region63: #{dcgan_discriminator.7} parent=59 // pred_region
        %s790 = smul.u32 %s21, %s22
        %s791 = smul.u32 16, %s790
        %p792 = scmp.lt.s32.totalorder %s791, 15
        %s793 = scalar_select %p792, %s791, 15
        %s794 = smul.addr %s793, 4
        %s795 = scalar_lea.vmem %s4, %s794
      $region64: #{dcgan_discriminator.7} parent=59 // pred_fallthru
        _
    $region60: #{dcgan_discriminator.7} parent=5 // pred_fallthru
      _
  $region6: #{dcgan_discriminator.7} parent=0 // loop_footer
    %s14 = sadd.s32 1, %s10
  $region7: #{dcgan_discriminator.7} parent=0 // loop_footer_branch
    %9 = sbr.rel target = $region3
  $region8: #{dcgan_discriminator.7} parent=0 // loop_exit
    _

// kernel: dcgan_discriminator.8
$region0: #{dcgan_discriminator.8}
  #allocation0 [shape = 'u32[]', space=smem, size = 0x4, offset = 0x4, fixed_abs, tag = 'smem constant byte address 0x4 - core index']
  #allocation1 [shape = 'u32[72,128]{1,0:T(1,128)}', space=vmem, size = 0x9000, scoped, tag = 'internal scratch']
  #allocation2 [shape = 'f32[1,128]{1,0:T(1,128)}', space=vmem, size = 0x200, scoped, tag = 'scratch operand']
  #allocation3 [shape = 'f32[1,128]{1,0:T(1,128)}', space=vmem, size = 0x200, scoped, tag = 'scratch operand']
  #allocation4 [shape = 'f32[1,128]{1,0:T(1,128)}', space=vmem, size = 0x200, scoped, tag = 'scratch operand']
  #allocation5 [shape = 'f32[1,128]{1,0:T(1,128)}', space=vmem, size = 0x200, scoped, tag = 'scratch operand']
  %s0 = inlined_call_operand.vmem [shape: bf16[32,512], index: 0, kind: input, shape index: {}]
  %s1 = inlined_call_operand.vmem [shape: bf16[512,128], index: 1, kind: input, shape index: {}]
  %s2 = inlined_call_operand.vmem [shape: f32[1,128], index: 2, kind: input, shape index: {}]
  %s3 = inlined_call_operand.vmem [shape: f32[1,128], index: 3, kind: input, shape index: {}]
  %s4 = inlined_call_operand.vmem [shape: bf16[32,128], index: 4, kind: output, shape index: {}]
  %s5 = sld [smem:[#allocation0]]
  $region65: #{dcgan_discriminator.8} parent=0
    _
  %s7 = ssub.s32 1, %s5
  %s8 = scalar_select 0, %s7, %s5
  loop: start=0, step=1, limit=4
  $region2: #{dcgan_discriminator.8} parent=0 // loop_pre_header
    _
  $region3: #{dcgan_discriminator.8} parent=0 // loop_header
    %s10 = sphi 0, %s14
    %p11 = scmp.ge.s32.totalorder %s10, 4
    %s17 = sphi 0, %s29
    %s18 = sphi 0, %s25
    %s19 = sphi 0, %s17
    %s20 = sphi 0, %s18
    %s21 = sphi 0, %s19
    %s22 = sphi 0, %s20
    %s32 = sphi 0, %s34
    %s35 = sphi 0, %s32
    %s36 = sphi 0, %s35
    %s52 = sphi 0, %s36
    %s56 = sphi 0, %s56
    %s58 = sphi 0, %s56
    %s59 = sphi 0, %s58
    %s73 = sphi 0, %s59
    %s77 = sphi 0, %s77
    %s79 = sphi 0, %s77
    %s80 = sphi 0, %s79
    %s94 = sphi 0, %s80
    %s98 = sphi 0, %s98
    %s100 = sphi 0, %s98
    %s101 = sphi 0, %s100
    %s115 = sphi 0, %s101
    %s123 = sphi 0, %s125
    %s126 = sphi 0, %s123
    %s127 = sphi 0, %s126
    %s143 = sphi 0, %s127
  $region4: #{dcgan_discriminator.8} parent=0 // loop_header_branch
    %13 = sbr.rel (%p11) target = $region8
  $region5: #{dcgan_discriminator.8} parent=0 // loop_body
    %s15 = ssub.s32 %s10, 1
    %s16 = ssub.s32 %s10, 2
    %s23 = sadd.s32 1, %s18
    %p24 = scmp.ge.s32.totalorder %s23, 1
    %s25 = scalar_select %p24, 0, %s23
    %s26 = sadd.s32 1, %s17
    %s27 = scalar_select %p24, %s26, %s17
    %p28 = scmp.ge.s32.totalorder %s27, 2
    %s29 = scalar_select %p28, 0, %s27
    %s30 = ssub.s32 %s18, %s25
    %p31 = scmp.eq.s32.totalorder %s30, 0
    %s33 = sadd.s32 %s32, 1
    %s34 = scalar_select %p31, %s32, %s33
    %p37 = pneg %p31
    %p38 = scmp.eq.s32.totalorder %s10, 1
    %p39 = por %p37, %p38
    %p40 = scmp.ne.s32.totalorder %s32, %s35
    %p41 = scmp.eq.s32.totalorder %s10, 0
    %p42 = por %p40, %p41
    %p43 = scmp.ne.s32.totalorder %s32, %s35
    %p44 = scmp.eq.s32.totalorder %s15, 1
    %p45 = por %p43, %p44
    %p46 = scmp.ne.s32.totalorder %s35, %s36
    %p47 = scmp.eq.s32.totalorder %s15, 0
    %p48 = por %p46, %p47
    %p49 = scmp.ne.s32.totalorder %s35, %s36
    %p50 = scmp.eq.s32.totalorder %s16, 1
    %p51 = por %p49, %p50
    %p53 = scmp.ne.s32.totalorder %s36, %s52
    %p54 = scmp.eq.s32.totalorder %s16, 0
    %p55 = por %p53, %p54
    %s57 = sadd.s32 %s56, 1
    %p60 = scmp.eq.s32.totalorder %s10, 1
    %p61 = scmp.ne.s32.totalorder %s56, %s58
    %p62 = scmp.eq.s32.totalorder %s10, 0
    %p63 = por %p61, %p62
    %p64 = scmp.ne.s32.totalorder %s56, %s58
    %p65 = scmp.eq.s32.totalorder %s15, 1
    %p66 = por %p64, %p65
    %p67 = scmp.ne.s32.totalorder %s58, %s59
    %p68 = scmp.eq.s32.totalorder %s15, 0
    %p69 = por %p67, %p68
    %p70 = scmp.ne.s32.totalorder %s58, %s59
    %p71 = scmp.eq.s32.totalorder %s16, 1
    %p72 = por %p70, %p71
    %p74 = scmp.ne.s32.totalorder %s59, %s73
    %p75 = scmp.eq.s32.totalorder %s16, 0
    %p76 = por %p74, %p75
    %s78 = sadd.s32 %s77, 1
    %p81 = scmp.eq.s32.totalorder %s10, 1
    %p82 = scmp.ne.s32.totalorder %s77, %s79
    %p83 = scmp.eq.s32.totalorder %s10, 0
    %p84 = por %p82, %p83
    %p85 = scmp.ne.s32.totalorder %s77, %s79
    %p86 = scmp.eq.s32.totalorder %s15, 1
    %p87 = por %p85, %p86
    %p88 = scmp.ne.s32.totalorder %s79, %s80
    %p89 = scmp.eq.s32.totalorder %s15, 0
    %p90 = por %p88, %p89
    %p91 = scmp.ne.s32.totalorder %s79, %s80
    %p92 = scmp.eq.s32.totalorder %s16, 1
    %p93 = por %p91, %p92
    %p95 = scmp.ne.s32.totalorder %s80, %s94
    %p96 = scmp.eq.s32.totalorder %s16, 0
    %p97 = por %p95, %p96
    %s99 = sadd.s32 %s98, 1
    %p102 = scmp.eq.s32.totalorder %s10, 1
    %p103 = scmp.ne.s32.totalorder %s98, %s100
    %p104 = scmp.eq.s32.totalorder %s10, 0
    %p105 = por %p103, %p104
    %p106 = scmp.ne.s32.totalorder %s98, %s100
    %p107 = scmp.eq.s32.totalorder %s15, 1
    %p108 = por %p106, %p107
    %p109 = scmp.ne.s32.totalorder %s100, %s101
    %p110 = scmp.eq.s32.totalorder %s15, 0
    %p111 = por %p109, %p110
    %p112 = scmp.ne.s32.totalorder %s100, %s101
    %p113 = scmp.eq.s32.totalorder %s16, 1
    %p114 = por %p112, %p113
    %p116 = scmp.ne.s32.totalorder %s101, %s115
    %p117 = scmp.eq.s32.totalorder %s16, 0
    %p118 = por %p116, %p117
    %s119 = smul.u32 %s17, %s18
    %s120 = smul.u32 %s29, %s25
    %s121 = ssub.s32 %s119, %s120
    %p122 = scmp.eq.s32.totalorder %s121, 0
    %s124 = sadd.s32 %s123, 1
    %s125 = scalar_select %p122, %s123, %s124
    %p128 = pneg %p122
    %p129 = scmp.eq.s32.totalorder %s10, 1
    %p130 = por %p128, %p129
    %p131 = scmp.ne.s32.totalorder %s123, %s126
    %p132 = scmp.eq.s32.totalorder %s10, 0
    %p133 = por %p131, %p132
    %p134 = scmp.ne.s32.totalorder %s123, %s126
    %p135 = scmp.eq.s32.totalorder %s15, 1
    %p136 = por %p134, %p135
    %p137 = scmp.ne.s32.totalorder %s126, %s127
    %p138 = scmp.eq.s32.totalorder %s15, 0
    %p139 = por %p137, %p138
    %p140 = scmp.ne.s32.totalorder %s126, %s127
    %p141 = scmp.eq.s32.totalorder %s16, 1
    %p142 = por %p140, %p141
    %p144 = scmp.ne.s32.totalorder %s127, %s143
    %p145 = scmp.eq.s32.totalorder %s16, 0
    %p146 = por %p144, %p145
    %p147 = scmp.le.s32.totalorder 1, %s10
    %p148 = scmp.lt.s32.totalorder %s10, 3
    %p149 = pnand %p147, %p148
    %p150 = pneg %p149
    // Predicated region
    $region9: #{dcgan_discriminator.8} parent=5 // pred_check
      _
    $region10: #{dcgan_discriminator.8} parent=5 // pred_check_branch
      %152 = sbr.rel (%p149) target = $region12
    $region11: #{dcgan_discriminator.8} parent=5 // pred_region
      %s153 = ssub.s32 %s10, 1
      // Predicated region
      $region13: #{dcgan_discriminator.8} parent=11 // pred_check
        %p154 = pneg %p48
      $region14: #{dcgan_discriminator.8} parent=11 // pred_check_branch
        %156 = sbr.rel (%p154) target = $region16
      $region15: #{dcgan_discriminator.8} parent=11 // pred_region
        %s157 = smul.u32 4, %s20
        %p158 = scmp.lt.s32.totalorder %s157, 3
        %s159 = scalar_select %p158, %s157, 3
        %s160 = smul.addr %s159, 4
        %s161 = smul.addr %s160, 4
        %s162 = scalar_lea.vmem %s0, %s161
        %s163 = smul.u32 4, %s20
      $region16: #{dcgan_discriminator.8} parent=11 // pred_fallthru
        _
      // Predicated region
      $region17: #{dcgan_discriminator.8} parent=11 // pred_check
        %p164 = pneg %p69
      $region18: #{dcgan_discriminator.8} parent=11 // pred_check_branch
        %166 = sbr.rel (%p164) target = $region20
      $region19: #{dcgan_discriminator.8} parent=11 // pred_region
        _
      $region20: #{dcgan_discriminator.8} parent=11 // pred_fallthru
        _
      // Predicated region
      $region21: #{dcgan_discriminator.8} parent=11 // pred_check
        %p167 = pneg %p90
      $region22: #{dcgan_discriminator.8} parent=11 // pred_check_branch
        %169 = sbr.rel (%p167) target = $region24
      $region23: #{dcgan_discriminator.8} parent=11 // pred_region
        _
      $region24: #{dcgan_discriminator.8} parent=11 // pred_fallthru
        _
      // Predicated region
      $region25: #{dcgan_discriminator.8} parent=11 // pred_check
        %p170 = pneg %p111
      $region26: #{dcgan_discriminator.8} parent=11 // pred_check_branch
        %172 = sbr.rel (%p170) target = $region28
      $region27: #{dcgan_discriminator.8} parent=11 // pred_region
        _
      $region28: #{dcgan_discriminator.8} parent=11 // pred_fallthru
        _
    $region12: #{dcgan_discriminator.8} parent=5 // pred_fallthru
      _
    %p173 = scmp.lt.s32.totalorder %s10, 2
    // Predicated region
    $region29: #{dcgan_discriminator.8} parent=5 // pred_check
      %p174 = pneg %p173
    $region30: #{dcgan_discriminator.8} parent=5 // pred_check_branch
      %176 = sbr.rel (%p174) target = $region32
    $region31: #{dcgan_discriminator.8} parent=5 // pred_region
      _
    $region32: #{dcgan_discriminator.8} parent=5 // pred_fallthru
      _
    %p177 = scmp.le.s32.totalorder 1, %s10
    %p178 = scmp.lt.s32.totalorder %s10, 3
    %p179 = pnand %p177, %p178
    %p180 = pneg %p179
    // Predicated region
    $region33: #{dcgan_discriminator.8} parent=5 // pred_check
      _
    $region34: #{dcgan_discriminator.8} parent=5 // pred_check_branch
      %182 = sbr.rel (%p179) target = $region36
    $region35: #{dcgan_discriminator.8} parent=5 // pred_region
      %s183 = ssub.s32 %s10, 1
      %s184 = smul.u32 4, %s20
      %p185 = scmp.lt.s32.totalorder %s184, 3
      %s186 = scalar_select %p185, %s184, 3
      %s187 = smul.addr %s186, 4
      %s188 = smul.addr %s187, 4
      %s189 = scalar_lea.vmem %s0, %s188
      %p190 = pneg %p48
      %p191 = pneg %p45
      %p192 = pneg %p69
      %p193 = pneg %p66
      %p194 = pneg %p90
      %p195 = pneg %p87
      %p196 = pneg %p111
      %p197 = pneg %p108
      %p198 = pneg %p139
      %p199 = pneg %p136
      %s200 = smul.u32 %s19, %s20
      %s201 = smul.u32 4, %s200
      %p202 = scmp.lt.s32.totalorder %s201, 3
      %s203 = scalar_select %p202, %s201, 3
      %s204 = smul.addr %s203, 4
      %s205 = scalar_lea.vmem %s4, %s204
      %s206 = smul.u32 4, %s20
      %p207 = scmp.lt.s32.totalorder %s206, 3
      %s208 = scalar_select %p207, %s206, 3
      %s209 = smul.addr %s208, 4
      %s210 = smul.addr %s209, 4
      %s211 = scalar_lea.vmem %s0, %s210
      %s212 = smul.u32 4, %s20
      %s213 = smul.u32 %s19, %s20
      %s214 = smul.u32 4, %s213
      %p215 = scmp.lt.s32.totalorder %s214, 3
      %s216 = scalar_select %p215, %s214, 3
      %s217 = smul.addr %s216, 4
      %s218 = scalar_lea.vmem %s4, %s217
      %s219 = smul.u32 %s19, %s20
      %s220 = smul.u32 4, %s219
      %v221 = vld [vmem:[%s211] sm:$0xff]
      %v222 = vld [vmem:[%s211 + $0x8] sm:$0xff]
      %v223 = vld [vmem:[%s211 + $0x10] sm:$0xff]
      %v224 = vld [vmem:[%s211 + $0x18] sm:$0xff]
      %v225 = vld [vmem:[%s211 + $0x20] sm:$0xff]
      %v226 = vld [vmem:[%s211 + $0x28] sm:$0xff]
      %v227 = vld [vmem:[%s211 + $0x30] sm:$0xff]
      %v228 = vld [vmem:[%s211 + $0x38] sm:$0xff]
      %v229 = vld [vmem:[%s1] sm:$0xf]
      %v230 = vld [vmem:[%s1 + $0x4] sm:$0xf]
      %v231 = vld [vmem:[%s1 + $0x8] sm:$0xf]
      %v232 = vld [vmem:[%s1 + $0xc] sm:$0xf]
      %v233 = vld [vmem:[%s1 + $0x10] sm:$0xf]
      %v234 = vld [vmem:[%s1 + $0x14] sm:$0xf]
      %v235 = vld [vmem:[%s1 + $0x18] sm:$0xf]
      %v236 = vld [vmem:[%s1 + $0x1c] sm:$0xf]
      %v237 = vld [vmem:[%s1 + $0x20] sm:$0xf]
      %v238 = vld [vmem:[%s1 + $0x24] sm:$0xf]
      %v239 = vld [vmem:[%s1 + $0x28] sm:$0xf]
      %v240 = vld [vmem:[%s1 + $0x2c] sm:$0xf]
      %v241 = vld [vmem:[%s1 + $0x30] sm:$0xf]
      %v242 = vld [vmem:[%s1 + $0x34] sm:$0xf]
      %v243 = vld [vmem:[%s1 + $0x38] sm:$0xf]
      %v244 = vld [vmem:[%s1 + $0x3c] sm:$0xf]
      %v245 = vld [vmem:[%s1 + $0x40] sm:$0xf]
      %v246 = vld [vmem:[%s1 + $0x44] sm:$0xf]
      %v247 = vld [vmem:[%s1 + $0x48] sm:$0xf]
      %v248 = vld [vmem:[%s1 + $0x4c] sm:$0xf]
      %v249 = vld [vmem:[%s1 + $0x50] sm:$0xf]
      %v250 = vld [vmem:[%s1 + $0x54] sm:$0xf]
      %v251 = vld [vmem:[%s1 + $0x58] sm:$0xf]
      %v252 = vld [vmem:[%s1 + $0x5c] sm:$0xf]
      %v253 = vld [vmem:[%s1 + $0x60] sm:$0xf]
      %v254 = vld [vmem:[%s1 + $0x64] sm:$0xf]
      %v255 = vld [vmem:[%s1 + $0x68] sm:$0xf]
      %v256 = vld [vmem:[%s1 + $0x6c] sm:$0xf]
      %v257 = vld [vmem:[%s1 + $0x70] sm:$0xf]
      %v258 = vld [vmem:[%s1 + $0x74] sm:$0xf]
      %v259 = vld [vmem:[%s1 + $0x78] sm:$0xf]
      %v260 = vld [vmem:[%s1 + $0x7c] sm:$0xf]
      %v261 = vld [vmem:[%s1 + $0x80] sm:$0xf]
      %v262 = vld [vmem:[%s1 + $0x84] sm:$0xf]
      %v263 = vld [vmem:[%s1 + $0x88] sm:$0xf]
      %v264 = vld [vmem:[%s1 + $0x8c] sm:$0xf]
      %v265 = vld [vmem:[%s1 + $0x90] sm:$0xf]
      %v266 = vld [vmem:[%s1 + $0x94] sm:$0xf]
      %v267 = vld [vmem:[%s1 + $0x98] sm:$0xf]
      %v268 = vld [vmem:[%s1 + $0x9c] sm:$0xf]
      %v269 = vld [vmem:[%s1 + $0xa0] sm:$0xf]
      %v270 = vld [vmem:[%s1 + $0xa4] sm:$0xf]
      %v271 = vld [vmem:[%s1 + $0xa8] sm:$0xf]
      %v272 = vld [vmem:[%s1 + $0xac] sm:$0xf]
      %v273 = vld [vmem:[%s1 + $0xb0] sm:$0xf]
      %v274 = vld [vmem:[%s1 + $0xb4] sm:$0xf]
      %v275 = vld [vmem:[%s1 + $0xb8] sm:$0xf]
      %v276 = vld [vmem:[%s1 + $0xbc] sm:$0xf]
      %v277 = vld [vmem:[%s1 + $0xc0] sm:$0xf]
      %v278 = vld [vmem:[%s1 + $0xc4] sm:$0xf]
      %v279 = vld [vmem:[%s1 + $0xc8] sm:$0xf]
      %v280 = vld [vmem:[%s1 + $0xcc] sm:$0xf]
      %v281 = vld [vmem:[%s1 + $0xd0] sm:$0xf]
      %v282 = vld [vmem:[%s1 + $0xd4] sm:$0xf]
      %v283 = vld [vmem:[%s1 + $0xd8] sm:$0xf]
      %v284 = vld [vmem:[%s1 + $0xdc] sm:$0xf]
      %v285 = vld [vmem:[%s1 + $0xe0] sm:$0xf]
      %v286 = vld [vmem:[%s1 + $0xe4] sm:$0xf]
      %v287 = vld [vmem:[%s1 + $0xe8] sm:$0xf]
      %v288 = vld [vmem:[%s1 + $0xec] sm:$0xf]
      %v289 = vld [vmem:[%s1 + $0xf0] sm:$0xf]
      %v290 = vld [vmem:[%s1 + $0xf4] sm:$0xf]
      %v291 = vld [vmem:[%s1 + $0xf8] sm:$0xf]
      %v292 = vld [vmem:[%s1 + $0xfc] sm:$0xf]
      %v301 = vunpack.c.l.b16 %v221
      %v302 = vunpack.c.h.b16 %v221
      %v303 = vunpack.c.l.b16 %v222
      %v304 = vunpack.c.h.b16 %v222
      %v305 = vunpack.c.l.b16 %v223
      %v306 = vunpack.c.h.b16 %v223
      %v307 = vunpack.c.l.b16 %v224
      %v308 = vunpack.c.h.b16 %v224
      %v309 = vunpack.c.l.b16 %v225
      %v310 = vunpack.c.h.b16 %v225
      %v311 = vunpack.c.l.b16 %v226
      %v312 = vunpack.c.h.b16 %v226
      %v313 = vunpack.c.l.b16 %v227
      %v314 = vunpack.c.h.b16 %v227
      %v315 = vunpack.c.l.b16 %v228
      %v316 = vunpack.c.h.b16 %v228
      %v317 = vpack.c.b16 %v305, %v301
      %v318 = vpack.c.b16 %v306, %v302
      %v319 = vpack.c.b16 %v307, %v303
      %v320 = vpack.c.b16 %v308, %v304
      %v321 = vpack.c.b16 %v313, %v309
      %v322 = vpack.c.b16 %v314, %v310
      %v323 = vpack.c.b16 %v315, %v311
      %v324 = vpack.c.b16 %v316, %v312
      %v397 = vunpack.c.l.b16 %v229
      %v398 = vunpack.c.l.b16 %v230
      %v399 = vunpack.c.l.b16 %v231
      %v400 = vunpack.c.l.b16 %v232
      %v401 = vunpack.c.l.b16 %v233
      %v402 = vunpack.c.l.b16 %v234
      %v403 = vunpack.c.l.b16 %v235
      %v404 = vunpack.c.l.b16 %v236
      %v405 = vunpack.c.l.b16 %v237
      %v406 = vunpack.c.l.b16 %v238
      %v407 = vunpack.c.l.b16 %v239
      %v408 = vunpack.c.l.b16 %v240
      %v409 = vunpack.c.l.b16 %v241
      %v410 = vunpack.c.l.b16 %v242
      %v411 = vunpack.c.l.b16 %v243
      %v412 = vunpack.c.l.b16 %v244
      %v413 = vunpack.c.l.b16 %v245
      %v414 = vunpack.c.l.b16 %v246
      %v415 = vunpack.c.l.b16 %v247
      %v416 = vunpack.c.l.b16 %v248
      %v417 = vunpack.c.l.b16 %v249
      %v418 = vunpack.c.l.b16 %v250
      %v419 = vunpack.c.l.b16 %v251
      %v420 = vunpack.c.l.b16 %v252
      %v421 = vunpack.c.l.b16 %v253
      %v422 = vunpack.c.l.b16 %v254
      %v423 = vunpack.c.l.b16 %v255
      %v424 = vunpack.c.l.b16 %v256
      %v425 = vunpack.c.l.b16 %v257
      %v426 = vunpack.c.l.b16 %v258
      %v427 = vunpack.c.l.b16 %v259
      %v428 = vunpack.c.l.b16 %v260
      %v429 = vunpack.c.l.b16 %v261
      %v430 = vunpack.c.l.b16 %v262
      %v431 = vunpack.c.l.b16 %v263
      %v432 = vunpack.c.l.b16 %v264
      %v433 = vunpack.c.l.b16 %v265
      %v434 = vunpack.c.l.b16 %v266
      %v435 = vunpack.c.l.b16 %v267
      %v436 = vunpack.c.l.b16 %v268
      %v437 = vunpack.c.l.b16 %v269
      %v438 = vunpack.c.l.b16 %v270
      %v439 = vunpack.c.l.b16 %v271
      %v440 = vunpack.c.l.b16 %v272
      %v441 = vunpack.c.l.b16 %v273
      %v442 = vunpack.c.l.b16 %v274
      %v443 = vunpack.c.l.b16 %v275
      %v444 = vunpack.c.l.b16 %v276
      %v445 = vunpack.c.l.b16 %v277
      %v446 = vunpack.c.l.b16 %v278
      %v447 = vunpack.c.l.b16 %v279
      %v448 = vunpack.c.l.b16 %v280
      %v449 = vunpack.c.l.b16 %v281
      %v450 = vunpack.c.l.b16 %v282
      %v451 = vunpack.c.l.b16 %v283
      %v452 = vunpack.c.l.b16 %v284
      %v453 = vunpack.c.l.b16 %v285
      %v454 = vunpack.c.l.b16 %v286
      %v455 = vunpack.c.l.b16 %v287
      %v456 = vunpack.c.l.b16 %v288
      %v457 = vunpack.c.l.b16 %v289
      %v458 = vunpack.c.l.b16 %v290
      %v459 = vunpack.c.l.b16 %v291
      %v460 = vunpack.c.l.b16 %v292
      %v461 = vpack.c.b16 %v398, %v397
      %v462 = vpack.c.b16 %v400, %v399
      %v463 = vpack.c.b16 %v402, %v401
      %v464 = vpack.c.b16 %v404, %v403
      %v465 = vpack.c.b16 %v406, %v405
      %v466 = vpack.c.b16 %v408, %v407
      %v467 = vpack.c.b16 %v410, %v409
      %v468 = vpack.c.b16 %v412, %v411
      %v469 = vpack.c.b16 %v414, %v413
      %v470 = vpack.c.b16 %v416, %v415
      %v471 = vpack.c.b16 %v418, %v417
      %v472 = vpack.c.b16 %v420, %v419
      %v473 = vpack.c.b16 %v422, %v421
      %v474 = vpack.c.b16 %v424, %v423
      %v475 = vpack.c.b16 %v426, %v425
      %v476 = vpack.c.b16 %v428, %v427
      %v477 = vpack.c.b16 %v430, %v429
      %v478 = vpack.c.b16 %v432, %v431
      %v479 = vpack.c.b16 %v434, %v433
      %v480 = vpack.c.b16 %v436, %v435
      %v481 = vpack.c.b16 %v438, %v437
      %v482 = vpack.c.b16 %v440, %v439
      %v483 = vpack.c.b16 %v442, %v441
      %v484 = vpack.c.b16 %v444, %v443
      %v485 = vpack.c.b16 %v446, %v445
      %v486 = vpack.c.b16 %v448, %v447
      %v487 = vpack.c.b16 %v450, %v449
      %v488 = vpack.c.b16 %v452, %v451
      %v489 = vpack.c.b16 %v454, %v453
      %v490 = vpack.c.b16 %v456, %v455
      %v491 = vpack.c.b16 %v458, %v457
      %v492 = vpack.c.b16 %v460, %v459
      %525 = vmatpush.bf16.msra.mxu0 %v468
      %526 = vmatpush.bf16.msra.mxu0 %v467
      %527 = vmatpush.bf16.msra.mxu0 %v466
      %528 = vmatpush.bf16.msra.mxu0 %v465
      %529 = vmatpush.bf16.msra.mxu0 %v464
      %530 = vmatpush.bf16.msra.mxu0 %v463
      %531 = vmatpush.bf16.msra.mxu0 %v462
      %532 = vmatpush.bf16.msra.mxu0 %v461
      %533 = vmatmul.bf16.gmra.mxu0 %v317
      %v534 = vpop.f32.mrf.mxu0
      %v535 = vadd.f32 0.0, %v534
      %v536 = vpop.f32.mrf.mxu0
      %v537 = vadd.f32 0.0, %v536
      %538 = vmatmul.bf16.gmra.mxu0 %v321
      %v539 = vpop.f32.mrf.mxu0
      %v540 = vadd.f32 0.0, %v539
      %v541 = vpop.f32.mrf.mxu0
      %v542 = vadd.f32 0.0, %v541
      %543 = vdwg.mxu0
      %544 = vmatpush.bf16.msra.mxu0 %v476
      %545 = vmatpush.bf16.msra.mxu0 %v475
      %546 = vmatpush.bf16.msra.mxu0 %v474
      %547 = vmatpush.bf16.msra.mxu0 %v473
      %548 = vmatpush.bf16.msra.mxu0 %v472
      %549 = vmatpush.bf16.msra.mxu0 %v471
      %550 = vmatpush.bf16.msra.mxu0 %v470
      %551 = vmatpush.bf16.msra.mxu0 %v469
      %552 = vmatmul.bf16.gmra.mxu0 %v318
      %v553 = vpop.f32.mrf.mxu0
      %v554 = vadd.f32 %v535, %v553
      %v555 = vpop.f32.mrf.mxu0
      %v556 = vadd.f32 %v537, %v555
      %557 = vmatmul.bf16.gmra.mxu0 %v322
      %v558 = vpop.f32.mrf.mxu0
      %v559 = vadd.f32 %v540, %v558
      %v560 = vpop.f32.mrf.mxu0
      %v561 = vadd.f32 %v542, %v560
      %562 = vdwg.mxu0
      %563 = vmatpush.bf16.msra.mxu0 %v484
      %564 = vmatpush.bf16.msra.mxu0 %v483
      %565 = vmatpush.bf16.msra.mxu0 %v482
      %566 = vmatpush.bf16.msra.mxu0 %v481
      %567 = vmatpush.bf16.msra.mxu0 %v480
      %568 = vmatpush.bf16.msra.mxu0 %v479
      %569 = vmatpush.bf16.msra.mxu0 %v478
      %570 = vmatpush.bf16.msra.mxu0 %v477
      %571 = vmatmul.bf16.gmra.mxu0 %v319
      %v572 = vpop.f32.mrf.mxu0
      %v573 = vadd.f32 %v554, %v572
      %v574 = vpop.f32.mrf.mxu0
      %v575 = vadd.f32 %v556, %v574
      %576 = vmatmul.bf16.gmra.mxu0 %v323
      %v577 = vpop.f32.mrf.mxu0
      %v578 = vadd.f32 %v559, %v577
      %v579 = vpop.f32.mrf.mxu0
      %v580 = vadd.f32 %v561, %v579
      %581 = vdwg.mxu0
      %582 = vmatpush.bf16.msra.mxu0 %v492
      %583 = vmatpush.bf16.msra.mxu0 %v491
      %584 = vmatpush.bf16.msra.mxu0 %v490
      %585 = vmatpush.bf16.msra.mxu0 %v489
      %586 = vmatpush.bf16.msra.mxu0 %v488
      %587 = vmatpush.bf16.msra.mxu0 %v487
      %588 = vmatpush.bf16.msra.mxu0 %v486
      %589 = vmatpush.bf16.msra.mxu0 %v485
      %590 = vmatmul.bf16.gmra.mxu0 %v320
      %v591 = vpop.f32.mrf.mxu0
      %v592 = vadd.f32 %v573, %v591
      %v593 = vpop.f32.mrf.mxu0
      %v594 = vadd.f32 %v575, %v593
      %595 = vmatmul.bf16.gmra.mxu0 %v324
      %v596 = vpop.f32.mrf.mxu0
      %v597 = vadd.f32 %v578, %v596
      %v598 = vpop.f32.mrf.mxu0
      %v599 = vadd.f32 %v580, %v598
      %600 = vdwg.mxu0
      %p601 = scmp.eq.s32.totalorder %s19, 0
      %p602 = scmp.eq.s32.totalorder %s20, 0
      %p603 = pnand %p601, %p602
      %p604 = pneg %p603
      // Predicated region
      $region37: #{dcgan_discriminator.8} parent=35 // pred_check
        _
      $region38: #{dcgan_discriminator.8} parent=35 // pred_check_branch
        %606 = sbr.rel (%p603) target = $region40
      $region39: #{dcgan_discriminator.8} parent=35 // pred_region
        %607 = vst [vmem:[#allocation2] sm:$0x1] 0.0
        %608 = vst [vmem:[#allocation3] sm:$0x1] 0.0
      $region40: #{dcgan_discriminator.8} parent=35 // pred_fallthru
        _
      // Predicated region
      $region41: #{dcgan_discriminator.8} parent=35 // pred_check
        %p609 = pneg %p601
      $region42: #{dcgan_discriminator.8} parent=35 // pred_check_branch
        %611 = sbr.rel (%p609) target = $region44
      $region43: #{dcgan_discriminator.8} parent=35 // pred_region
        %v612 = vld [vmem:[#allocation2] sm:$0x1]
        %v613 = vadd.f32 %v592, %v594
        %v614 = vadd.f32 %v613, %v597
        %v615 = vadd.f32 %v614, %v599
        %v616 = vrot.slane %v615, 4
        %v617 = vadd.f32 %v615, %v616
        %v618 = vrot.slane %v617, 2
        %v619 = vadd.f32 %v617, %v618
        %v620 = vrot.slane %v619, 1
        %v621 = vadd.f32 %v619, %v620
        %v622 = vadd.f32 %v612, %v621
        %623 = vst [vmem:[#allocation2] sm:$0x1] %v622
        %v624 = vld [vmem:[#allocation3] sm:$0x1]
        %v625 = vmul.f32 %v592, %v592
        %v626 = vmul.f32 %v594, %v594
        %v627 = vmul.f32 %v597, %v597
        %v628 = vmul.f32 %v599, %v599
        %v629 = vadd.f32 %v625, %v626
        %v630 = vadd.f32 %v629, %v627
        %v631 = vadd.f32 %v630, %v628
        %v632 = vrot.slane %v631, 4
        %v633 = vadd.f32 %v631, %v632
        %v634 = vrot.slane %v633, 2
        %v635 = vadd.f32 %v633, %v634
        %v636 = vrot.slane %v635, 1
        %v637 = vadd.f32 %v635, %v636
        %v638 = vadd.f32 %v624, %v637
        %639 = vst [vmem:[#allocation3] sm:$0x1] %v638
      $region44: #{dcgan_discriminator.8} parent=35 // pred_fallthru
        _
      %p640 = scmp.eq.s32.totalorder %s19, 1
      %p641 = pnand %p640, %p602
      %p642 = pneg %p641
      // Predicated region
      $region45: #{dcgan_discriminator.8} parent=35 // pred_check
        _
      $region46: #{dcgan_discriminator.8} parent=35 // pred_check_branch
        %644 = sbr.rel (%p641) target = $region48
      $region47: #{dcgan_discriminator.8} parent=35 // pred_region
        %v645 = vld [vmem:[#allocation2] sm:$0x1]
        %v646 = vmul.f32 %v645, 0.03125
        %v647 = vld [vmem:[#allocation3] sm:$0x1]
        %v648 = vmul.f32 %v647, 0.03125
        %v649 = vmul.f32 %v646, %v646
        %v650 = vsub.f32 %v648, %v649
        %v651 = vmax.f32 %v650, 0.0
        %v652 = vld [vmem:[%s2] sm:$0x1]
        %v653 = vadd.f32 %v651, 1e-05
        %v654 = vrsqrt.pop %v653
        %v655 = vmul.f32 %v654, %v653
        %v656 = vmul.f32 %v655, %v654
        %v657 = vmul.f32 0.5, %v656
        %v658 = vsub.f32 1.5, %v657
        %v659 = vmul.f32 %v654, %v658
        %vm660 = vweird.f32 %v653
        %vm661 = vweird.f32 %v654
        %vm662 = vmor %vm660, %vm661
        %v663 = vsel %vm662, %v654, %v659
        %v664 = vmul.f32 %v652, %v663
        %665 = vst [vmem:[#allocation4] sm:$0x1] %v664
        %v666 = vld [vmem:[%s3] sm:$0x1]
        %v667 = vmul.f32 %v646, %v664
        %v668 = vsub.f32 %v666, %v667
        %669 = vst [vmem:[#allocation5] sm:$0x1] %v668
      $region48: #{dcgan_discriminator.8} parent=35 // pred_fallthru
        _
      // Predicated region
      $region49: #{dcgan_discriminator.8} parent=35 // pred_check
        %p670 = pneg %p640
      $region50: #{dcgan_discriminator.8} parent=35 // pred_check_branch
        %672 = sbr.rel (%p670) target = $region52
      $region51: #{dcgan_discriminator.8} parent=35 // pred_region
        %v673 = vld [vmem:[#allocation4] sm:$0x1]
        %v675 = vperm.slane %v673, 0
        %v677 = vmul.f32 %v592, %v675
        %v678 = vmul.f32 %v594, %v675
        %v679 = vmul.f32 %v597, %v675
        %v680 = vmul.f32 %v599, %v675
        %v681 = vld [vmem:[#allocation5] sm:$0x1]
        %v683 = vperm.slane %v681, 0
        %v685 = vadd.f32 %v677, %v683
        %v686 = vadd.f32 %v678, %v683
        %v687 = vadd.f32 %v679, %v683
        %v688 = vadd.f32 %v680, %v683
        %vm689 = vcmp.gt.f32.partialorder %v685, 0.0
        %vm690 = vcmp.gt.f32.partialorder %v686, 0.0
        %vm691 = vcmp.gt.f32.partialorder %v687, 0.0
        %vm692 = vcmp.gt.f32.partialorder %v688, 0.0
        %v693 = vmul.f32 %v685, 0.2
        %v694 = vmul.f32 %v686, 0.2
        %v695 = vmul.f32 %v687, 0.2
        %v696 = vmul.f32 %v688, 0.2
        %v697 = vsel %vm689, %v685, %v693
        %v698 = vsel %vm690, %v686, %v694
        %v699 = vsel %vm691, %v687, %v695
        %v700 = vsel %vm692, %v688, %v696
        %v701 = vpack.c.bf16 %v697, %v697
        %v702 = vpack.c.bf16 %v698, %v698
        %v703 = vpack.c.bf16 %v699, %v699
        %v704 = vpack.c.bf16 %v700, %v700
        %705 = vst [vmem:[%s218] sm:$0xf] %v701
        %706 = vst [vmem:[%s218 + $0x4] sm:$0xf] %v702
        %707 = vst [vmem:[%s218 + $0x8] sm:$0xf] %v703
        %708 = vst [vmem:[%s218 + $0xc] sm:$0xf] %v704
      $region52: #{dcgan_discriminator.8} parent=35 // pred_fallthru
        _
      %s709 = smul.u32 %s19, %s20
      %s710 = smul.u32 4, %s709
      %p711 = scmp.lt.s32.totalorder %s710, 3
      %s712 = scalar_select %p711, %s710, 3
      %s713 = smul.addr %s712, 4
      %s714 = scalar_lea.vmem %s4, %s713
      // Predicated region
      $region53: #{dcgan_discriminator.8} parent=35 // pred_check
        %p715 = pneg %p136
      $region54: #{dcgan_discriminator.8} parent=35 // pred_check_branch
        %717 = sbr.rel (%p715) target = $region56
      $region55: #{dcgan_discriminator.8} parent=35 // pred_region
        %s718 = smul.u32 %s19, %s20
        %s719 = smul.u32 4, %s718
      $region56: #{dcgan_discriminator.8} parent=35 // pred_fallthru
        _
    $region36: #{dcgan_discriminator.8} parent=5 // pred_fallthru
      _
    %p720 = scmp.le.s32.totalorder 2, %s10
    // Predicated region
    $region57: #{dcgan_discriminator.8} parent=5 // pred_check
      %p721 = pneg %p720
    $region58: #{dcgan_discriminator.8} parent=5 // pred_check_branch
      %723 = sbr.rel (%p721) target = $region60
    $region59: #{dcgan_discriminator.8} parent=5 // pred_region
      %s724 = ssub.s32 %s10, 2
      // Predicated region
      $region61: #{dcgan_discriminator.8} parent=59 // pred_check
        %p725 = pneg %p142
      $region62: #{dcgan_discriminator.8} parent=59 // pred_check_branch
        %727 = sbr.rel (%p725) target = $region64
      $region63: #{dcgan_discriminator.8} parent=59 // pred_region
        %s728 = smul.u32 %s21, %s22
        %s729 = smul.u32 4, %s728
        %p730 = scmp.lt.s32.totalorder %s729, 3
        %s731 = scalar_select %p730, %s729, 3
        %s732 = smul.addr %s731, 4
        %s733 = scalar_lea.vmem %s4, %s732
      $region64: #{dcgan_discriminator.8} parent=59 // pred_fallthru
        _
    $region60: #{dcgan_discriminator.8} parent=5 // pred_fallthru
      _
  $region6: #{dcgan_discriminator.8} parent=0 // loop_footer
    %s14 = sadd.s32 1, %s10
  $region7: #{dcgan_discriminator.8} parent=0 // loop_footer_branch
    %9 = sbr.rel target = $region3
  $region8: #{dcgan_discriminator.8} parent=0 // loop_exit
    _

// kernel: dcgan_discriminator.9
$region0: #{dcgan_discriminator.9}
  #allocation0 [shape = 'u32[]', space=smem, size = 0x4, offset = 0x4, fixed_abs, tag = 'smem constant byte address 0x4 - core index']
  #allocation1 [shape = 'u32[72,128]{1,0:T(1,128)}', space=vmem, size = 0x9000, scoped, tag = 'internal scratch']
  %s0 = inlined_call_operand.vmem [shape: bf16[8,1024], index: 0, kind: input, shape index: {}]
  %s1 = inlined_call_operand.vmem [shape: bf16[1024,128], index: 1, kind: input, shape index: {}]
  %s2 = inlined_call_operand.vmem [shape: f32[8,128], index: 2, kind: output, shape index: {}]
  %s3 = sld [smem:[#allocation0]]
  $region18: #{dcgan_discriminator.9} parent=0
    _
  %s5 = ssub.s32 1, %s3
  %s6 = scalar_select 0, %s5, %s3
  // Predicated region
  $region2: #{dcgan_discriminator.9} parent=0 // pred_check
    _
  $region3: #{dcgan_discriminator.9} parent=0 // pred_check_branch
    %8 = sbr.rel (0) target = $region5
  $region4: #{dcgan_discriminator.9} parent=0 // pred_region
    _
  $region5: #{dcgan_discriminator.9} parent=0 // pred_fallthru
    _
  // Predicated region
  $region6: #{dcgan_discriminator.9} parent=0 // pred_check
    _
  $region7: #{dcgan_discriminator.9} parent=0 // pred_check_branch
    %10 = sbr.rel (0) target = $region9
  $region8: #{dcgan_discriminator.9} parent=0 // pred_region
    _
  $region9: #{dcgan_discriminator.9} parent=0 // pred_fallthru
    _
  %v11 = vld [vmem:[%s0] sm:$0xff]
  %v12 = vld [vmem:[%s0 + $0x8] sm:$0xff]
  %v13 = vld [vmem:[%s0 + $0x10] sm:$0xff]
  %v14 = vld [vmem:[%s0 + $0x18] sm:$0xff]
  %v15 = vld [vmem:[%s1] sm:$0xf]
  %v16 = vld [vmem:[%s1 + $0x4] sm:$0xf]
  %v17 = vld [vmem:[%s1 + $0x8] sm:$0xf]
  %v18 = vld [vmem:[%s1 + $0xc] sm:$0xf]
  %v19 = vld [vmem:[%s1 + $0x10] sm:$0xf]
  %v20 = vld [vmem:[%s1 + $0x14] sm:$0xf]
  %v21 = vld [vmem:[%s1 + $0x18] sm:$0xf]
  %v22 = vld [vmem:[%s1 + $0x1c] sm:$0xf]
  %v23 = vld [vmem:[%s1 + $0x20] sm:$0xf]
  %v24 = vld [vmem:[%s1 + $0x24] sm:$0xf]
  %v25 = vld [vmem:[%s1 + $0x28] sm:$0xf]
  %v26 = vld [vmem:[%s1 + $0x2c] sm:$0xf]
  %v27 = vld [vmem:[%s1 + $0x30] sm:$0xf]
  %v28 = vld [vmem:[%s1 + $0x34] sm:$0xf]
  %v29 = vld [vmem:[%s1 + $0x38] sm:$0xf]
  %v30 = vld [vmem:[%s1 + $0x3c] sm:$0xf]
  %v31 = vld [vmem:[%s1 + $0x40] sm:$0xf]
  %v32 = vld [vmem:[%s1 + $0x44] sm:$0xf]
  %v33 = vld [vmem:[%s1 + $0x48] sm:$0xf]
  %v34 = vld [vmem:[%s1 + $0x4c] sm:$0xf]
  %v35 = vld [vmem:[%s1 + $0x50] sm:$0xf]
  %v36 = vld [vmem:[%s1 + $0x54] sm:$0xf]
  %v37 = vld [vmem:[%s1 + $0x58] sm:$0xf]
  %v38 = vld [vmem:[%s1 + $0x5c] sm:$0xf]
  %v39 = vld [vmem:[%s1 + $0x60] sm:$0xf]
  %v40 = vld [vmem:[%s1 + $0x64] sm:$0xf]
  %v41 = vld [vmem:[%s1 + $0x68] sm:$0xf]
  %v42 = vld [vmem:[%s1 + $0x6c] sm:$0xf]
  %v43 = vld [vmem:[%s1 + $0x70] sm:$0xf]
  %v44 = vld [vmem:[%s1 + $0x74] sm:$0xf]
  %v45 = vld [vmem:[%s1 + $0x78] sm:$0xf]
  %v46 = vld [vmem:[%s1 + $0x7c] sm:$0xf]
  %v47 = vld [vmem:[%s1 + $0x80] sm:$0xf]
  %v48 = vld [vmem:[%s1 + $0x84] sm:$0xf]
  %v49 = vld [vmem:[%s1 + $0x88] sm:$0xf]
  %v50 = vld [vmem:[%s1 + $0x8c] sm:$0xf]
  %v51 = vld [vmem:[%s1 + $0x90] sm:$0xf]
  %v52 = vld [vmem:[%s1 + $0x94] sm:$0xf]
  %v53 = vld [vmem:[%s1 + $0x98] sm:$0xf]
  %v54 = vld [vmem:[%s1 + $0x9c] sm:$0xf]
  %v55 = vld [vmem:[%s1 + $0xa0] sm:$0xf]
  %v56 = vld [vmem:[%s1 + $0xa4] sm:$0xf]
  %v57 = vld [vmem:[%s1 + $0xa8] sm:$0xf]
  %v58 = vld [vmem:[%s1 + $0xac] sm:$0xf]
  %v59 = vld [vmem:[%s1 + $0xb0] sm:$0xf]
  %v60 = vld [vmem:[%s1 + $0xb4] sm:$0xf]
  %v61 = vld [vmem:[%s1 + $0xb8] sm:$0xf]
  %v62 = vld [vmem:[%s1 + $0xbc] sm:$0xf]
  %v63 = vld [vmem:[%s1 + $0xc0] sm:$0xf]
  %v64 = vld [vmem:[%s1 + $0xc4] sm:$0xf]
  %v65 = vld [vmem:[%s1 + $0xc8] sm:$0xf]
  %v66 = vld [vmem:[%s1 + $0xcc] sm:$0xf]
  %v67 = vld [vmem:[%s1 + $0xd0] sm:$0xf]
  %v68 = vld [vmem:[%s1 + $0xd4] sm:$0xf]
  %v69 = vld [vmem:[%s1 + $0xd8] sm:$0xf]
  %v70 = vld [vmem:[%s1 + $0xdc] sm:$0xf]
  %v71 = vld [vmem:[%s1 + $0xe0] sm:$0xf]
  %v72 = vld [vmem:[%s1 + $0xe4] sm:$0xf]
  %v73 = vld [vmem:[%s1 + $0xe8] sm:$0xf]
  %v74 = vld [vmem:[%s1 + $0xec] sm:$0xf]
  %v75 = vld [vmem:[%s1 + $0xf0] sm:$0xf]
  %v76 = vld [vmem:[%s1 + $0xf4] sm:$0xf]
  %v77 = vld [vmem:[%s1 + $0xf8] sm:$0xf]
  %v78 = vld [vmem:[%s1 + $0xfc] sm:$0xf]
  %v79 = vld [vmem:[%s1 + $0x100] sm:$0xf]
  %v80 = vld [vmem:[%s1 + $0x104] sm:$0xf]
  %v81 = vld [vmem:[%s1 + $0x108] sm:$0xf]
  %v82 = vld [vmem:[%s1 + $0x10c] sm:$0xf]
  %v83 = vld [vmem:[%s1 + $0x110] sm:$0xf]
  %v84 = vld [vmem:[%s1 + $0x114] sm:$0xf]
  %v85 = vld [vmem:[%s1 + $0x118] sm:$0xf]
  %v86 = vld [vmem:[%s1 + $0x11c] sm:$0xf]
  %v87 = vld [vmem:[%s1 + $0x120] sm:$0xf]
  %v88 = vld [vmem:[%s1 + $0x124] sm:$0xf]
  %v89 = vld [vmem:[%s1 + $0x128] sm:$0xf]
  %v90 = vld [vmem:[%s1 + $0x12c] sm:$0xf]
  %v91 = vld [vmem:[%s1 + $0x130] sm:$0xf]
  %v92 = vld [vmem:[%s1 + $0x134] sm:$0xf]
  %v93 = vld [vmem:[%s1 + $0x138] sm:$0xf]
  %v94 = vld [vmem:[%s1 + $0x13c] sm:$0xf]
  %v95 = vld [vmem:[%s1 + $0x140] sm:$0xf]
  %v96 = vld [vmem:[%s1 + $0x144] sm:$0xf]
  %v97 = vld [vmem:[%s1 + $0x148] sm:$0xf]
  %v98 = vld [vmem:[%s1 + $0x14c] sm:$0xf]
  %v99 = vld [vmem:[%s1 + $0x150] sm:$0xf]
  %v100 = vld [vmem:[%s1 + $0x154] sm:$0xf]
  %v101 = vld [vmem:[%s1 + $0x158] sm:$0xf]
  %v102 = vld [vmem:[%s1 + $0x15c] sm:$0xf]
  %v103 = vld [vmem:[%s1 + $0x160] sm:$0xf]
  %v104 = vld [vmem:[%s1 + $0x164] sm:$0xf]
  %v105 = vld [vmem:[%s1 + $0x168] sm:$0xf]
  %v106 = vld [vmem:[%s1 + $0x16c] sm:$0xf]
  %v107 = vld [vmem:[%s1 + $0x170] sm:$0xf]
  %v108 = vld [vmem:[%s1 + $0x174] sm:$0xf]
  %v109 = vld [vmem:[%s1 + $0x178] sm:$0xf]
  %v110 = vld [vmem:[%s1 + $0x17c] sm:$0xf]
  %v111 = vld [vmem:[%s1 + $0x180] sm:$0xf]
  %v112 = vld [vmem:[%s1 + $0x184] sm:$0xf]
  %v113 = vld [vmem:[%s1 + $0x188] sm:$0xf]
  %v114 = vld [vmem:[%s1 + $0x18c] sm:$0xf]
  %v115 = vld [vmem:[%s1 + $0x190] sm:$0xf]
  %v116 = vld [vmem:[%s1 + $0x194] sm:$0xf]
  %v117 = vld [vmem:[%s1 + $0x198] sm:$0xf]
  %v118 = vld [vmem:[%s1 + $0x19c] sm:$0xf]
  %v119 = vld [vmem:[%s1 + $0x1a0] sm:$0xf]
  %v120 = vld [vmem:[%s1 + $0x1a4] sm:$0xf]
  %v121 = vld [vmem:[%s1 + $0x1a8] sm:$0xf]
  %v122 = vld [vmem:[%s1 + $0x1ac] sm:$0xf]
  %v123 = vld [vmem:[%s1 + $0x1b0] sm:$0xf]
  %v124 = vld [vmem:[%s1 + $0x1b4] sm:$0xf]
  %v125 = vld [vmem:[%s1 + $0x1b8] sm:$0xf]
  %v126 = vld [vmem:[%s1 + $0x1bc] sm:$0xf]
  %v127 = vld [vmem:[%s1 + $0x1c0] sm:$0xf]
  %v128 = vld [vmem:[%s1 + $0x1c4] sm:$0xf]
  %v129 = vld [vmem:[%s1 + $0x1c8] sm:$0xf]
  %v130 = vld [vmem:[%s1 + $0x1cc] sm:$0xf]
  %v131 = vld [vmem:[%s1 + $0x1d0] sm:$0xf]
  %v132 = vld [vmem:[%s1 + $0x1d4] sm:$0xf]
  %v133 = vld [vmem:[%s1 + $0x1d8] sm:$0xf]
  %v134 = vld [vmem:[%s1 + $0x1dc] sm:$0xf]
  %v135 = vld [vmem:[%s1 + $0x1e0] sm:$0xf]
  %v136 = vld [vmem:[%s1 + $0x1e4] sm:$0xf]
  %v137 = vld [vmem:[%s1 + $0x1e8] sm:$0xf]
  %v138 = vld [vmem:[%s1 + $0x1ec] sm:$0xf]
  %v139 = vld [vmem:[%s1 + $0x1f0] sm:$0xf]
  %v140 = vld [vmem:[%s1 + $0x1f4] sm:$0xf]
  %v141 = vld [vmem:[%s1 + $0x1f8] sm:$0xf]
  %v142 = vld [vmem:[%s1 + $0x1fc] sm:$0xf]
  %v147 = vunpack.c.l.b16 %v11
  %v148 = vunpack.c.h.b16 %v11
  %v149 = vunpack.c.l.b16 %v12
  %v150 = vunpack.c.h.b16 %v12
  %v151 = vunpack.c.l.b16 %v13
  %v152 = vunpack.c.h.b16 %v13
  %v153 = vunpack.c.l.b16 %v14
  %v154 = vunpack.c.h.b16 %v14
  %v155 = vpack.c.b16 %v147, %v147
  %v156 = vpack.c.b16 %v148, %v148
  %v157 = vpack.c.b16 %v149, %v149
  %v158 = vpack.c.b16 %v150, %v150
  %v159 = vpack.c.b16 %v151, %v151
  %v160 = vpack.c.b16 %v152, %v152
  %v161 = vpack.c.b16 %v153, %v153
  %v162 = vpack.c.b16 %v154, %v154
  %v299 = vunpack.c.l.b16 %v15
  %v300 = vunpack.c.l.b16 %v16
  %v301 = vunpack.c.l.b16 %v17
  %v302 = vunpack.c.l.b16 %v18
  %v303 = vunpack.c.l.b16 %v19
  %v304 = vunpack.c.l.b16 %v20
  %v305 = vunpack.c.l.b16 %v21
  %v306 = vunpack.c.l.b16 %v22
  %v307 = vunpack.c.l.b16 %v23
  %v308 = vunpack.c.l.b16 %v24
  %v309 = vunpack.c.l.b16 %v25
  %v310 = vunpack.c.l.b16 %v26
  %v311 = vunpack.c.l.b16 %v27
  %v312 = vunpack.c.l.b16 %v28
  %v313 = vunpack.c.l.b16 %v29
  %v314 = vunpack.c.l.b16 %v30
  %v315 = vunpack.c.l.b16 %v31
  %v316 = vunpack.c.l.b16 %v32
  %v317 = vunpack.c.l.b16 %v33
  %v318 = vunpack.c.l.b16 %v34
  %v319 = vunpack.c.l.b16 %v35
  %v320 = vunpack.c.l.b16 %v36
  %v321 = vunpack.c.l.b16 %v37
  %v322 = vunpack.c.l.b16 %v38
  %v323 = vunpack.c.l.b16 %v39
  %v324 = vunpack.c.l.b16 %v40
  %v325 = vunpack.c.l.b16 %v41
  %v326 = vunpack.c.l.b16 %v42
  %v327 = vunpack.c.l.b16 %v43
  %v328 = vunpack.c.l.b16 %v44
  %v329 = vunpack.c.l.b16 %v45
  %v330 = vunpack.c.l.b16 %v46
  %v331 = vunpack.c.l.b16 %v47
  %v332 = vunpack.c.l.b16 %v48
  %v333 = vunpack.c.l.b16 %v49
  %v334 = vunpack.c.l.b16 %v50
  %v335 = vunpack.c.l.b16 %v51
  %v336 = vunpack.c.l.b16 %v52
  %v337 = vunpack.c.l.b16 %v53
  %v338 = vunpack.c.l.b16 %v54
  %v339 = vunpack.c.l.b16 %v55
  %v340 = vunpack.c.l.b16 %v56
  %v341 = vunpack.c.l.b16 %v57
  %v342 = vunpack.c.l.b16 %v58
  %v343 = vunpack.c.l.b16 %v59
  %v344 = vunpack.c.l.b16 %v60
  %v345 = vunpack.c.l.b16 %v61
  %v346 = vunpack.c.l.b16 %v62
  %v347 = vunpack.c.l.b16 %v63
  %v348 = vunpack.c.l.b16 %v64
  %v349 = vunpack.c.l.b16 %v65
  %v350 = vunpack.c.l.b16 %v66
  %v351 = vunpack.c.l.b16 %v67
  %v352 = vunpack.c.l.b16 %v68
  %v353 = vunpack.c.l.b16 %v69
  %v354 = vunpack.c.l.b16 %v70
  %v355 = vunpack.c.l.b16 %v71
  %v356 = vunpack.c.l.b16 %v72
  %v357 = vunpack.c.l.b16 %v73
  %v358 = vunpack.c.l.b16 %v74
  %v359 = vunpack.c.l.b16 %v75
  %v360 = vunpack.c.l.b16 %v76
  %v361 = vunpack.c.l.b16 %v77
  %v362 = vunpack.c.l.b16 %v78
  %v363 = vunpack.c.l.b16 %v79
  %v364 = vunpack.c.l.b16 %v80
  %v365 = vunpack.c.l.b16 %v81
  %v366 = vunpack.c.l.b16 %v82
  %v367 = vunpack.c.l.b16 %v83
  %v368 = vunpack.c.l.b16 %v84
  %v369 = vunpack.c.l.b16 %v85
  %v370 = vunpack.c.l.b16 %v86
  %v371 = vunpack.c.l.b16 %v87
  %v372 = vunpack.c.l.b16 %v88
  %v373 = vunpack.c.l.b16 %v89
  %v374 = vunpack.c.l.b16 %v90
  %v375 = vunpack.c.l.b16 %v91
  %v376 = vunpack.c.l.b16 %v92
  %v377 = vunpack.c.l.b16 %v93
  %v378 = vunpack.c.l.b16 %v94
  %v379 = vunpack.c.l.b16 %v95
  %v380 = vunpack.c.l.b16 %v96
  %v381 = vunpack.c.l.b16 %v97
  %v382 = vunpack.c.l.b16 %v98
  %v383 = vunpack.c.l.b16 %v99
  %v384 = vunpack.c.l.b16 %v100
  %v385 = vunpack.c.l.b16 %v101
  %v386 = vunpack.c.l.b16 %v102
  %v387 = vunpack.c.l.b16 %v103
  %v388 = vunpack.c.l.b16 %v104
  %v389 = vunpack.c.l.b16 %v105
  %v390 = vunpack.c.l.b16 %v106
  %v391 = vunpack.c.l.b16 %v107
  %v392 = vunpack.c.l.b16 %v108
  %v393 = vunpack.c.l.b16 %v109
  %v394 = vunpack.c.l.b16 %v110
  %v395 = vunpack.c.l.b16 %v111
  %v396 = vunpack.c.l.b16 %v112
  %v397 = vunpack.c.l.b16 %v113
  %v398 = vunpack.c.l.b16 %v114
  %v399 = vunpack.c.l.b16 %v115
  %v400 = vunpack.c.l.b16 %v116
  %v401 = vunpack.c.l.b16 %v117
  %v402 = vunpack.c.l.b16 %v118
  %v403 = vunpack.c.l.b16 %v119
  %v404 = vunpack.c.l.b16 %v120
  %v405 = vunpack.c.l.b16 %v121
  %v406 = vunpack.c.l.b16 %v122
  %v407 = vunpack.c.l.b16 %v123
  %v408 = vunpack.c.l.b16 %v124
  %v409 = vunpack.c.l.b16 %v125
  %v410 = vunpack.c.l.b16 %v126
  %v411 = vunpack.c.l.b16 %v127
  %v412 = vunpack.c.l.b16 %v128
  %v413 = vunpack.c.l.b16 %v129
  %v414 = vunpack.c.l.b16 %v130
  %v415 = vunpack.c.l.b16 %v131
  %v416 = vunpack.c.l.b16 %v132
  %v417 = vunpack.c.l.b16 %v133
  %v418 = vunpack.c.l.b16 %v134
  %v419 = vunpack.c.l.b16 %v135
  %v420 = vunpack.c.l.b16 %v136
  %v421 = vunpack.c.l.b16 %v137
  %v422 = vunpack.c.l.b16 %v138
  %v423 = vunpack.c.l.b16 %v139
  %v424 = vunpack.c.l.b16 %v140
  %v425 = vunpack.c.l.b16 %v141
  %v426 = vunpack.c.l.b16 %v142
  %v427 = vpack.c.b16 %v300, %v299
  %v428 = vpack.c.b16 %v302, %v301
  %v429 = vpack.c.b16 %v304, %v303
  %v430 = vpack.c.b16 %v306, %v305
  %v431 = vpack.c.b16 %v308, %v307
  %v432 = vpack.c.b16 %v310, %v309
  %v433 = vpack.c.b16 %v312, %v311
  %v434 = vpack.c.b16 %v314, %v313
  %v435 = vpack.c.b16 %v316, %v315
  %v436 = vpack.c.b16 %v318, %v317
  %v437 = vpack.c.b16 %v320, %v319
  %v438 = vpack.c.b16 %v322, %v321
  %v439 = vpack.c.b16 %v324, %v323
  %v440 = vpack.c.b16 %v326, %v325
  %v441 = vpack.c.b16 %v328, %v327
  %v442 = vpack.c.b16 %v330, %v329
  %v443 = vpack.c.b16 %v332, %v331
  %v444 = vpack.c.b16 %v334, %v333
  %v445 = vpack.c.b16 %v336, %v335
  %v446 = vpack.c.b16 %v338, %v337
  %v447 = vpack.c.b16 %v340, %v339
  %v448 = vpack.c.b16 %v342, %v341
  %v449 = vpack.c.b16 %v344, %v343
  %v450 = vpack.c.b16 %v346, %v345
  %v451 = vpack.c.b16 %v348, %v347
  %v452 = vpack.c.b16 %v350, %v349
  %v453 = vpack.c.b16 %v352, %v351
  %v454 = vpack.c.b16 %v354, %v353
  %v455 = vpack.c.b16 %v356, %v355
  %v456 = vpack.c.b16 %v358, %v357
  %v457 = vpack.c.b16 %v360, %v359
  %v458 = vpack.c.b16 %v362, %v361
  %v459 = vpack.c.b16 %v364, %v363
  %v460 = vpack.c.b16 %v366, %v365
  %v461 = vpack.c.b16 %v368, %v367
  %v462 = vpack.c.b16 %v370, %v369
  %v463 = vpack.c.b16 %v372, %v371
  %v464 = vpack.c.b16 %v374, %v373
  %v465 = vpack.c.b16 %v376, %v375
  %v466 = vpack.c.b16 %v378, %v377
  %v467 = vpack.c.b16 %v380, %v379
  %v468 = vpack.c.b16 %v382, %v381
  %v469 = vpack.c.b16 %v384, %v383
  %v470 = vpack.c.b16 %v386, %v385
  %v471 = vpack.c.b16 %v388, %v387
  %v472 = vpack.c.b16 %v390, %v389
  %v473 = vpack.c.b16 %v392, %v391
  %v474 = vpack.c.b16 %v394, %v393
  %v475 = vpack.c.b16 %v396, %v395
  %v476 = vpack.c.b16 %v398, %v397
  %v477 = vpack.c.b16 %v400, %v399
  %v478 = vpack.c.b16 %v402, %v401
  %v479 = vpack.c.b16 %v404, %v403
  %v480 = vpack.c.b16 %v406, %v405
  %v481 = vpack.c.b16 %v408, %v407
  %v482 = vpack.c.b16 %v410, %v409
  %v483 = vpack.c.b16 %v412, %v411
  %v484 = vpack.c.b16 %v414, %v413
  %v485 = vpack.c.b16 %v416, %v415
  %v486 = vpack.c.b16 %v418, %v417
  %v487 = vpack.c.b16 %v420, %v419
  %v488 = vpack.c.b16 %v422, %v421
  %v489 = vpack.c.b16 %v424, %v423
  %v490 = vpack.c.b16 %v426, %v425
  %555 = vmatpush.bf16.msra.mxu0 %v434
  %556 = vmatpush.bf16.msra.mxu0 %v433
  %557 = vmatpush.bf16.msra.mxu0 %v432
  %558 = vmatpush.bf16.msra.mxu0 %v431
  %559 = vmatpush.bf16.msra.mxu0 %v430
  %560 = vmatpush.bf16.msra.mxu0 %v429
  %561 = vmatpush.bf16.msra.mxu0 %v428
  %562 = vmatpush.bf16.msra.mxu0 %v427
  %563 = vmatmul.bf16.gmra.mxu0 %v155
  %v564 = vpop.f32.mrf.mxu0
  %v565 = vadd.f32 0.0, %v564
  %v566 = vpop.f32.mrf.mxu0
  %567 = vdwg.mxu0
  %568 = vmatpush.bf16.msra.mxu0 %v442
  %569 = vmatpush.bf16.msra.mxu0 %v441
  %570 = vmatpush.bf16.msra.mxu0 %v440
  %571 = vmatpush.bf16.msra.mxu0 %v439
  %572 = vmatpush.bf16.msra.mxu0 %v438
  %573 = vmatpush.bf16.msra.mxu0 %v437
  %574 = vmatpush.bf16.msra.mxu0 %v436
  %575 = vmatpush.bf16.msra.mxu0 %v435
  %576 = vmatmul.bf16.gmra.mxu0 %v156
  %v577 = vpop.f32.mrf.mxu0
  %v578 = vadd.f32 %v565, %v577
  %v579 = vpop.f32.mrf.mxu0
  %580 = vdwg.mxu0
  %581 = vmatpush.bf16.msra.mxu0 %v450
  %582 = vmatpush.bf16.msra.mxu0 %v449
  %583 = vmatpush.bf16.msra.mxu0 %v448
  %584 = vmatpush.bf16.msra.mxu0 %v447
  %585 = vmatpush.bf16.msra.mxu0 %v446
  %586 = vmatpush.bf16.msra.mxu0 %v445
  %587 = vmatpush.bf16.msra.mxu0 %v444
  %588 = vmatpush.bf16.msra.mxu0 %v443
  %589 = vmatmul.bf16.gmra.mxu0 %v157
  %v590 = vpop.f32.mrf.mxu0
  %v591 = vadd.f32 %v578, %v590
  %v592 = vpop.f32.mrf.mxu0
  %593 = vdwg.mxu0
  %594 = vmatpush.bf16.msra.mxu0 %v458
  %595 = vmatpush.bf16.msra.mxu0 %v457
  %596 = vmatpush.bf16.msra.mxu0 %v456
  %597 = vmatpush.bf16.msra.mxu0 %v455
  %598 = vmatpush.bf16.msra.mxu0 %v454
  %599 = vmatpush.bf16.msra.mxu0 %v453
  %600 = vmatpush.bf16.msra.mxu0 %v452
  %601 = vmatpush.bf16.msra.mxu0 %v451
  %602 = vmatmul.bf16.gmra.mxu0 %v158
  %v603 = vpop.f32.mrf.mxu0
  %v604 = vadd.f32 %v591, %v603
  %v605 = vpop.f32.mrf.mxu0
  %606 = vdwg.mxu0
  %607 = vmatpush.bf16.msra.mxu0 %v466
  %608 = vmatpush.bf16.msra.mxu0 %v465
  %609 = vmatpush.bf16.msra.mxu0 %v464
  %610 = vmatpush.bf16.msra.mxu0 %v463
  %611 = vmatpush.bf16.msra.mxu0 %v462
  %612 = vmatpush.bf16.msra.mxu0 %v461
  %613 = vmatpush.bf16.msra.mxu0 %v460
  %614 = vmatpush.bf16.msra.mxu0 %v459
  %615 = vmatmul.bf16.gmra.mxu0 %v159
  %v616 = vpop.f32.mrf.mxu0
  %v617 = vadd.f32 %v604, %v616
  %v618 = vpop.f32.mrf.mxu0
  %619 = vdwg.mxu0
  %620 = vmatpush.bf16.msra.mxu0 %v474
  %621 = vmatpush.bf16.msra.mxu0 %v473
  %622 = vmatpush.bf16.msra.mxu0 %v472
  %623 = vmatpush.bf16.msra.mxu0 %v471
  %624 = vmatpush.bf16.msra.mxu0 %v470
  %625 = vmatpush.bf16.msra.mxu0 %v469
  %626 = vmatpush.bf16.msra.mxu0 %v468
  %627 = vmatpush.bf16.msra.mxu0 %v467
  %628 = vmatmul.bf16.gmra.mxu0 %v160
  %v629 = vpop.f32.mrf.mxu0
  %v630 = vadd.f32 %v617, %v629
  %v631 = vpop.f32.mrf.mxu0
  %632 = vdwg.mxu0
  %633 = vmatpush.bf16.msra.mxu0 %v482
  %634 = vmatpush.bf16.msra.mxu0 %v481
  %635 = vmatpush.bf16.msra.mxu0 %v480
  %636 = vmatpush.bf16.msra.mxu0 %v479
  %637 = vmatpush.bf16.msra.mxu0 %v478
  %638 = vmatpush.bf16.msra.mxu0 %v477
  %639 = vmatpush.bf16.msra.mxu0 %v476
  %640 = vmatpush.bf16.msra.mxu0 %v475
  %641 = vmatmul.bf16.gmra.mxu0 %v161
  %v642 = vpop.f32.mrf.mxu0
  %v643 = vadd.f32 %v630, %v642
  %v644 = vpop.f32.mrf.mxu0
  %645 = vdwg.mxu0
  %646 = vmatpush.bf16.msra.mxu0 %v490
  %647 = vmatpush.bf16.msra.mxu0 %v489
  %648 = vmatpush.bf16.msra.mxu0 %v488
  %649 = vmatpush.bf16.msra.mxu0 %v487
  %650 = vmatpush.bf16.msra.mxu0 %v486
  %651 = vmatpush.bf16.msra.mxu0 %v485
  %652 = vmatpush.bf16.msra.mxu0 %v484
  %653 = vmatpush.bf16.msra.mxu0 %v483
  %654 = vmatmul.bf16.gmra.mxu0 %v162
  %v655 = vpop.f32.mrf.mxu0
  %v656 = vadd.f32 %v643, %v655
  %v657 = vpop.f32.mrf.mxu0
  %658 = vdwg.mxu0
  %v659 = vxor.u32 %v656, 2147483648
  %v660 = vmul.f32 %v659, 1.442695
  %v661 = vpow.pop %v660
  %v662 = vadd.f32 %v661, 1.0
  %v663 = vrcp.pop %v662
  %v664 = vmul.f32 %v662, %v663
  %v665 = vsub.f32 1.0, %v664
  %v666 = vmul.f32 %v663, %v665
  %v667 = vadd.f32 %v663, %v666
  %vm668 = vweird.f32 %v662
  %vm669 = vweird.f32 %v663
  %vm670 = vmor %vm668, %vm669
  %v671 = vsel %vm670, %v663, %v667
  %v672 = vand.u32 2147483647, %v662
  %vm673 = vcmp.eq.f32.partialorder %v672, 8.507059e+37
  %v674 = vand.u32 %v662, 2147483648
  %v675 = vor.u32 1.1754944e-38, %v674
  %v676 = vsel %vm673, %v675, %v671
  %v677 = vmul.f32 1.0, %v676
  %678 = vst [vmem:[%s2] sm:$0xff] %v677
  // Predicated region
  $region10: #{dcgan_discriminator.9} parent=0 // pred_check
    _
  $region11: #{dcgan_discriminator.9} parent=0 // pred_check_branch
    %680 = sbr.rel (0) target = $region13
  $region12: #{dcgan_discriminator.9} parent=0 // pred_region
    _
  $region13: #{dcgan_discriminator.9} parent=0 // pred_fallthru
    _
  // Predicated region
  $region14: #{dcgan_discriminator.9} parent=0 // pred_check
    _
  $region15: #{dcgan_discriminator.9} parent=0 // pred_check_branch
    %682 = sbr.rel (0) target = $region17
  $region16: #{dcgan_discriminator.9} parent=0 // pred_region
    _
  $region17: #{dcgan_discriminator.9} parent=0 // pred_fallthru
    _

</llo_original>
